<compile_context>
chip_gen: v6e
topology: v6e:2x2x1
jax: 0.10.0
libtpu: 0.0.40
codegen_flags: <defaults>
</compile_context>

<pallas_src>
import functools

import jax
import jax.numpy as jnp
from jax.experimental import pallas as pl
from jax.experimental.pallas import tpu as pltpu


# ---------------------------------------------------------------------------
# Fused DownConv kernel (one batch element per grid step).
#   x_ref  : (H, W, Cin)        input tile
#   w1_ref : (9*Cin, Cout)      conv1 weights, taps flattened into the contraction dim
#   b1_ref : (1, Cout)          conv1 bias
#   w2_ref : (9*Cout, Cout)     conv2 weights
#   b2_ref : (1, Cout)          conv2 bias
#   pool_ref : (Ho, Wo, Cout)   pooled output
#   bp_ref   : (H, W, Cout)     before-pool output
#   xpad, apad : zero-padded input / intermediate activation (VMEM scratch)
#   col1, col2 : im2col scratch matrices (VMEM)
# ---------------------------------------------------------------------------
def _down_conv_kernel(x_ref, w1_ref, b1_ref, w2_ref, b2_ref,
                      pool_ref, bp_ref, xpad, apad, col1, col2):
    H, W, Cin = x_ref.shape
    Cout = apad.shape[-1]
    Ho, Wo = H // 2, W // 2

    def conv3x3_relu(src_pad, w_ref, b_ref, col_ref):
        """3x3 same conv + bias + ReLU as ONE (H*W, 9*C) x (9*C, Cout) MXU matmul."""
        C = src_pad.shape[-1]
        # Build the im2col matrix in VMEM: 9 shifted (H, W, C) windows written side by
        # side along lanes -> one fat contraction instead of 9 skinny K=C matmuls.
        for dy in range(3):
            for dx in range(3):
                t = dy * 3 + dx
                col_ref[:, t * C:(t + 1) * C] = (
                    src_pad[dy:dy + H, dx:dx + W, :].reshape(H * W, C))
        acc = jnp.dot(col_ref[...], w_ref[...],
                      preferred_element_type=jnp.float32)       # (H*W, Cout)
        return jnp.maximum(acc + b_ref[...], 0.0)                # bias + ReLU epilogue

    # ---- in-kernel zero padding of the input (no jnp.pad / extra HBM pass) ----
    xpad[...] = jnp.zeros(xpad.shape, xpad.dtype)
    xpad[1:H + 1, 1:W + 1, :] = x_ref[...].astype(jnp.float32)

    # ---- conv1 + ReLU; result stays resident in VMEM with its own padding ring ----
    act1 = conv3x3_relu(xpad, w1_ref, b1_ref, col1)              # (H*W, Cout)
    apad[...] = jnp.zeros(apad.shape, apad.dtype)
    apad[1:H + 1, 1:W + 1, :] = act1.reshape(H, W, Cout)

    # ---- conv2 + ReLU ----
    act2 = conv3x3_relu(apad, w2_ref, b2_ref, col2)              # (H*W, Cout)
    bp_ref[...] = act2.reshape(H, W, Cout).astype(bp_ref.dtype)

    # ---- fused 2x2 / stride-2 max pool on the VMEM-resident conv2 output ----
    # Four strided corner loads (pl.ds with stride=2) + elementwise max.
    p00 = bp_ref[pl.ds(0, Ho, 2), pl.ds(0, Wo, 2), :]
    p01 = bp_ref[pl.ds(0, Ho, 2), pl.ds(1, Wo, 2), :]
    p10 = bp_ref[pl.ds(1, Ho, 2), pl.ds(0, Wo, 2), :]
    p11 = bp_ref[pl.ds(1, Ho, 2), pl.ds(1, Wo, 2), :]
    pool_ref[...] = jnp.maximum(jnp.maximum(p00, p01),
                                jnp.maximum(p10, p11)).astype(pool_ref.dtype)


def _down_conv_fused(x_nhwc, w1_hwio, b1, w2_hwio, b2):
    """Single fused pallas_call: conv1+ReLU -> conv2+ReLU -> maxpool2x2 (NHWC in/out)."""
    N, H, W, Cin = x_nhwc.shape
    Cout = w1_hwio.shape[-1]
    assert H % 2 == 0 and W % 2 == 0, "maxpool(2,2) expects even spatial dims"
    Ho, Wo = H // 2, W // 2

    # Flatten the 3x3 taps into the contraction dim (matches the im2col ordering).
    w1_mat = w1_hwio.reshape(9 * Cin, Cout).astype(jnp.float32)
    w2_mat = w2_hwio.reshape(9 * Cout, Cout).astype(jnp.float32)
    b1_r = b1.reshape(1, Cout).astype(jnp.float32)
    b2_r = b2.reshape(1, Cout).astype(jnp.float32)

    # TODO(synk): for large H*W (real UNet resolutions) add an H-row grid axis with a
    # 2-row halo so the per-step VMEM footprint stays within v7x's 64 MiB budget.
    pooled, before_pool = pl.pallas_call(
        _down_conv_kernel,
        out_shape=(
            jax.ShapeDtypeStruct((N, Ho, Wo, Cout), x_nhwc.dtype),   # pooled
            jax.ShapeDtypeStruct((N, H, W, Cout), x_nhwc.dtype),     # before_pool
        ),
        grid=(N,),
        in_specs=[
            pl.BlockSpec((pl.Squeezed(), H, W, Cin), lambda n: (n, 0, 0, 0)),
            # constant index maps -> weights / biases stay resident in VMEM
            pl.BlockSpec((9 * Cin, Cout), lambda n: (0, 0)),
            pl.BlockSpec((1, Cout), lambda n: (0, 0)),
            pl.BlockSpec((9 * Cout, Cout), lambda n: (0, 0)),
            pl.BlockSpec((1, Cout), lambda n: (0, 0)),
        ],
        out_specs=(
            pl.BlockSpec((pl.Squeezed(), Ho, Wo, Cout), lambda n: (n, 0, 0, 0)),
            pl.BlockSpec((pl.Squeezed(), H, W, Cout), lambda n: (n, 0, 0, 0)),
        ),
        scratch_shapes=[
            pltpu.VMEM((H + 2, W + 2, Cin), jnp.float32),    # padded input
            pltpu.VMEM((H + 2, W + 2, Cout), jnp.float32),   # padded conv1 activation
            pltpu.VMEM((H * W, 9 * Cin), jnp.float32),       # im2col for conv1
            pltpu.VMEM((H * W, 9 * Cout), jnp.float32),      # im2col for conv2
        ],
        compiler_params=pltpu.CompilerParams(
            dimension_semantics=("parallel",),               # megacore: split batch
            vmem_limit_bytes=32 * 1024 * 1024,
        ),
    )(x_nhwc, w1_mat, b1_r, w2_mat, b2_r)
    return pooled, before_pool


# ---------------------------------------------------------------------------
# DownConv forward: mirrors the PyTorch module.
#   x: NCHW float32;  returns (pooled NCHW, before_pool NCHW)
# NCHW <-> NHWC transposes happen only at the module boundary; a full NHWC model
# would drop them entirely.
# ---------------------------------------------------------------------------
@functools.partial(jax.jit, static_argnames=("pooling",))
def down_conv_forward(x_nchw, w1, b1, w2, b2, pooling=True):
    x = jnp.transpose(x_nchw, (0, 2, 3, 1))                  # NCHW -> NHWC
    pooled, before_pool = _down_conv_fused(x, w1, b1, w2, b2)
    before_pool_nchw = jnp.transpose(before_pool, (0, 3, 1, 2))
    if pooling:
        return jnp.transpose(pooled, (0, 3, 1, 2)), before_pool_nchw
    return before_pool_nchw, before_pool_nchw


# ---------------------------------------------------------------------------
# Pure-JAX reference for verification.
# ---------------------------------------------------------------------------
def _ref_conv_relu(x_nhwc, w_hwio, b):
    y = jax.lax.conv_general_dilated(
        x_nhwc, w_hwio, window_strides=(1, 1), padding=((1, 1), (1, 1)),
        dimension_numbers=("NHWC", "HWIO", "NHWC"))
    return jax.nn.relu(y + b)


def _ref_forward(x_nchw, w1, b1, w2, b2):
    x = jnp.transpose(x_nchw, (0, 2, 3, 1))
    x = _ref_conv_relu(x, w1, b1)
    x = _ref_conv_relu(x, w2, b2)
    before_pool = x
    pooled = jax.lax.reduce_window(
        x, -jnp.inf, jax.lax.max, (1, 2, 2, 1), (1, 2, 2, 1), "VALID")
    return (jnp.transpose(pooled, (0, 3, 1, 2)),
            jnp.transpose(before_pool, (0, 3, 1, 2)))


if __name__ == "__main__":
    # Small deterministic example consistent with the module: DownConv(4, 8, pooling=True)
    N, Cin, Cout, H, W = 2, 4, 8, 16, 16
    key = jax.random.PRNGKey(0)
    kx, k1, kb1, k2, kb2 = jax.random.split(key, 5)

    x = jax.random.normal(kx, (N, Cin, H, W), jnp.float32)          # NCHW input

    # PyTorch conv weights are OIHW; build them that way, then convert to HWIO.
    w1_oihw = jax.random.normal(k1, (Cout, Cin, 3, 3), jnp.float32) * 0.1
    b1 = jax.random.normal(kb1, (Cout,), jnp.float32) * 0.1
    w2_oihw = jax.random.normal(k2, (Cout, Cout, 3, 3), jnp.float32) * 0.1
    b2 = jax.random.normal(kb2, (Cout,), jnp.float32) * 0.1
    w1 = jnp.transpose(w1_oihw, (2, 3, 1, 0))                        # OIHW -> HWIO
    w2 = jnp.transpose(w2_oihw, (2, 3, 1, 0))

    pooled, before_pool = down_conv_forward(x, w1, b1, w2, b2, pooling=True)
    pooled = jax.block_until_ready(pooled)
    before_pool = jax.block_until_ready(before_pool)

    assert pooled.shape == (N, Cout, H // 2, W // 2)
    assert before_pool.shape == (N, Cout, H, W)

    ref_pooled, ref_before = _ref_forward(x, w1, b1, w2, b2)
    assert jnp.allclose(pooled, ref_pooled, atol=1e-4, rtol=1e-4)
    assert jnp.allclose(before_pool, ref_before, atol=1e-4, rtol=1e-4)

    print("KERNEL_OK")
</pallas_src>

<mosaic_0001>
module attributes {stable_mosaic.version = 11 : i64} {
  func.func @_down_conv_kernel(%arg0: i32, %arg1: memref<1x16x16x4xf32, #tpu.memory_space<vmem>>, %arg2: memref<36x8xf32, #tpu.memory_space<vmem>>, %arg3: memref<1x8xf32, #tpu.memory_space<vmem>>, %arg4: memref<72x8xf32, #tpu.memory_space<vmem>>, %arg5: memref<1x8xf32, #tpu.memory_space<vmem>>, %arg6: memref<1x8x8x8xf32, #tpu.memory_space<vmem>>, %arg7: memref<1x16x16x8xf32, #tpu.memory_space<vmem>>, %arg8: memref<18x18x4xf32, #tpu.memory_space<vmem>>, %arg9: memref<18x18x8xf32, #tpu.memory_space<vmem>>, %arg10: memref<256x36xf32, #tpu.memory_space<vmem>>, %arg11: memref<256x72xf32, #tpu.memory_space<vmem>>) attributes {dimension_semantics = [#tpu.dimension_semantics<parallel>], iteration_bounds = array<i64: 2>, scalar_prefetch = 0 : i64, scratch_operands = 4 : i64, tpu.core_type = #tpu.core_type<tc>, window_params = [{transform_indices = @transform_0, window_bounds = array<i64: 1, 16, 16, 4>}, {pipeline_mode = #tpu.pipeline_mode<synchronous>, transform_indices = @transform_1, window_bounds = array<i64: 36, 8>}, {pipeline_mode = #tpu.pipeline_mode<synchronous>, transform_indices = @transform_2, window_bounds = array<i64: 1, 8>}, {pipeline_mode = #tpu.pipeline_mode<synchronous>, transform_indices = @transform_3, window_bounds = array<i64: 72, 8>}, {pipeline_mode = #tpu.pipeline_mode<synchronous>, transform_indices = @transform_4, window_bounds = array<i64: 1, 8>}, {transform_indices = @transform_5, window_bounds = array<i64: 1, 8, 8, 8>}, {transform_indices = @transform_6, window_bounds = array<i64: 1, 16, 16, 8>}]} {
    %cst = arith.constant 0.000000e+00 : f32
    %0 = vector.broadcast %cst : f32 to vector<18x18x4xf32>
    %c0 = arith.constant 0 : index
    %c0_0 = arith.constant 0 : index
    %c0_1 = arith.constant 0 : index
    %1 = vector.load %arg8[%c0, %c0_0, %c0_1] : memref<18x18x4xf32, #tpu.memory_space<vmem>>, vector<18x18x4xf32>
    tpu.vector_store %arg8[%c0, %c0_0, %c0_1], %0 {strides = array<i32>} : memref<18x18x4xf32, #tpu.memory_space<vmem>>, vector<18x18x4xf32>,
    %c0_2 = arith.constant 0 : index
    %c0_3 = arith.constant 0 : index
    %c0_4 = arith.constant 0 : index
    %c0_5 = arith.constant 0 : index
    %2 = vector.load %arg1[%c0_2, %c0_3, %c0_4, %c0_5] : memref<1x16x16x4xf32, #tpu.memory_space<vmem>>, vector<1x16x16x4xf32>
    %3 = vector.shape_cast %2 : vector<1x16x16x4xf32> to vector<16x16x4xf32>
    %c1 = arith.constant 1 : index
    %c1_6 = arith.constant 1 : index
    %c0_7 = arith.constant 0 : index
    %4 = vector.load %arg8[%c1, %c1_6, %c0_7] : memref<18x18x4xf32, #tpu.memory_space<vmem>>, vector<16x16x4xf32>
    tpu.vector_store %arg8[%c1, %c1_6, %c0_7], %3 {strides = array<i32>} : memref<18x18x4xf32, #tpu.memory_space<vmem>>, vector<16x16x4xf32>,
    %c0_8 = arith.constant 0 : index
    %c0_9 = arith.constant 0 : index
    %c0_10 = arith.constant 0 : index
    %5 = vector.load %arg8[%c0_8, %c0_9, %c0_10] : memref<18x18x4xf32, #tpu.memory_space<vmem>>, vector<16x16x4xf32>
    %6 = vector.shape_cast %5 : vector<16x16x4xf32> to vector<256x4xf32>
    %c0_11 = arith.constant 0 : index
    %c0_12 = arith.constant 0 : index
    %7 = vector.load %arg10[%c0_11, %c0_12] : memref<256x36xf32, #tpu.memory_space<vmem>>, vector<256x4xf32>
    tpu.vector_store %arg10[%c0_11, %c0_12], %6 {strides = array<i32>} : memref<256x36xf32, #tpu.memory_space<vmem>>, vector<256x4xf32>,
    %c0_13 = arith.constant 0 : index
    %c1_14 = arith.constant 1 : index
    %c0_15 = arith.constant 0 : index
    %8 = vector.load %arg8[%c0_13, %c1_14, %c0_15] : memref<18x18x4xf32, #tpu.memory_space<vmem>>, vector<16x16x4xf32>
    %9 = vector.shape_cast %8 : vector<16x16x4xf32> to vector<256x4xf32>
    %c0_16 = arith.constant 0 : index
    %c4 = arith.constant 4 : index
    %10 = vector.load %arg10[%c0_16, %c4] : memref<256x36xf32, #tpu.memory_space<vmem>>, vector<256x4xf32>
    tpu.vector_store %arg10[%c0_16, %c4], %9 {strides = array<i32>} : memref<256x36xf32, #tpu.memory_space<vmem>>, vector<256x4xf32>,
    %c0_17 = arith.constant 0 : index
    %c2 = arith.constant 2 : index
    %c0_18 = arith.constant 0 : index
    %11 = vector.load %arg8[%c0_17, %c2, %c0_18] : memref<18x18x4xf32, #tpu.memory_space<vmem>>, vector<16x16x4xf32>
    %12 = vector.shape_cast %11 : vector<16x16x4xf32> to vector<256x4xf32>
    %c0_19 = arith.constant 0 : index
    %c8 = arith.constant 8 : index
    %13 = vector.load %arg10[%c0_19, %c8] : memref<256x36xf32, #tpu.memory_space<vmem>>, vector<256x4xf32>
    tpu.vector_store %arg10[%c0_19, %c8], %12 {strides = array<i32>} : memref<256x36xf32, #tpu.memory_space<vmem>>, vector<256x4xf32>,
    %c1_20 = arith.constant 1 : index
    %c0_21 = arith.constant 0 : index
    %c0_22 = arith.constant 0 : index
    %14 = vector.load %arg8[%c1_20, %c0_21, %c0_22] : memref<18x18x4xf32, #tpu.memory_space<vmem>>, vector<16x16x4xf32>
    %15 = vector.shape_cast %14 : vector<16x16x4xf32> to vector<256x4xf32>
    %c0_23 = arith.constant 0 : index
    %c12 = arith.constant 12 : index
    %16 = vector.load %arg10[%c0_23, %c12] : memref<256x36xf32, #tpu.memory_space<vmem>>, vector<256x4xf32>
    tpu.vector_store %arg10[%c0_23, %c12], %15 {strides = array<i32>} : memref<256x36xf32, #tpu.memory_space<vmem>>, vector<256x4xf32>,
    %c1_24 = arith.constant 1 : index
    %c1_25 = arith.constant 1 : index
    %c0_26 = arith.constant 0 : index
    %17 = vector.load %arg8[%c1_24, %c1_25, %c0_26] : memref<18x18x4xf32, #tpu.memory_space<vmem>>, vector<16x16x4xf32>
    %18 = vector.shape_cast %17 : vector<16x16x4xf32> to vector<256x4xf32>
    %c0_27 = arith.constant 0 : index
    %c16 = arith.constant 16 : index
    %19 = vector.load %arg10[%c0_27, %c16] : memref<256x36xf32, #tpu.memory_space<vmem>>, vector<256x4xf32>
    tpu.vector_store %arg10[%c0_27, %c16], %18 {strides = array<i32>} : memref<256x36xf32, #tpu.memory_space<vmem>>, vector<256x4xf32>,
    %c1_28 = arith.constant 1 : index
    %c2_29 = arith.constant 2 : index
    %c0_30 = arith.constant 0 : index
    %20 = vector.load %arg8[%c1_28, %c2_29, %c0_30] : memref<18x18x4xf32, #tpu.memory_space<vmem>>, vector<16x16x4xf32>
    %21 = vector.shape_cast %20 : vector<16x16x4xf32> to vector<256x4xf32>
    %c0_31 = arith.constant 0 : index
    %c20 = arith.constant 20 : index
    %22 = vector.load %arg10[%c0_31, %c20] : memref<256x36xf32, #tpu.memory_space<vmem>>, vector<256x4xf32>
    tpu.vector_store %arg10[%c0_31, %c20], %21 {strides = array<i32>} : memref<256x36xf32, #tpu.memory_space<vmem>>, vector<256x4xf32>,
    %c2_32 = arith.constant 2 : index
    %c0_33 = arith.constant 0 : index
    %c0_34 = arith.constant 0 : index
    %23 = vector.load %arg8[%c2_32, %c0_33, %c0_34] : memref<18x18x4xf32, #tpu.memory_space<vmem>>, vector<16x16x4xf32>
    %24 = vector.shape_cast %23 : vector<16x16x4xf32> to vector<256x4xf32>
    %c0_35 = arith.constant 0 : index
    %c24 = arith.constant 24 : index
    %25 = vector.load %arg10[%c0_35, %c24] : memref<256x36xf32, #tpu.memory_space<vmem>>, vector<256x4xf32>
    tpu.vector_store %arg10[%c0_35, %c24], %24 {strides = array<i32>} : memref<256x36xf32, #tpu.memory_space<vmem>>, vector<256x4xf32>,
    %c2_36 = arith.constant 2 : index
    %c1_37 = arith.constant 1 : index
    %c0_38 = arith.constant 0 : index
    %26 = vector.load %arg8[%c2_36, %c1_37, %c0_38] : memref<18x18x4xf32, #tpu.memory_space<vmem>>, vector<16x16x4xf32>
    %27 = vector.shape_cast %26 : vector<16x16x4xf32> to vector<256x4xf32>
    %c0_39 = arith.constant 0 : index
    %c28 = arith.constant 28 : index
    %28 = vector.load %arg10[%c0_39, %c28] : memref<256x36xf32, #tpu.memory_space<vmem>>, vector<256x4xf32>
    tpu.vector_store %arg10[%c0_39, %c28], %27 {strides = array<i32>} : memref<256x36xf32, #tpu.memory_space<vmem>>, vector<256x4xf32>,
    %c2_40 = arith.constant 2 : index
    %c2_41 = arith.constant 2 : index
    %c0_42 = arith.constant 0 : index
    %29 = vector.load %arg8[%c2_40, %c2_41, %c0_42] : memref<18x18x4xf32, #tpu.memory_space<vmem>>, vector<16x16x4xf32>
    %30 = vector.shape_cast %29 : vector<16x16x4xf32> to vector<256x4xf32>
    %c0_43 = arith.constant 0 : index
    %c32 = arith.constant 32 : index
    %31 = vector.load %arg10[%c0_43, %c32] : memref<256x36xf32, #tpu.memory_space<vmem>>, vector<256x4xf32>
    tpu.vector_store %arg10[%c0_43, %c32], %30 {strides = array<i32>} : memref<256x36xf32, #tpu.memory_space<vmem>>, vector<256x4xf32>,
    %c0_44 = arith.constant 0 : index
    %c0_45 = arith.constant 0 : index
    %32 = vector.load %arg10[%c0_44, %c0_45] : memref<256x36xf32, #tpu.memory_space<vmem>>, vector<256x36xf32>
    %c0_46 = arith.constant 0 : index
    %c0_47 = arith.constant 0 : index
    %33 = vector.load %arg2[%c0_46, %c0_47] : memref<36x8xf32, #tpu.memory_space<vmem>>, vector<36x8xf32>
    %cst_48 = arith.constant dense<0.000000e+00> : vector<256x8xf32>
    %34 = tpu.matmul %32, %33, %cst_48 {dimension_numbers = #tpu.dot_dimension_numbers<[1], [0], [0], [1], [0, 0, 1, 1], [], []>} : vector<256x36xf32>, vector<36x8xf32>, vector<256x8xf32> -> vector<256x8xf32>
    %c0_49 = arith.constant 0 : index
    %c0_50 = arith.constant 0 : index
    %35 = vector.load %arg3[%c0_49, %c0_50] : memref<1x8xf32, #tpu.memory_space<vmem>>, vector<1x8xf32>
    %36 = vector.broadcast %35 : vector<1x8xf32> to vector<256x8xf32>
    %37 = arith.addf %34, %36 : vector<256x8xf32>
    %cst_51 = arith.constant 0.000000e+00 : f32
    %38 = vector.broadcast %cst_51 : f32 to vector<256x8xf32>
    %39 = arith.maximumf %37, %38 : vector<256x8xf32>
    %cst_52 = arith.constant 0.000000e+00 : f32
    %40 = vector.broadcast %cst_52 : f32 to vector<18x18x8xf32>
    %c0_53 = arith.constant 0 : index
    %c0_54 = arith.constant 0 : index
    %c0_55 = arith.constant 0 : index
    %41 = vector.load %arg9[%c0_53, %c0_54, %c0_55] : memref<18x18x8xf32, #tpu.memory_space<vmem>>, vector<18x18x8xf32>
    tpu.vector_store %arg9[%c0_53, %c0_54, %c0_55], %40 {strides = array<i32>} : memref<18x18x8xf32, #tpu.memory_space<vmem>>, vector<18x18x8xf32>,
    %42 = vector.shape_cast %39 : vector<256x8xf32> to vector<16x16x8xf32>
    %c1_56 = arith.constant 1 : index
    %c1_57 = arith.constant 1 : index
    %c0_58 = arith.constant 0 : index
    %43 = vector.load %arg9[%c1_56, %c1_57, %c0_58] : memref<18x18x8xf32, #tpu.memory_space<vmem>>, vector<16x16x8xf32>
    tpu.vector_store %arg9[%c1_56, %c1_57, %c0_58], %42 {strides = array<i32>} : memref<18x18x8xf32, #tpu.memory_space<vmem>>, vector<16x16x8xf32>,
    %c0_59 = arith.constant 0 : index
    %c0_60 = arith.constant 0 : index
    %c0_61 = arith.constant 0 : index
    %44 = vector.load %arg9[%c0_59, %c0_60, %c0_61] : memref<18x18x8xf32, #tpu.memory_space<vmem>>, vector<16x16x8xf32>
    %45 = vector.shape_cast %44 : vector<16x16x8xf32> to vector<256x8xf32>
    %c0_62 = arith.constant 0 : index
    %c0_63 = arith.constant 0 : index
    %46 = vector.load %arg11[%c0_62, %c0_63] : memref<256x72xf32, #tpu.memory_space<vmem>>, vector<256x8xf32>
    tpu.vector_store %arg11[%c0_62, %c0_63], %45 {strides = array<i32>} : memref<256x72xf32, #tpu.memory_space<vmem>>, vector<256x8xf32>,
    %c0_64 = arith.constant 0 : index
    %c1_65 = arith.constant 1 : index
    %c0_66 = arith.constant 0 : index
    %47 = vector.load %arg9[%c0_64, %c1_65, %c0_66] : memref<18x18x8xf32, #tpu.memory_space<vmem>>, vector<16x16x8xf32>
    %48 = vector.shape_cast %47 : vector<16x16x8xf32> to vector<256x8xf32>
    %c0_67 = arith.constant 0 : index
    %c8_68 = arith.constant 8 : index
    %49 = vector.load %arg11[%c0_67, %c8_68] : memref<256x72xf32, #tpu.memory_space<vmem>>, vector<256x8xf32>
    tpu.vector_store %arg11[%c0_67, %c8_68], %48 {strides = array<i32>} : memref<256x72xf32, #tpu.memory_space<vmem>>, vector<256x8xf32>,
    %c0_69 = arith.constant 0 : index
    %c2_70 = arith.constant 2 : index
    %c0_71 = arith.constant 0 : index
    %50 = vector.load %arg9[%c0_69, %c2_70, %c0_71] : memref<18x18x8xf32, #tpu.memory_space<vmem>>, vector<16x16x8xf32>
    %51 = vector.shape_cast %50 : vector<16x16x8xf32> to vector<256x8xf32>
    %c0_72 = arith.constant 0 : index
    %c16_73 = arith.constant 16 : index
    %52 = vector.load %arg11[%c0_72, %c16_73] : memref<256x72xf32, #tpu.memory_space<vmem>>, vector<256x8xf32>
    tpu.vector_store %arg11[%c0_72, %c16_73], %51 {strides = array<i32>} : memref<256x72xf32, #tpu.memory_space<vmem>>, vector<256x8xf32>,
    %c1_74 = arith.constant 1 : index
    %c0_75 = arith.constant 0 : index
    %c0_76 = arith.constant 0 : index
    %53 = vector.load %arg9[%c1_74, %c0_75, %c0_76] : memref<18x18x8xf32, #tpu.memory_space<vmem>>, vector<16x16x8xf32>
    %54 = vector.shape_cast %53 : vector<16x16x8xf32> to vector<256x8xf32>
    %c0_77 = arith.constant 0 : index
    %c24_78 = arith.constant 24 : index
    %55 = vector.load %arg11[%c0_77, %c24_78] : memref<256x72xf32, #tpu.memory_space<vmem>>, vector<256x8xf32>
    tpu.vector_store %arg11[%c0_77, %c24_78], %54 {strides = array<i32>} : memref<256x72xf32, #tpu.memory_space<vmem>>, vector<256x8xf32>,
    %c1_79 = arith.constant 1 : index
    %c1_80 = arith.constant 1 : index
    %c0_81 = arith.constant 0 : index
    %56 = vector.load %arg9[%c1_79, %c1_80, %c0_81] : memref<18x18x8xf32, #tpu.memory_space<vmem>>, vector<16x16x8xf32>
    %57 = vector.shape_cast %56 : vector<16x16x8xf32> to vector<256x8xf32>
    %c0_82 = arith.constant 0 : index
    %c32_83 = arith.constant 32 : index
    %58 = vector.load %arg11[%c0_82, %c32_83] : memref<256x72xf32, #tpu.memory_space<vmem>>, vector<256x8xf32>
    tpu.vector_store %arg11[%c0_82, %c32_83], %57 {strides = array<i32>} : memref<256x72xf32, #tpu.memory_space<vmem>>, vector<256x8xf32>,
    %c1_84 = arith.constant 1 : index
    %c2_85 = arith.constant 2 : index
    %c0_86 = arith.constant 0 : index
    %59 = vector.load %arg9[%c1_84, %c2_85, %c0_86] : memref<18x18x8xf32, #tpu.memory_space<vmem>>, vector<16x16x8xf32>
    %60 = vector.shape_cast %59 : vector<16x16x8xf32> to vector<256x8xf32>
    %c0_87 = arith.constant 0 : index
    %c40 = arith.constant 40 : index
    %61 = vector.load %arg11[%c0_87, %c40] : memref<256x72xf32, #tpu.memory_space<vmem>>, vector<256x8xf32>
    tpu.vector_store %arg11[%c0_87, %c40], %60 {strides = array<i32>} : memref<256x72xf32, #tpu.memory_space<vmem>>, vector<256x8xf32>,
    %c2_88 = arith.constant 2 : index
    %c0_89 = arith.constant 0 : index
    %c0_90 = arith.constant 0 : index
    %62 = vector.load %arg9[%c2_88, %c0_89, %c0_90] : memref<18x18x8xf32, #tpu.memory_space<vmem>>, vector<16x16x8xf32>
    %63 = vector.shape_cast %62 : vector<16x16x8xf32> to vector<256x8xf32>
    %c0_91 = arith.constant 0 : index
    %c48 = arith.constant 48 : index
    %64 = vector.load %arg11[%c0_91, %c48] : memref<256x72xf32, #tpu.memory_space<vmem>>, vector<256x8xf32>
    tpu.vector_store %arg11[%c0_91, %c48], %63 {strides = array<i32>} : memref<256x72xf32, #tpu.memory_space<vmem>>, vector<256x8xf32>,
    %c2_92 = arith.constant 2 : index
    %c1_93 = arith.constant 1 : index
    %c0_94 = arith.constant 0 : index
    %65 = vector.load %arg9[%c2_92, %c1_93, %c0_94] : memref<18x18x8xf32, #tpu.memory_space<vmem>>, vector<16x16x8xf32>
    %66 = vector.shape_cast %65 : vector<16x16x8xf32> to vector<256x8xf32>
    %c0_95 = arith.constant 0 : index
    %c56 = arith.constant 56 : index
    %67 = vector.load %arg11[%c0_95, %c56] : memref<256x72xf32, #tpu.memory_space<vmem>>, vector<256x8xf32>
    tpu.vector_store %arg11[%c0_95, %c56], %66 {strides = array<i32>} : memref<256x72xf32, #tpu.memory_space<vmem>>, vector<256x8xf32>,
    %c2_96 = arith.constant 2 : index
    %c2_97 = arith.constant 2 : index
    %c0_98 = arith.constant 0 : index
    %68 = vector.load %arg9[%c2_96, %c2_97, %c0_98] : memref<18x18x8xf32, #tpu.memory_space<vmem>>, vector<16x16x8xf32>
    %69 = vector.shape_cast %68 : vector<16x16x8xf32> to vector<256x8xf32>
    %c0_99 = arith.constant 0 : index
    %c64 = arith.constant 64 : index
    %70 = vector.load %arg11[%c0_99, %c64] : memref<256x72xf32, #tpu.memory_space<vmem>>, vector<256x8xf32>
    tpu.vector_store %arg11[%c0_99, %c64], %69 {strides = array<i32>} : memref<256x72xf32, #tpu.memory_space<vmem>>, vector<256x8xf32>,
    %c0_100 = arith.constant 0 : index
    %c0_101 = arith.constant 0 : index
    %71 = vector.load %arg11[%c0_100, %c0_101] : memref<256x72xf32, #tpu.memory_space<vmem>>, vector<256x72xf32>
    %c0_102 = arith.constant 0 : index
    %c0_103 = arith.constant 0 : index
    %72 = vector.load %arg4[%c0_102, %c0_103] : memref<72x8xf32, #tpu.memory_space<vmem>>, vector<72x8xf32>
    %cst_104 = arith.constant dense<0.000000e+00> : vector<256x8xf32>
    %73 = tpu.matmul %71, %72, %cst_104 {dimension_numbers = #tpu.dot_dimension_numbers<[1], [0], [0], [1], [0, 0, 1, 1], [], []>} : vector<256x72xf32>, vector<72x8xf32>, vector<256x8xf32> -> vector<256x8xf32>
    %c0_105 = arith.constant 0 : index
    %c0_106 = arith.constant 0 : index
    %74 = vector.load %arg5[%c0_105, %c0_106] : memref<1x8xf32, #tpu.memory_space<vmem>>, vector<1x8xf32>
    %75 = vector.broadcast %74 : vector<1x8xf32> to vector<256x8xf32>
    %76 = arith.addf %73, %75 : vector<256x8xf32>
    %cst_107 = arith.constant 0.000000e+00 : f32
    %77 = vector.broadcast %cst_107 : f32 to vector<256x8xf32>
    %78 = arith.maximumf %76, %77 : vector<256x8xf32>
    %79 = vector.shape_cast %78 : vector<256x8xf32> to vector<16x16x8xf32>
    %c0_108 = arith.constant 0 : index
    %c0_109 = arith.constant 0 : index
    %c0_110 = arith.constant 0 : index
    %c0_111 = arith.constant 0 : index
    %80 = vector.load %arg7[%c0_108, %c0_109, %c0_110, %c0_111] : memref<1x16x16x8xf32, #tpu.memory_space<vmem>>, vector<1x16x16x8xf32>
    %81 = vector.shape_cast %80 : vector<1x16x16x8xf32> to vector<16x16x8xf32>
    %82 = vector.shape_cast %79 : vector<16x16x8xf32> to vector<1x16x16x8xf32>
    tpu.vector_store %arg7[%c0_108, %c0_109, %c0_110, %c0_111], %82 {strides = array<i32>} : memref<1x16x16x8xf32, #tpu.memory_space<vmem>>, vector<1x16x16x8xf32>,
    %c0_112 = arith.constant 0 : index
    %c0_113 = arith.constant 0 : index
    %c0_114 = arith.constant 0 : index
    %c0_115 = arith.constant 0 : index
    %83 = tpu.strided_load %arg7[%c0_112, %c0_113, %c0_114, %c0_115] {strides = array<i32: 1, 2, 2, 1>} : memref<1x16x16x8xf32, #tpu.memory_space<vmem>>, vector<1x8x8x8xf32>
    %84 = vector.shape_cast %83 : vector<1x8x8x8xf32> to vector<8x8x8xf32>
    %c0_116 = arith.constant 0 : index
    %c0_117 = arith.constant 0 : index
    %c1_118 = arith.constant 1 : index
    %c0_119 = arith.constant 0 : index
    %85 = tpu.strided_load %arg7[%c0_116, %c0_117, %c1_118, %c0_119] {strides = array<i32: 1, 2, 2, 1>} : memref<1x16x16x8xf32, #tpu.memory_space<vmem>>, vector<1x8x8x8xf32>
    %86 = vector.shape_cast %85 : vector<1x8x8x8xf32> to vector<8x8x8xf32>
    %c0_120 = arith.constant 0 : index
    %c1_121 = arith.constant 1 : index
    %c0_122 = arith.constant 0 : index
    %c0_123 = arith.constant 0 : index
    %87 = tpu.strided_load %arg7[%c0_120, %c1_121, %c0_122, %c0_123] {strides = array<i32: 1, 2, 2, 1>} : memref<1x16x16x8xf32, #tpu.memory_space<vmem>>, vector<1x8x8x8xf32>
    %88 = vector.shape_cast %87 : vector<1x8x8x8xf32> to vector<8x8x8xf32>
    %c0_124 = arith.constant 0 : index
    %c1_125 = arith.constant 1 : index
    %c1_126 = arith.constant 1 : index
    %c0_127 = arith.constant 0 : index
    %89 = tpu.strided_load %arg7[%c0_124, %c1_125, %c1_126, %c0_127] {strides = array<i32: 1, 2, 2, 1>} : memref<1x16x16x8xf32, #tpu.memory_space<vmem>>, vector<1x8x8x8xf32>
    %90 = vector.shape_cast %89 : vector<1x8x8x8xf32> to vector<8x8x8xf32>
    %91 = arith.maximumf %84, %86 : vector<8x8x8xf32>
    %92 = arith.maximumf %88, %90 : vector<8x8x8xf32>
    %93 = arith.maximumf %91, %92 : vector<8x8x8xf32>
    %c0_128 = arith.constant 0 : index
    %c0_129 = arith.constant 0 : index
    %c0_130 = arith.constant 0 : index
    %c0_131 = arith.constant 0 : index
    %94 = vector.load %arg6[%c0_128, %c0_129, %c0_130, %c0_131] : memref<1x8x8x8xf32, #tpu.memory_space<vmem>>, vector<1x8x8x8xf32>
    %95 = vector.shape_cast %94 : vector<1x8x8x8xf32> to vector<8x8x8xf32>
    %96 = vector.shape_cast %93 : vector<8x8x8xf32> to vector<1x8x8x8xf32>
    tpu.vector_store %arg6[%c0_128, %c0_129, %c0_130, %c0_131], %96 {strides = array<i32>} : memref<1x8x8x8xf32, #tpu.memory_space<vmem>>, vector<1x8x8x8xf32>,
    return
  }
  func.func @transform_0(%arg0: i32) -> (i32, i32, i32, i32) {
    %c0_i32 = arith.constant 0 : i32
    %c0_i32_0 = arith.constant 0 : i32
    %c0_i32_1 = arith.constant 0 : i32
    %c0_i32_2 = arith.constant 0 : i32
    return %arg0, %c0_i32, %c0_i32_0, %c0_i32_1 : i32, i32, i32, i32
  }
  func.func @transform_1(%arg0: i32) -> (i32, i32) {
    %c0_i32 = arith.constant 0 : i32
    %c0_i32_0 = arith.constant 0 : i32
    %c0_i32_1 = arith.constant 0 : i32
    return %c0_i32, %c0_i32_0 : i32, i32
  }
  func.func @transform_2(%arg0: i32) -> (i32, i32) {
    %c0_i32 = arith.constant 0 : i32
    %c0_i32_0 = arith.constant 0 : i32
    %c0_i32_1 = arith.constant 0 : i32
    return %c0_i32, %c0_i32_0 : i32, i32
  }
  func.func @transform_3(%arg0: i32) -> (i32, i32) {
    %c0_i32 = arith.constant 0 : i32
    %c0_i32_0 = arith.constant 0 : i32
    %c0_i32_1 = arith.constant 0 : i32
    return %c0_i32, %c0_i32_0 : i32, i32
  }
  func.func @transform_4(%arg0: i32) -> (i32, i32) {
    %c0_i32 = arith.constant 0 : i32
    %c0_i32_0 = arith.constant 0 : i32
    %c0_i32_1 = arith.constant 0 : i32
    return %c0_i32, %c0_i32_0 : i32, i32
  }
  func.func @transform_5(%arg0: i32) -> (i32, i32, i32, i32) {
    %c0_i32 = arith.constant 0 : i32
    %c0_i32_0 = arith.constant 0 : i32
    %c0_i32_1 = arith.constant 0 : i32
    %c0_i32_2 = arith.constant 0 : i32
    return %arg0, %c0_i32, %c0_i32_0, %c0_i32_1 : i32, i32, i32, i32
  }
  func.func @transform_6(%arg0: i32) -> (i32, i32, i32, i32) {
    %c0_i32 = arith.constant 0 : i32
    %c0_i32_0 = arith.constant 0 : i32
    %c0_i32_1 = arith.constant 0 : i32
    %c0_i32_2 = arith.constant 0 : i32
    return %arg0, %c0_i32, %c0_i32_0, %c0_i32_1 : i32, i32, i32, i32
  }
}

</mosaic_0001>

<llo_original>
// kernel: down_conv_forward.1
$region0: #{down_conv_forward.1}
  #allocation0 [shape = 'u32[]', space=smem, size = 0x4, offset = 0x4, fixed_abs, tag = 'smem constant byte address 0x4 - core index']
  #allocation1 [shape = 'u32[144,128]{1,0:T(1,128)}', space=vmem, size = 0x12000, scoped, tag = 'internal scratch']
  #allocation2 [shape = 'f32[18,18,4]{2,1,0:T(8,128)}', space=vmem, size = 0x36000, scoped, tag = 'scratch operand']
  #allocation3 [shape = 'f32[18,18,8]{2,1,0:T(8,128)}', space=vmem, size = 0x36000, scoped, tag = 'scratch operand']
  #allocation4 [shape = 'f32[256,36]{1,0:T(8,128)}', space=vmem, size = 0x20000, scoped, tag = 'scratch operand']
  #allocation5 [shape = 'f32[256,72]{1,0:T(8,128)}', space=vmem, size = 0x20000, scoped, tag = 'scratch operand']
  %s0 = inlined_call_operand.vmem [shape: f32[2,16,16,4], index: 0, kind: input, shape index: {}]
  %s1 = inlined_call_operand.vmem [shape: f32[36,8], index: 1, kind: input, shape index: {}]
  %s2 = inlined_call_operand.vmem [shape: f32[1,8], index: 2, kind: input, shape index: {}]
  %s3 = inlined_call_operand.vmem [shape: f32[72,8], index: 3, kind: input, shape index: {}]
  %s4 = inlined_call_operand.vmem [shape: f32[1,8], index: 4, kind: input, shape index: {}]
  %s5 = inlined_call_operand.vmem [shape: f32[2,8,8,8], index: 5, kind: output, shape index: {0}]
  %s6 = inlined_call_operand.vmem [shape: f32[2,16,16,8], index: 6, kind: output, shape index: {1}]
  %7 = xla_tuple %s5, %s6
  %s8 = sld [smem:[#allocation0]]
  $region61: #{down_conv_forward.1} parent=0
    _
  %s10 = ssub.s32 1, %s8
  %s11 = scalar_select 0, %s10, %s8
  loop: start=0, step=1, limit=4
  $region2: #{down_conv_forward.1} parent=0 // loop_pre_header
    _
  $region3: #{down_conv_forward.1} parent=0 // loop_header
    %s13 = sphi 0, %s17
    %p14 = scmp.ge.s32.totalorder %s13, 4
    %s23 = sphi 0, %s25
    %s26 = sphi 0, %s23
    %s27 = sphi 0, %s26
    %s43 = sphi 0, %s27
    %s47 = sphi 0, %s47
    %s49 = sphi 0, %s47
    %s50 = sphi 0, %s49
    %s64 = sphi 0, %s50
    %s68 = sphi 0, %s68
    %s70 = sphi 0, %s68
    %s71 = sphi 0, %s70
    %s85 = sphi 0, %s71
    %s89 = sphi 0, %s89
    %s91 = sphi 0, %s89
    %s92 = sphi 0, %s91
    %s106 = sphi 0, %s92
    %s110 = sphi 0, %s110
    %s112 = sphi 0, %s110
    %s113 = sphi 0, %s112
    %s127 = sphi 0, %s113
    %s133 = sphi 0, %s135
    %s136 = sphi 0, %s133
    %s137 = sphi 0, %s136
    %s153 = sphi 0, %s137
    %s159 = sphi 0, %s161
    %s162 = sphi 0, %s159
    %s163 = sphi 0, %s162
    %s179 = sphi 0, %s163
  $region4: #{down_conv_forward.1} parent=0 // loop_header_branch
    %16 = sbr.rel (%p14) target = $region8
  $region5: #{down_conv_forward.1} parent=0 // loop_body
    %s18 = ssub.s32 %s13, 1
    %s19 = ssub.s32 %s13, 2
    %s20 = sadd.s32 %s13, 1
    %s21 = ssub.s32 %s13, %s20
    %p22 = scmp.eq.s32.totalorder %s21, 0
    %s24 = sadd.s32 %s23, 1
    %s25 = scalar_select %p22, %s23, %s24
    %p28 = pneg %p22
    %p29 = scmp.eq.s32.totalorder %s13, 1
    %p30 = por %p28, %p29
    %p31 = scmp.ne.s32.totalorder %s23, %s26
    %p32 = scmp.eq.s32.totalorder %s13, 0
    %p33 = por %p31, %p32
    %p34 = scmp.ne.s32.totalorder %s23, %s26
    %p35 = scmp.eq.s32.totalorder %s18, 1
    %p36 = por %p34, %p35
    %p37 = scmp.ne.s32.totalorder %s26, %s27
    %p38 = scmp.eq.s32.totalorder %s18, 0
    %p39 = por %p37, %p38
    %p40 = scmp.ne.s32.totalorder %s26, %s27
    %p41 = scmp.eq.s32.totalorder %s19, 1
    %p42 = por %p40, %p41
    %p44 = scmp.ne.s32.totalorder %s27, %s43
    %p45 = scmp.eq.s32.totalorder %s19, 0
    %p46 = por %p44, %p45
    %s48 = sadd.s32 %s47, 1
    %p51 = scmp.eq.s32.totalorder %s13, 1
    %p52 = scmp.ne.s32.totalorder %s47, %s49
    %p53 = scmp.eq.s32.totalorder %s13, 0
    %p54 = por %p52, %p53
    %p55 = scmp.ne.s32.totalorder %s47, %s49
    %p56 = scmp.eq.s32.totalorder %s18, 1
    %p57 = por %p55, %p56
    %p58 = scmp.ne.s32.totalorder %s49, %s50
    %p59 = scmp.eq.s32.totalorder %s18, 0
    %p60 = por %p58, %p59
    %p61 = scmp.ne.s32.totalorder %s49, %s50
    %p62 = scmp.eq.s32.totalorder %s19, 1
    %p63 = por %p61, %p62
    %p65 = scmp.ne.s32.totalorder %s50, %s64
    %p66 = scmp.eq.s32.totalorder %s19, 0
    %p67 = por %p65, %p66
    %s69 = sadd.s32 %s68, 1
    %p72 = scmp.eq.s32.totalorder %s13, 1
    %p73 = scmp.ne.s32.totalorder %s68, %s70
    %p74 = scmp.eq.s32.totalorder %s13, 0
    %p75 = por %p73, %p74
    %p76 = scmp.ne.s32.totalorder %s68, %s70
    %p77 = scmp.eq.s32.totalorder %s18, 1
    %p78 = por %p76, %p77
    %p79 = scmp.ne.s32.totalorder %s70, %s71
    %p80 = scmp.eq.s32.totalorder %s18, 0
    %p81 = por %p79, %p80
    %p82 = scmp.ne.s32.totalorder %s70, %s71
    %p83 = scmp.eq.s32.totalorder %s19, 1
    %p84 = por %p82, %p83
    %p86 = scmp.ne.s32.totalorder %s71, %s85
    %p87 = scmp.eq.s32.totalorder %s19, 0
    %p88 = por %p86, %p87
    %s90 = sadd.s32 %s89, 1
    %p93 = scmp.eq.s32.totalorder %s13, 1
    %p94 = scmp.ne.s32.totalorder %s89, %s91
    %p95 = scmp.eq.s32.totalorder %s13, 0
    %p96 = por %p94, %p95
    %p97 = scmp.ne.s32.totalorder %s89, %s91
    %p98 = scmp.eq.s32.totalorder %s18, 1
    %p99 = por %p97, %p98
    %p100 = scmp.ne.s32.totalorder %s91, %s92
    %p101 = scmp.eq.s32.totalorder %s18, 0
    %p102 = por %p100, %p101
    %p103 = scmp.ne.s32.totalorder %s91, %s92
    %p104 = scmp.eq.s32.totalorder %s19, 1
    %p105 = por %p103, %p104
    %p107 = scmp.ne.s32.totalorder %s92, %s106
    %p108 = scmp.eq.s32.totalorder %s19, 0
    %p109 = por %p107, %p108
    %s111 = sadd.s32 %s110, 1
    %p114 = scmp.eq.s32.totalorder %s13, 1
    %p115 = scmp.ne.s32.totalorder %s110, %s112
    %p116 = scmp.eq.s32.totalorder %s13, 0
    %p117 = por %p115, %p116
    %p118 = scmp.ne.s32.totalorder %s110, %s112
    %p119 = scmp.eq.s32.totalorder %s18, 1
    %p120 = por %p118, %p119
    %p121 = scmp.ne.s32.totalorder %s112, %s113
    %p122 = scmp.eq.s32.totalorder %s18, 0
    %p123 = por %p121, %p122
    %p124 = scmp.ne.s32.totalorder %s112, %s113
    %p125 = scmp.eq.s32.totalorder %s19, 1
    %p126 = por %p124, %p125
    %p128 = scmp.ne.s32.totalorder %s113, %s127
    %p129 = scmp.eq.s32.totalorder %s19, 0
    %p130 = por %p128, %p129
    %s131 = ssub.s32 %s13, %s20
    %p132 = scmp.eq.s32.totalorder %s131, 0
    %s134 = sadd.s32 %s133, 1
    %s135 = scalar_select %p132, %s133, %s134
    %p138 = pneg %p132
    %p139 = scmp.eq.s32.totalorder %s13, 1
    %p140 = por %p138, %p139
    %p141 = scmp.ne.s32.totalorder %s133, %s136
    %p142 = scmp.eq.s32.totalorder %s13, 0
    %p143 = por %p141, %p142
    %p144 = scmp.ne.s32.totalorder %s133, %s136
    %p145 = scmp.eq.s32.totalorder %s18, 1
    %p146 = por %p144, %p145
    %p147 = scmp.ne.s32.totalorder %s136, %s137
    %p148 = scmp.eq.s32.totalorder %s18, 0
    %p149 = por %p147, %p148
    %p150 = scmp.ne.s32.totalorder %s136, %s137
    %p151 = scmp.eq.s32.totalorder %s19, 1
    %p152 = por %p150, %p151
    %p154 = scmp.ne.s32.totalorder %s137, %s153
    %p155 = scmp.eq.s32.totalorder %s19, 0
    %p156 = por %p154, %p155
    %s157 = ssub.s32 %s13, %s20
    %p158 = scmp.eq.s32.totalorder %s157, 0
    %s160 = sadd.s32 %s159, 1
    %s161 = scalar_select %p158, %s159, %s160
    %p164 = pneg %p158
    %p165 = scmp.eq.s32.totalorder %s13, 1
    %p166 = por %p164, %p165
    %p167 = scmp.ne.s32.totalorder %s159, %s162
    %p168 = scmp.eq.s32.totalorder %s13, 0
    %p169 = por %p167, %p168
    %p170 = scmp.ne.s32.totalorder %s159, %s162
    %p171 = scmp.eq.s32.totalorder %s18, 1
    %p172 = por %p170, %p171
    %p173 = scmp.ne.s32.totalorder %s162, %s163
    %p174 = scmp.eq.s32.totalorder %s18, 0
    %p175 = por %p173, %p174
    %p176 = scmp.ne.s32.totalorder %s162, %s163
    %p177 = scmp.eq.s32.totalorder %s19, 1
    %p178 = por %p176, %p177
    %p180 = scmp.ne.s32.totalorder %s163, %s179
    %p181 = scmp.eq.s32.totalorder %s19, 0
    %p182 = por %p180, %p181
    %p183 = scmp.le.s32.totalorder 1, %s13
    %p184 = scmp.lt.s32.totalorder %s13, 3
    %p185 = pnand %p183, %p184
    %p186 = pneg %p185
    // Predicated region
    $region9: #{down_conv_forward.1} parent=5 // pred_check
      _
    $region10: #{down_conv_forward.1} parent=5 // pred_check_branch
      %188 = sbr.rel (%p185) target = $region12
    $region11: #{down_conv_forward.1} parent=5 // pred_region
      %s189 = ssub.s32 %s13, 1
      // Predicated region
      $region13: #{down_conv_forward.1} parent=11 // pred_check
        %p190 = pneg %p60
      $region14: #{down_conv_forward.1} parent=11 // pred_check_branch
        %192 = sbr.rel (%p190) target = $region16
      $region15: #{down_conv_forward.1} parent=11 // pred_region
        _
      $region16: #{down_conv_forward.1} parent=11 // pred_fallthru
        _
      // Predicated region
      $region17: #{down_conv_forward.1} parent=11 // pred_check
        %p193 = pneg %p81
      $region18: #{down_conv_forward.1} parent=11 // pred_check_branch
        %195 = sbr.rel (%p193) target = $region20
      $region19: #{down_conv_forward.1} parent=11 // pred_region
        _
      $region20: #{down_conv_forward.1} parent=11 // pred_fallthru
        _
      // Predicated region
      $region21: #{down_conv_forward.1} parent=11 // pred_check
        %p196 = pneg %p102
      $region22: #{down_conv_forward.1} parent=11 // pred_check_branch
        %198 = sbr.rel (%p196) target = $region24
      $region23: #{down_conv_forward.1} parent=11 // pred_region
        _
      $region24: #{down_conv_forward.1} parent=11 // pred_fallthru
        _
      // Predicated region
      $region25: #{down_conv_forward.1} parent=11 // pred_check
        %p199 = pneg %p123
      $region26: #{down_conv_forward.1} parent=11 // pred_check_branch
        %201 = sbr.rel (%p199) target = $region28
      $region27: #{down_conv_forward.1} parent=11 // pred_region
        _
      $region28: #{down_conv_forward.1} parent=11 // pred_fallthru
        _
    $region12: #{down_conv_forward.1} parent=5 // pred_fallthru
      _
    %p202 = scmp.lt.s32.totalorder %s13, 2
    // Predicated region
    $region29: #{down_conv_forward.1} parent=5 // pred_check
      %p203 = pneg %p202
    $region30: #{down_conv_forward.1} parent=5 // pred_check_branch
      %205 = sbr.rel (%p203) target = $region32
    $region31: #{down_conv_forward.1} parent=5 // pred_region
      // Predicated region
      $region33: #{down_conv_forward.1} parent=31 // pred_check
        %p206 = pneg %p33
      $region34: #{down_conv_forward.1} parent=31 // pred_check_branch
        %208 = sbr.rel (%p206) target = $region36
      $region35: #{down_conv_forward.1} parent=31 // pred_region
        %p209 = scmp.lt.s32.totalorder %s13, 1
        %s210 = scalar_select %p209, %s13, 1
        %s211 = smul.addr %s210, 32
        %s212 = smul.addr %s211, 8
        %s213 = scalar_lea.vmem %s0, %s212
      $region36: #{down_conv_forward.1} parent=31 // pred_fallthru
        _
    $region32: #{down_conv_forward.1} parent=5 // pred_fallthru
      _
    %p214 = scmp.le.s32.totalorder 1, %s13
    %p215 = scmp.lt.s32.totalorder %s13, 3
    %p216 = pnand %p214, %p215
    %p217 = pneg %p216
    // Predicated region
    $region37: #{down_conv_forward.1} parent=5 // pred_check
      _
    $region38: #{down_conv_forward.1} parent=5 // pred_check_branch
      %219 = sbr.rel (%p216) target = $region40
    $region39: #{down_conv_forward.1} parent=5 // pred_region
      %s220 = ssub.s32 %s13, 1
      %p221 = scmp.lt.s32.totalorder %s18, 1
      %s222 = scalar_select %p221, %s18, 1
      %s223 = smul.addr %s222, 32
      %s224 = smul.addr %s223, 8
      %s225 = scalar_lea.vmem %s0, %s224
      %p226 = pneg %p39
      %p227 = pneg %p36
      %p228 = pneg %p60
      %p229 = pneg %p57
      %p230 = pneg %p81
      %p231 = pneg %p78
      %p232 = pneg %p102
      %p233 = pneg %p99
      %p234 = pneg %p123
      %p235 = pneg %p120
      %p236 = pneg %p149
      %p237 = pneg %p146
      %p238 = scmp.lt.s32.totalorder %s18, 1
      %s239 = scalar_select %p238, %s18, 1
      %s240 = smul.addr %s239, 8
      %s241 = smul.addr %s240, 8
      %s242 = scalar_lea.vmem %s5, %s241
      %p243 = pneg %p175
      %p244 = pneg %p172
      %p245 = scmp.lt.s32.totalorder %s18, 1
      %s246 = scalar_select %p245, %s18, 1
      %s247 = smul.addr %s246, 32
      %s248 = smul.addr %s247, 8
      %s249 = scalar_lea.vmem %s6, %s248
      %p250 = scmp.lt.s32.totalorder %s18, 1
      %s251 = scalar_select %p250, %s18, 1
      %s252 = smul.addr %s251, 32
      %s253 = smul.addr %s252, 8
      %s254 = scalar_lea.vmem %s0, %s253
      %p255 = scmp.lt.s32.totalorder %s18, 1
      %s256 = scalar_select %p255, %s18, 1
      %s257 = smul.addr %s256, 8
      %s258 = smul.addr %s257, 8
      %s259 = scalar_lea.vmem %s5, %s258
      %p260 = scmp.lt.s32.totalorder %s18, 1
      %s261 = scalar_select %p260, %s18, 1
      %s262 = smul.addr %s261, 32
      %s263 = smul.addr %s262, 8
      %s264 = scalar_lea.vmem %s6, %s263
      %vm265 = vcmask 31744
      %266 = vst.msk [vmem:[#allocation2] sm:$0xff] %vm265, 0.0
      %267 = vst.msk [vmem:[#allocation2 + $0x8] sm:$0xff] %vm265, 0.0
      %vm268 = vcmask 25600
      %269 = vst.msk [vmem:[#allocation2 + $0x10] sm:$0x3] %vm268, 0.0
      %270 = vst.msk [vmem:[#allocation2 + $0x18] sm:$0xff] %vm265, 0.0
      %271 = vst.msk [vmem:[#allocation2 + $0x20] sm:$0xff] %vm265, 0.0
      %272 = vst.msk [vmem:[#allocation2 + $0x28] sm:$0x3] %vm268, 0.0
      %273 = vst.msk [vmem:[#allocation2 + $0x30] sm:$0xff] %vm265, 0.0
      %274 = vst.msk [vmem:[#allocation2 + $0x38] sm:$0xff] %vm265, 0.0
      %275 = vst.msk [vmem:[#allocation2 + $0x40] sm:$0x3] %vm268, 0.0
      %276 = vst.msk [vmem:[#allocation2 + $0x48] sm:$0xff] %vm265, 0.0
      %277 = vst.msk [vmem:[#allocation2 + $0x50] sm:$0xff] %vm265, 0.0
      %278 = vst.msk [vmem:[#allocation2 + $0x58] sm:$0x3] %vm268, 0.0
      %279 = vst.msk [vmem:[#allocation2 + $0x60] sm:$0xff] %vm265, 0.0
      %280 = vst.msk [vmem:[#allocation2 + $0x68] sm:$0xff] %vm265, 0.0
      %281 = vst.msk [vmem:[#allocation2 + $0x70] sm:$0x3] %vm268, 0.0
      %282 = vst.msk [vmem:[#allocation2 + $0x78] sm:$0xff] %vm265, 0.0
      %283 = vst.msk [vmem:[#allocation2 + $0x80] sm:$0xff] %vm265, 0.0
      %284 = vst.msk [vmem:[#allocation2 + $0x88] sm:$0x3] %vm268, 0.0
      %285 = vst.msk [vmem:[#allocation2 + $0x90] sm:$0xff] %vm265, 0.0
      %286 = vst.msk [vmem:[#allocation2 + $0x98] sm:$0xff] %vm265, 0.0
      %287 = vst.msk [vmem:[#allocation2 + $0xa0] sm:$0x3] %vm268, 0.0
      %288 = vst.msk [vmem:[#allocation2 + $0xa8] sm:$0xff] %vm265, 0.0
      %289 = vst.msk [vmem:[#allocation2 + $0xb0] sm:$0xff] %vm265, 0.0
      %290 = vst.msk [vmem:[#allocation2 + $0xb8] sm:$0x3] %vm268, 0.0
      %291 = vst.msk [vmem:[#allocation2 + $0xc0] sm:$0xff] %vm265, 0.0
      %292 = vst.msk [vmem:[#allocation2 + $0xc8] sm:$0xff] %vm265, 0.0
      %293 = vst.msk [vmem:[#allocation2 + $0xd0] sm:$0x3] %vm268, 0.0
      %294 = vst.msk [vmem:[#allocation2 + $0xd8] sm:$0xff] %vm265, 0.0
      %295 = vst.msk [vmem:[#allocation2 + $0xe0] sm:$0xff] %vm265, 0.0
      %296 = vst.msk [vmem:[#allocation2 + $0xe8] sm:$0x3] %vm268, 0.0
      %297 = vst.msk [vmem:[#allocation2 + $0xf0] sm:$0xff] %vm265, 0.0
      %298 = vst.msk [vmem:[#allocation2 + $0xf8] sm:$0xff] %vm265, 0.0
      %299 = vst.msk [vmem:[#allocation2 + $0x100] sm:$0x3] %vm268, 0.0
      %300 = vst.msk [vmem:[#allocation2 + $0x108] sm:$0xff] %vm265, 0.0
      %301 = vst.msk [vmem:[#allocation2 + $0x110] sm:$0xff] %vm265, 0.0
      %302 = vst.msk [vmem:[#allocation2 + $0x118] sm:$0x3] %vm268, 0.0
      %303 = vst.msk [vmem:[#allocation2 + $0x120] sm:$0xff] %vm265, 0.0
      %304 = vst.msk [vmem:[#allocation2 + $0x128] sm:$0xff] %vm265, 0.0
      %305 = vst.msk [vmem:[#allocation2 + $0x130] sm:$0x3] %vm268, 0.0
      %306 = vst.msk [vmem:[#allocation2 + $0x138] sm:$0xff] %vm265, 0.0
      %307 = vst.msk [vmem:[#allocation2 + $0x140] sm:$0xff] %vm265, 0.0
      %308 = vst.msk [vmem:[#allocation2 + $0x148] sm:$0x3] %vm268, 0.0
      %309 = vst.msk [vmem:[#allocation2 + $0x150] sm:$0xff] %vm265, 0.0
      %310 = vst.msk [vmem:[#allocation2 + $0x158] sm:$0xff] %vm265, 0.0
      %311 = vst.msk [vmem:[#allocation2 + $0x160] sm:$0x3] %vm268, 0.0
      %312 = vst.msk [vmem:[#allocation2 + $0x168] sm:$0xff] %vm265, 0.0
      %313 = vst.msk [vmem:[#allocation2 + $0x170] sm:$0xff] %vm265, 0.0
      %314 = vst.msk [vmem:[#allocation2 + $0x178] sm:$0x3] %vm268, 0.0
      %315 = vst.msk [vmem:[#allocation2 + $0x180] sm:$0xff] %vm265, 0.0
      %316 = vst.msk [vmem:[#allocation2 + $0x188] sm:$0xff] %vm265, 0.0
      %317 = vst.msk [vmem:[#allocation2 + $0x190] sm:$0x3] %vm268, 0.0
      %318 = vst.msk [vmem:[#allocation2 + $0x198] sm:$0xff] %vm265, 0.0
      %319 = vst.msk [vmem:[#allocation2 + $0x1a0] sm:$0xff] %vm265, 0.0
      %320 = vst.msk [vmem:[#allocation2 + $0x1a8] sm:$0x3] %vm268, 0.0
      %v321 = vld [vmem:[%s254] sm:$0xff]
      %v322 = vld [vmem:[%s254 + $0x8] sm:$0xff]
      %v323 = vld [vmem:[%s254 + $0x10] sm:$0xff]
      %v324 = vld [vmem:[%s254 + $0x18] sm:$0xff]
      %v325 = vld [vmem:[%s254 + $0x20] sm:$0xff]
      %v326 = vld [vmem:[%s254 + $0x28] sm:$0xff]
      %v327 = vld [vmem:[%s254 + $0x30] sm:$0xff]
      %v328 = vld [vmem:[%s254 + $0x38] sm:$0xff]
      %v329 = vld [vmem:[%s254 + $0x40] sm:$0xff]
      %v330 = vld [vmem:[%s254 + $0x48] sm:$0xff]
      %v331 = vld [vmem:[%s254 + $0x50] sm:$0xff]
      %v332 = vld [vmem:[%s254 + $0x58] sm:$0xff]
      %v333 = vld [vmem:[%s254 + $0x60] sm:$0xff]
      %v334 = vld [vmem:[%s254 + $0x68] sm:$0xff]
      %v335 = vld [vmem:[%s254 + $0x70] sm:$0xff]
      %v336 = vld [vmem:[%s254 + $0x78] sm:$0xff]
      %v337 = vld [vmem:[%s254 + $0x80] sm:$0xff]
      %v338 = vld [vmem:[%s254 + $0x88] sm:$0xff]
      %v339 = vld [vmem:[%s254 + $0x90] sm:$0xff]
      %v340 = vld [vmem:[%s254 + $0x98] sm:$0xff]
      %v341 = vld [vmem:[%s254 + $0xa0] sm:$0xff]
      %v342 = vld [vmem:[%s254 + $0xa8] sm:$0xff]
      %v343 = vld [vmem:[%s254 + $0xb0] sm:$0xff]
      %v344 = vld [vmem:[%s254 + $0xb8] sm:$0xff]
      %v345 = vld [vmem:[%s254 + $0xc0] sm:$0xff]
      %v346 = vld [vmem:[%s254 + $0xc8] sm:$0xff]
      %v347 = vld [vmem:[%s254 + $0xd0] sm:$0xff]
      %v348 = vld [vmem:[%s254 + $0xd8] sm:$0xff]
      %v349 = vld [vmem:[%s254 + $0xe0] sm:$0xff]
      %v350 = vld [vmem:[%s254 + $0xe8] sm:$0xff]
      %v351 = vld [vmem:[%s254 + $0xf0] sm:$0xff]
      %v352 = vld [vmem:[%s254 + $0xf8] sm:$0xff]
      %s353 = scalar_lea.vmem [#allocation2], 24
      %354 = vst.msk [vmem:[%s353 + $0x1] sm:$0xff] %vm265, %v321
      %355 = vst.msk [vmem:[%s353 + $0x9] sm:$0xff] %vm265, %v322
      %356 = vst.msk [vmem:[%s353 + $0x19] sm:$0xff] %vm265, %v323
      %357 = vst.msk [vmem:[%s353 + $0x21] sm:$0xff] %vm265, %v324
      %358 = vst.msk [vmem:[%s353 + $0x31] sm:$0xff] %vm265, %v325
      %359 = vst.msk [vmem:[%s353 + $0x39] sm:$0xff] %vm265, %v326
      %360 = vst.msk [vmem:[%s353 + $0x49] sm:$0xff] %vm265, %v327
      %361 = vst.msk [vmem:[%s353 + $0x51] sm:$0xff] %vm265, %v328
      %362 = vst.msk [vmem:[%s353 + $0x61] sm:$0xff] %vm265, %v329
      %363 = vst.msk [vmem:[%s353 + $0x69] sm:$0xff] %vm265, %v330
      %364 = vst.msk [vmem:[%s353 + $0x79] sm:$0xff] %vm265, %v331
      %365 = vst.msk [vmem:[%s353 + $0x81] sm:$0xff] %vm265, %v332
      %366 = vst.msk [vmem:[%s353 + $0x91] sm:$0xff] %vm265, %v333
      %367 = vst.msk [vmem:[%s353 + $0x99] sm:$0xff] %vm265, %v334
      %368 = vst.msk [vmem:[%s353 + $0xa9] sm:$0xff] %vm265, %v335
      %369 = vst.msk [vmem:[%s353 + $0xb1] sm:$0xff] %vm265, %v336
      %370 = vst.msk [vmem:[%s353 + $0xc1] sm:$0xff] %vm265, %v337
      %371 = vst.msk [vmem:[%s353 + $0xc9] sm:$0xff] %vm265, %v338
      %372 = vst.msk [vmem:[%s353 + $0xd9] sm:$0xff] %vm265, %v339
      %373 = vst.msk [vmem:[%s353 + $0xe1] sm:$0xff] %vm265, %v340
      %374 = vst.msk [vmem:[%s353 + $0xf1] sm:$0xff] %vm265, %v341
      %375 = vst.msk [vmem:[%s353 + $0xf9] sm:$0xff] %vm265, %v342
      %376 = vst.msk [vmem:[%s353 + $0x109] sm:$0xff] %vm265, %v343
      %377 = vst.msk [vmem:[%s353 + $0x111] sm:$0xff] %vm265, %v344
      %378 = vst.msk [vmem:[%s353 + $0x121] sm:$0xff] %vm265, %v345
      %379 = vst.msk [vmem:[%s353 + $0x129] sm:$0xff] %vm265, %v346
      %380 = vst.msk [vmem:[%s353 + $0x139] sm:$0xff] %vm265, %v347
      %381 = vst.msk [vmem:[%s353 + $0x141] sm:$0xff] %vm265, %v348
      %382 = vst.msk [vmem:[%s353 + $0x151] sm:$0xff] %vm265, %v349
      %383 = vst.msk [vmem:[%s353 + $0x159] sm:$0xff] %vm265, %v350
      %384 = vst.msk [vmem:[%s353 + $0x169] sm:$0xff] %vm265, %v351
      %385 = vst.msk [vmem:[%s353 + $0x171] sm:$0xff] %vm265, %v352
      %v386 = vld [vmem:[#allocation2] sm:$0xff]
      %v387 = vld [vmem:[#allocation2 + $0x8] sm:$0xff]
      %v388 = vld [vmem:[#allocation2 + $0x18] sm:$0xff]
      %v389 = vld [vmem:[#allocation2 + $0x20] sm:$0xff]
      %v390 = vld [vmem:[#allocation2 + $0x30] sm:$0xff]
      %v391 = vld [vmem:[#allocation2 + $0x38] sm:$0xff]
      %v392 = vld [vmem:[#allocation2 + $0x48] sm:$0xff]
      %v393 = vld [vmem:[#allocation2 + $0x50] sm:$0xff]
      %v394 = vld [vmem:[#allocation2 + $0x60] sm:$0xff]
      %v395 = vld [vmem:[#allocation2 + $0x68] sm:$0xff]
      %v396 = vld [vmem:[#allocation2 + $0x78] sm:$0xff]
      %v397 = vld [vmem:[#allocation2 + $0x80] sm:$0xff]
      %v398 = vld [vmem:[#allocation2 + $0x90] sm:$0xff]
      %v399 = vld [vmem:[#allocation2 + $0x98] sm:$0xff]
      %v400 = vld [vmem:[#allocation2 + $0xa8] sm:$0xff]
      %v401 = vld [vmem:[#allocation2 + $0xb0] sm:$0xff]
      %v402 = vld [vmem:[#allocation2 + $0xc0] sm:$0xff]
      %v403 = vld [vmem:[#allocation2 + $0xc8] sm:$0xff]
      %v404 = vld [vmem:[#allocation2 + $0xd8] sm:$0xff]
      %v405 = vld [vmem:[#allocation2 + $0xe0] sm:$0xff]
      %v406 = vld [vmem:[#allocation2 + $0xf0] sm:$0xff]
      %v407 = vld [vmem:[#allocation2 + $0xf8] sm:$0xff]
      %v408 = vld [vmem:[#allocation2 + $0x108] sm:$0xff]
      %v409 = vld [vmem:[#allocation2 + $0x110] sm:$0xff]
      %v410 = vld [vmem:[#allocation2 + $0x120] sm:$0xff]
      %v411 = vld [vmem:[#allocation2 + $0x128] sm:$0xff]
      %v412 = vld [vmem:[#allocation2 + $0x138] sm:$0xff]
      %v413 = vld [vmem:[#allocation2 + $0x140] sm:$0xff]
      %v414 = vld [vmem:[#allocation2 + $0x150] sm:$0xff]
      %v415 = vld [vmem:[#allocation2 + $0x158] sm:$0xff]
      %v416 = vld [vmem:[#allocation2 + $0x168] sm:$0xff]
      %v417 = vld [vmem:[#allocation2 + $0x170] sm:$0xff]
      %418 = vst.msk [vmem:[#allocation4] sm:$0xff] %vm265, %v386
      %419 = vst.msk [vmem:[#allocation4 + $0x8] sm:$0xff] %vm265, %v387
      %420 = vst.msk [vmem:[#allocation4 + $0x10] sm:$0xff] %vm265, %v388
      %421 = vst.msk [vmem:[#allocation4 + $0x18] sm:$0xff] %vm265, %v389
      %422 = vst.msk [vmem:[#allocation4 + $0x20] sm:$0xff] %vm265, %v390
      %423 = vst.msk [vmem:[#allocation4 + $0x28] sm:$0xff] %vm265, %v391
      %424 = vst.msk [vmem:[#allocation4 + $0x30] sm:$0xff] %vm265, %v392
      %425 = vst.msk [vmem:[#allocation4 + $0x38] sm:$0xff] %vm265, %v393
      %426 = vst.msk [vmem:[#allocation4 + $0x40] sm:$0xff] %vm265, %v394
      %427 = vst.msk [vmem:[#allocation4 + $0x48] sm:$0xff] %vm265, %v395
      %428 = vst.msk [vmem:[#allocation4 + $0x50] sm:$0xff] %vm265, %v396
      %429 = vst.msk [vmem:[#allocation4 + $0x58] sm:$0xff] %vm265, %v397
      %430 = vst.msk [vmem:[#allocation4 + $0x60] sm:$0xff] %vm265, %v398
      %431 = vst.msk [vmem:[#allocation4 + $0x68] sm:$0xff] %vm265, %v399
      %432 = vst.msk [vmem:[#allocation4 + $0x70] sm:$0xff] %vm265, %v400
      %433 = vst.msk [vmem:[#allocation4 + $0x78] sm:$0xff] %vm265, %v401
      %434 = vst.msk [vmem:[#allocation4 + $0x80] sm:$0xff] %vm265, %v402
      %435 = vst.msk [vmem:[#allocation4 + $0x88] sm:$0xff] %vm265, %v403
      %436 = vst.msk [vmem:[#allocation4 + $0x90] sm:$0xff] %vm265, %v404
      %437 = vst.msk [vmem:[#allocation4 + $0x98] sm:$0xff] %vm265, %v405
      %438 = vst.msk [vmem:[#allocation4 + $0xa0] sm:$0xff] %vm265, %v406
      %439 = vst.msk [vmem:[#allocation4 + $0xa8] sm:$0xff] %vm265, %v407
      %440 = vst.msk [vmem:[#allocation4 + $0xb0] sm:$0xff] %vm265, %v408
      %441 = vst.msk [vmem:[#allocation4 + $0xb8] sm:$0xff] %vm265, %v409
      %442 = vst.msk [vmem:[#allocation4 + $0xc0] sm:$0xff] %vm265, %v410
      %443 = vst.msk [vmem:[#allocation4 + $0xc8] sm:$0xff] %vm265, %v411
      %444 = vst.msk [vmem:[#allocation4 + $0xd0] sm:$0xff] %vm265, %v412
      %445 = vst.msk [vmem:[#allocation4 + $0xd8] sm:$0xff] %vm265, %v413
      %446 = vst.msk [vmem:[#allocation4 + $0xe0] sm:$0xff] %vm265, %v414
      %447 = vst.msk [vmem:[#allocation4 + $0xe8] sm:$0xff] %vm265, %v415
      %448 = vst.msk [vmem:[#allocation4 + $0xf0] sm:$0xff] %vm265, %v416
      %449 = vst.msk [vmem:[#allocation4 + $0xf8] sm:$0xff] %vm265, %v417
      %v450 = vld [vmem:[#allocation2 + $0x1] sm:$0xff]
      %v451 = vld [vmem:[#allocation2 + $0x9] sm:$0xff]
      %v452 = vld [vmem:[#allocation2 + $0x19] sm:$0xff]
      %v453 = vld [vmem:[#allocation2 + $0x21] sm:$0xff]
      %v454 = vld [vmem:[#allocation2 + $0x31] sm:$0xff]
      %v455 = vld [vmem:[#allocation2 + $0x39] sm:$0xff]
      %v456 = vld [vmem:[#allocation2 + $0x49] sm:$0xff]
      %v457 = vld [vmem:[#allocation2 + $0x51] sm:$0xff]
      %v458 = vld [vmem:[#allocation2 + $0x61] sm:$0xff]
      %v459 = vld [vmem:[#allocation2 + $0x69] sm:$0xff]
      %v460 = vld [vmem:[#allocation2 + $0x79] sm:$0xff]
      %v461 = vld [vmem:[#allocation2 + $0x81] sm:$0xff]
      %v462 = vld [vmem:[#allocation2 + $0x91] sm:$0xff]
      %v463 = vld [vmem:[#allocation2 + $0x99] sm:$0xff]
      %v464 = vld [vmem:[#allocation2 + $0xa9] sm:$0xff]
      %v465 = vld [vmem:[#allocation2 + $0xb1] sm:$0xff]
      %v466 = vld [vmem:[#allocation2 + $0xc1] sm:$0xff]
      %v467 = vld [vmem:[#allocation2 + $0xc9] sm:$0xff]
      %v468 = vld [vmem:[#allocation2 + $0xd9] sm:$0xff]
      %v469 = vld [vmem:[#allocation2 + $0xe1] sm:$0xff]
      %v470 = vld [vmem:[#allocation2 + $0xf1] sm:$0xff]
      %v471 = vld [vmem:[#allocation2 + $0xf9] sm:$0xff]
      %v472 = vld [vmem:[#allocation2 + $0x109] sm:$0xff]
      %v473 = vld [vmem:[#allocation2 + $0x111] sm:$0xff]
      %v474 = vld [vmem:[#allocation2 + $0x121] sm:$0xff]
      %v475 = vld [vmem:[#allocation2 + $0x129] sm:$0xff]
      %v476 = vld [vmem:[#allocation2 + $0x139] sm:$0xff]
      %v477 = vld [vmem:[#allocation2 + $0x141] sm:$0xff]
      %v478 = vld [vmem:[#allocation2 + $0x151] sm:$0xff]
      %v479 = vld [vmem:[#allocation2 + $0x159] sm:$0xff]
      %v480 = vld [vmem:[#allocation2 + $0x169] sm:$0xff]
      %v481 = vld [vmem:[#allocation2 + $0x171] sm:$0xff]
      %514 = vrot.lane.b32.xlu0 %v450, 4
      %v515 = vpop.permute.xlu0 %514
      %516 = vrot.lane.b32.xlu0 %v451, 4
      %v517 = vpop.permute.xlu0 %516
      %518 = vrot.lane.b32.xlu0 %v452, 4
      %v519 = vpop.permute.xlu0 %518
      %520 = vrot.lane.b32.xlu0 %v453, 4
      %v521 = vpop.permute.xlu0 %520
      %522 = vrot.lane.b32.xlu0 %v454, 4
      %v523 = vpop.permute.xlu0 %522
      %524 = vrot.lane.b32.xlu0 %v455, 4
      %v525 = vpop.permute.xlu0 %524
      %526 = vrot.lane.b32.xlu0 %v456, 4
      %v527 = vpop.permute.xlu0 %526
      %528 = vrot.lane.b32.xlu0 %v457, 4
      %v529 = vpop.permute.xlu0 %528
      %530 = vrot.lane.b32.xlu0 %v458, 4
      %v531 = vpop.permute.xlu0 %530
      %532 = vrot.lane.b32.xlu0 %v459, 4
      %v533 = vpop.permute.xlu0 %532
      %534 = vrot.lane.b32.xlu0 %v460, 4
      %v535 = vpop.permute.xlu0 %534
      %536 = vrot.lane.b32.xlu0 %v461, 4
      %v537 = vpop.permute.xlu0 %536
      %538 = vrot.lane.b32.xlu0 %v462, 4
      %v539 = vpop.permute.xlu0 %538
      %540 = vrot.lane.b32.xlu0 %v463, 4
      %v541 = vpop.permute.xlu0 %540
      %542 = vrot.lane.b32.xlu0 %v464, 4
      %v543 = vpop.permute.xlu0 %542
      %544 = vrot.lane.b32.xlu0 %v465, 4
      %v545 = vpop.permute.xlu0 %544
      %546 = vrot.lane.b32.xlu0 %v466, 4
      %v547 = vpop.permute.xlu0 %546
      %548 = vrot.lane.b32.xlu0 %v467, 4
      %v549 = vpop.permute.xlu0 %548
      %550 = vrot.lane.b32.xlu0 %v468, 4
      %v551 = vpop.permute.xlu0 %550
      %552 = vrot.lane.b32.xlu0 %v469, 4
      %v553 = vpop.permute.xlu0 %552
      %554 = vrot.lane.b32.xlu0 %v470, 4
      %v555 = vpop.permute.xlu0 %554
      %556 = vrot.lane.b32.xlu0 %v471, 4
      %v557 = vpop.permute.xlu0 %556
      %558 = vrot.lane.b32.xlu0 %v472, 4
      %v559 = vpop.permute.xlu0 %558
      %560 = vrot.lane.b32.xlu0 %v473, 4
      %v561 = vpop.permute.xlu0 %560
      %562 = vrot.lane.b32.xlu0 %v474, 4
      %v563 = vpop.permute.xlu0 %562
      %564 = vrot.lane.b32.xlu0 %v475, 4
      %v565 = vpop.permute.xlu0 %564
      %566 = vrot.lane.b32.xlu0 %v476, 4
      %v567 = vpop.permute.xlu0 %566
      %568 = vrot.lane.b32.xlu0 %v477, 4
      %v569 = vpop.permute.xlu0 %568
      %570 = vrot.lane.b32.xlu0 %v478, 4
      %v571 = vpop.permute.xlu0 %570
      %572 = vrot.lane.b32.xlu0 %v479, 4
      %v573 = vpop.permute.xlu0 %572
      %574 = vrot.lane.b32.xlu0 %v480, 4
      %v575 = vpop.permute.xlu0 %574
      %576 = vrot.lane.b32.xlu0 %v481, 4
      %v577 = vpop.permute.xlu0 %576
      %vm610 = vcmask 64544
      %611 = vst.msk [vmem:[#allocation4] sm:$0xff] %vm610, %v515
      %612 = vst.msk [vmem:[#allocation4 + $0x8] sm:$0xff] %vm610, %v517
      %613 = vst.msk [vmem:[#allocation4 + $0x10] sm:$0xff] %vm610, %v519
      %614 = vst.msk [vmem:[#allocation4 + $0x18] sm:$0xff] %vm610, %v521
      %615 = vst.msk [vmem:[#allocation4 + $0x20] sm:$0xff] %vm610, %v523
      %616 = vst.msk [vmem:[#allocation4 + $0x28] sm:$0xff] %vm610, %v525
      %617 = vst.msk [vmem:[#allocation4 + $0x30] sm:$0xff] %vm610, %v527
      %618 = vst.msk [vmem:[#allocation4 + $0x38] sm:$0xff] %vm610, %v529
      %619 = vst.msk [vmem:[#allocation4 + $0x40] sm:$0xff] %vm610, %v531
      %620 = vst.msk [vmem:[#allocation4 + $0x48] sm:$0xff] %vm610, %v533
      %621 = vst.msk [vmem:[#allocation4 + $0x50] sm:$0xff] %vm610, %v535
      %622 = vst.msk [vmem:[#allocation4 + $0x58] sm:$0xff] %vm610, %v537
      %623 = vst.msk [vmem:[#allocation4 + $0x60] sm:$0xff] %vm610, %v539
      %624 = vst.msk [vmem:[#allocation4 + $0x68] sm:$0xff] %vm610, %v541
      %625 = vst.msk [vmem:[#allocation4 + $0x70] sm:$0xff] %vm610, %v543
      %626 = vst.msk [vmem:[#allocation4 + $0x78] sm:$0xff] %vm610, %v545
      %627 = vst.msk [vmem:[#allocation4 + $0x80] sm:$0xff] %vm610, %v547
      %628 = vst.msk [vmem:[#allocation4 + $0x88] sm:$0xff] %vm610, %v549
      %629 = vst.msk [vmem:[#allocation4 + $0x90] sm:$0xff] %vm610, %v551
      %630 = vst.msk [vmem:[#allocation4 + $0x98] sm:$0xff] %vm610, %v553
      %631 = vst.msk [vmem:[#allocation4 + $0xa0] sm:$0xff] %vm610, %v555
      %632 = vst.msk [vmem:[#allocation4 + $0xa8] sm:$0xff] %vm610, %v557
      %633 = vst.msk [vmem:[#allocation4 + $0xb0] sm:$0xff] %vm610, %v559
      %634 = vst.msk [vmem:[#allocation4 + $0xb8] sm:$0xff] %vm610, %v561
      %635 = vst.msk [vmem:[#allocation4 + $0xc0] sm:$0xff] %vm610, %v563
      %636 = vst.msk [vmem:[#allocation4 + $0xc8] sm:$0xff] %vm610, %v565
      %637 = vst.msk [vmem:[#allocation4 + $0xd0] sm:$0xff] %vm610, %v567
      %638 = vst.msk [vmem:[#allocation4 + $0xd8] sm:$0xff] %vm610, %v569
      %639 = vst.msk [vmem:[#allocation4 + $0xe0] sm:$0xff] %vm610, %v571
      %640 = vst.msk [vmem:[#allocation4 + $0xe8] sm:$0xff] %vm610, %v573
      %641 = vst.msk [vmem:[#allocation4 + $0xf0] sm:$0xff] %vm610, %v575
      %642 = vst.msk [vmem:[#allocation4 + $0xf8] sm:$0xff] %vm610, %v577
      %v643 = vld [vmem:[#allocation2 + $0x2] sm:$0xff]
      %v644 = vld [vmem:[#allocation2 + $0xa] sm:$0xff]
      %v645 = vld [vmem:[#allocation2 + $0x1a] sm:$0xff]
      %v646 = vld [vmem:[#allocation2 + $0x22] sm:$0xff]
      %v647 = vld [vmem:[#allocation2 + $0x32] sm:$0xff]
      %v648 = vld [vmem:[#allocation2 + $0x3a] sm:$0xff]
      %v649 = vld [vmem:[#allocation2 + $0x4a] sm:$0xff]
      %v650 = vld [vmem:[#allocation2 + $0x52] sm:$0xff]
      %v651 = vld [vmem:[#allocation2 + $0x62] sm:$0xff]
      %v652 = vld [vmem:[#allocation2 + $0x6a] sm:$0xff]
      %v653 = vld [vmem:[#allocation2 + $0x7a] sm:$0xff]
      %v654 = vld [vmem:[#allocation2 + $0x82] sm:$0xff]
      %v655 = vld [vmem:[#allocation2 + $0x92] sm:$0xff]
      %v656 = vld [vmem:[#allocation2 + $0x9a] sm:$0xff]
      %v657 = vld [vmem:[#allocation2 + $0xaa] sm:$0xff]
      %v658 = vld [vmem:[#allocation2 + $0xb2] sm:$0xff]
      %v659 = vld [vmem:[#allocation2 + $0xc2] sm:$0xff]
      %v660 = vld [vmem:[#allocation2 + $0xca] sm:$0xff]
      %v661 = vld [vmem:[#allocation2 + $0xda] sm:$0xff]
      %v662 = vld [vmem:[#allocation2 + $0xe2] sm:$0xff]
      %v663 = vld [vmem:[#allocation2 + $0xf2] sm:$0xff]
      %v664 = vld [vmem:[#allocation2 + $0xfa] sm:$0xff]
      %v665 = vld [vmem:[#allocation2 + $0x10a] sm:$0xff]
      %v666 = vld [vmem:[#allocation2 + $0x112] sm:$0xff]
      %v667 = vld [vmem:[#allocation2 + $0x122] sm:$0xff]
      %v668 = vld [vmem:[#allocation2 + $0x12a] sm:$0xff]
      %v669 = vld [vmem:[#allocation2 + $0x13a] sm:$0xff]
      %v670 = vld [vmem:[#allocation2 + $0x142] sm:$0xff]
      %v671 = vld [vmem:[#allocation2 + $0x152] sm:$0xff]
      %v672 = vld [vmem:[#allocation2 + $0x15a] sm:$0xff]
      %v673 = vld [vmem:[#allocation2 + $0x16a] sm:$0xff]
      %v674 = vld [vmem:[#allocation2 + $0x172] sm:$0xff]
      %707 = vrot.lane.b32.xlu0 %v643, 8
      %v708 = vpop.permute.xlu0 %707
      %709 = vrot.lane.b32.xlu0 %v644, 8
      %v710 = vpop.permute.xlu0 %709
      %711 = vrot.lane.b32.xlu0 %v645, 8
      %v712 = vpop.permute.xlu0 %711
      %713 = vrot.lane.b32.xlu0 %v646, 8
      %v714 = vpop.permute.xlu0 %713
      %715 = vrot.lane.b32.xlu0 %v647, 8
      %v716 = vpop.permute.xlu0 %715
      %717 = vrot.lane.b32.xlu0 %v648, 8
      %v718 = vpop.permute.xlu0 %717
      %719 = vrot.lane.b32.xlu0 %v649, 8
      %v720 = vpop.permute.xlu0 %719
      %721 = vrot.lane.b32.xlu0 %v650, 8
      %v722 = vpop.permute.xlu0 %721
      %723 = vrot.lane.b32.xlu0 %v651, 8
      %v724 = vpop.permute.xlu0 %723
      %725 = vrot.lane.b32.xlu0 %v652, 8
      %v726 = vpop.permute.xlu0 %725
      %727 = vrot.lane.b32.xlu0 %v653, 8
      %v728 = vpop.permute.xlu0 %727
      %729 = vrot.lane.b32.xlu0 %v654, 8
      %v730 = vpop.permute.xlu0 %729
      %731 = vrot.lane.b32.xlu0 %v655, 8
      %v732 = vpop.permute.xlu0 %731
      %733 = vrot.lane.b32.xlu0 %v656, 8
      %v734 = vpop.permute.xlu0 %733
      %735 = vrot.lane.b32.xlu0 %v657, 8
      %v736 = vpop.permute.xlu0 %735
      %737 = vrot.lane.b32.xlu0 %v658, 8
      %v738 = vpop.permute.xlu0 %737
      %739 = vrot.lane.b32.xlu0 %v659, 8
      %v740 = vpop.permute.xlu0 %739
      %741 = vrot.lane.b32.xlu0 %v660, 8
      %v742 = vpop.permute.xlu0 %741
      %743 = vrot.lane.b32.xlu0 %v661, 8
      %v744 = vpop.permute.xlu0 %743
      %745 = vrot.lane.b32.xlu0 %v662, 8
      %v746 = vpop.permute.xlu0 %745
      %747 = vrot.lane.b32.xlu0 %v663, 8
      %v748 = vpop.permute.xlu0 %747
      %749 = vrot.lane.b32.xlu0 %v664, 8
      %v750 = vpop.permute.xlu0 %749
      %751 = vrot.lane.b32.xlu0 %v665, 8
      %v752 = vpop.permute.xlu0 %751
      %753 = vrot.lane.b32.xlu0 %v666, 8
      %v754 = vpop.permute.xlu0 %753
      %755 = vrot.lane.b32.xlu0 %v667, 8
      %v756 = vpop.permute.xlu0 %755
      %757 = vrot.lane.b32.xlu0 %v668, 8
      %v758 = vpop.permute.xlu0 %757
      %759 = vrot.lane.b32.xlu0 %v669, 8
      %v760 = vpop.permute.xlu0 %759
      %761 = vrot.lane.b32.xlu0 %v670, 8
      %v762 = vpop.permute.xlu0 %761
      %763 = vrot.lane.b32.xlu0 %v671, 8
      %v764 = vpop.permute.xlu0 %763
      %765 = vrot.lane.b32.xlu0 %v672, 8
      %v766 = vpop.permute.xlu0 %765
      %767 = vrot.lane.b32.xlu0 %v673, 8
      %v768 = vpop.permute.xlu0 %767
      %769 = vrot.lane.b32.xlu0 %v674, 8
      %v770 = vpop.permute.xlu0 %769
      %vm803 = vcmask 97344
      %804 = vst.msk [vmem:[#allocation4] sm:$0xff] %vm803, %v708
      %805 = vst.msk [vmem:[#allocation4 + $0x8] sm:$0xff] %vm803, %v710
      %806 = vst.msk [vmem:[#allocation4 + $0x10] sm:$0xff] %vm803, %v712
      %807 = vst.msk [vmem:[#allocation4 + $0x18] sm:$0xff] %vm803, %v714
      %808 = vst.msk [vmem:[#allocation4 + $0x20] sm:$0xff] %vm803, %v716
      %809 = vst.msk [vmem:[#allocation4 + $0x28] sm:$0xff] %vm803, %v718
      %810 = vst.msk [vmem:[#allocation4 + $0x30] sm:$0xff] %vm803, %v720
      %811 = vst.msk [vmem:[#allocation4 + $0x38] sm:$0xff] %vm803, %v722
      %812 = vst.msk [vmem:[#allocation4 + $0x40] sm:$0xff] %vm803, %v724
      %813 = vst.msk [vmem:[#allocation4 + $0x48] sm:$0xff] %vm803, %v726
      %814 = vst.msk [vmem:[#allocation4 + $0x50] sm:$0xff] %vm803, %v728
      %815 = vst.msk [vmem:[#allocation4 + $0x58] sm:$0xff] %vm803, %v730
      %816 = vst.msk [vmem:[#allocation4 + $0x60] sm:$0xff] %vm803, %v732
      %817 = vst.msk [vmem:[#allocation4 + $0x68] sm:$0xff] %vm803, %v734
      %818 = vst.msk [vmem:[#allocation4 + $0x70] sm:$0xff] %vm803, %v736
      %819 = vst.msk [vmem:[#allocation4 + $0x78] sm:$0xff] %vm803, %v738
      %820 = vst.msk [vmem:[#allocation4 + $0x80] sm:$0xff] %vm803, %v740
      %821 = vst.msk [vmem:[#allocation4 + $0x88] sm:$0xff] %vm803, %v742
      %822 = vst.msk [vmem:[#allocation4 + $0x90] sm:$0xff] %vm803, %v744
      %823 = vst.msk [vmem:[#allocation4 + $0x98] sm:$0xff] %vm803, %v746
      %824 = vst.msk [vmem:[#allocation4 + $0xa0] sm:$0xff] %vm803, %v748
      %825 = vst.msk [vmem:[#allocation4 + $0xa8] sm:$0xff] %vm803, %v750
      %826 = vst.msk [vmem:[#allocation4 + $0xb0] sm:$0xff] %vm803, %v752
      %827 = vst.msk [vmem:[#allocation4 + $0xb8] sm:$0xff] %vm803, %v754
      %828 = vst.msk [vmem:[#allocation4 + $0xc0] sm:$0xff] %vm803, %v756
      %829 = vst.msk [vmem:[#allocation4 + $0xc8] sm:$0xff] %vm803, %v758
      %830 = vst.msk [vmem:[#allocation4 + $0xd0] sm:$0xff] %vm803, %v760
      %831 = vst.msk [vmem:[#allocation4 + $0xd8] sm:$0xff] %vm803, %v762
      %832 = vst.msk [vmem:[#allocation4 + $0xe0] sm:$0xff] %vm803, %v764
      %833 = vst.msk [vmem:[#allocation4 + $0xe8] sm:$0xff] %vm803, %v766
      %834 = vst.msk [vmem:[#allocation4 + $0xf0] sm:$0xff] %vm803, %v768
      %835 = vst.msk [vmem:[#allocation4 + $0xf8] sm:$0xff] %vm803, %v770
      %v836 = vld [vmem:[%s353] sm:$0xff]
      %v837 = vld [vmem:[%s353 + $0x8] sm:$0xff]
      %v838 = vld [vmem:[%s353 + $0x18] sm:$0xff]
      %v839 = vld [vmem:[%s353 + $0x20] sm:$0xff]
      %v840 = vld [vmem:[%s353 + $0x30] sm:$0xff]
      %v841 = vld [vmem:[%s353 + $0x38] sm:$0xff]
      %v842 = vld [vmem:[%s353 + $0x48] sm:$0xff]
      %v843 = vld [vmem:[%s353 + $0x50] sm:$0xff]
      %v844 = vld [vmem:[%s353 + $0x60] sm:$0xff]
      %v845 = vld [vmem:[%s353 + $0x68] sm:$0xff]
      %v846 = vld [vmem:[%s353 + $0x78] sm:$0xff]
      %v847 = vld [vmem:[%s353 + $0x80] sm:$0xff]
      %v848 = vld [vmem:[%s353 + $0x90] sm:$0xff]
      %v849 = vld [vmem:[%s353 + $0x98] sm:$0xff]
      %v850 = vld [vmem:[%s353 + $0xa8] sm:$0xff]
      %v851 = vld [vmem:[%s353 + $0xb0] sm:$0xff]
      %v852 = vld [vmem:[%s353 + $0xc0] sm:$0xff]
      %v853 = vld [vmem:[%s353 + $0xc8] sm:$0xff]
      %v854 = vld [vmem:[%s353 + $0xd8] sm:$0xff]
      %v855 = vld [vmem:[%s353 + $0xe0] sm:$0xff]
      %v856 = vld [vmem:[%s353 + $0xf0] sm:$0xff]
      %v857 = vld [vmem:[%s353 + $0xf8] sm:$0xff]
      %v858 = vld [vmem:[%s353 + $0x108] sm:$0xff]
      %v859 = vld [vmem:[%s353 + $0x110] sm:$0xff]
      %v860 = vld [vmem:[%s353 + $0x120] sm:$0xff]
      %v861 = vld [vmem:[%s353 + $0x128] sm:$0xff]
      %v862 = vld [vmem:[%s353 + $0x138] sm:$0xff]
      %v863 = vld [vmem:[%s353 + $0x140] sm:$0xff]
      %v864 = vld [vmem:[%s353 + $0x150] sm:$0xff]
      %v865 = vld [vmem:[%s353 + $0x158] sm:$0xff]
      %v866 = vld [vmem:[%s353 + $0x168] sm:$0xff]
      %v867 = vld [vmem:[%s353 + $0x170] sm:$0xff]
      %900 = vrot.lane.b32.xlu0 %v836, 12
      %v901 = vpop.permute.xlu0 %900
      %902 = vrot.lane.b32.xlu0 %v837, 12
      %v903 = vpop.permute.xlu0 %902
      %904 = vrot.lane.b32.xlu0 %v838, 12
      %v905 = vpop.permute.xlu0 %904
      %906 = vrot.lane.b32.xlu0 %v839, 12
      %v907 = vpop.permute.xlu0 %906
      %908 = vrot.lane.b32.xlu0 %v840, 12
      %v909 = vpop.permute.xlu0 %908
      %910 = vrot.lane.b32.xlu0 %v841, 12
      %v911 = vpop.permute.xlu0 %910
      %912 = vrot.lane.b32.xlu0 %v842, 12
      %v913 = vpop.permute.xlu0 %912
      %914 = vrot.lane.b32.xlu0 %v843, 12
      %v915 = vpop.permute.xlu0 %914
      %916 = vrot.lane.b32.xlu0 %v844, 12
      %v917 = vpop.permute.xlu0 %916
      %918 = vrot.lane.b32.xlu0 %v845, 12
      %v919 = vpop.permute.xlu0 %918
      %920 = vrot.lane.b32.xlu0 %v846, 12
      %v921 = vpop.permute.xlu0 %920
      %922 = vrot.lane.b32.xlu0 %v847, 12
      %v923 = vpop.permute.xlu0 %922
      %924 = vrot.lane.b32.xlu0 %v848, 12
      %v925 = vpop.permute.xlu0 %924
      %926 = vrot.lane.b32.xlu0 %v849, 12
      %v927 = vpop.permute.xlu0 %926
      %928 = vrot.lane.b32.xlu0 %v850, 12
      %v929 = vpop.permute.xlu0 %928
      %930 = vrot.lane.b32.xlu0 %v851, 12
      %v931 = vpop.permute.xlu0 %930
      %932 = vrot.lane.b32.xlu0 %v852, 12
      %v933 = vpop.permute.xlu0 %932
      %934 = vrot.lane.b32.xlu0 %v853, 12
      %v935 = vpop.permute.xlu0 %934
      %936 = vrot.lane.b32.xlu0 %v854, 12
      %v937 = vpop.permute.xlu0 %936
      %938 = vrot.lane.b32.xlu0 %v855, 12
      %v939 = vpop.permute.xlu0 %938
      %940 = vrot.lane.b32.xlu0 %v856, 12
      %v941 = vpop.permute.xlu0 %940
      %942 = vrot.lane.b32.xlu0 %v857, 12
      %v943 = vpop.permute.xlu0 %942
      %944 = vrot.lane.b32.xlu0 %v858, 12
      %v945 = vpop.permute.xlu0 %944
      %946 = vrot.lane.b32.xlu0 %v859, 12
      %v947 = vpop.permute.xlu0 %946
      %948 = vrot.lane.b32.xlu0 %v860, 12
      %v949 = vpop.permute.xlu0 %948
      %950 = vrot.lane.b32.xlu0 %v861, 12
      %v951 = vpop.permute.xlu0 %950
      %952 = vrot.lane.b32.xlu0 %v862, 12
      %v953 = vpop.permute.xlu0 %952
      %954 = vrot.lane.b32.xlu0 %v863, 12
      %v955 = vpop.permute.xlu0 %954
      %956 = vrot.lane.b32.xlu0 %v864, 12
      %v957 = vpop.permute.xlu0 %956
      %958 = vrot.lane.b32.xlu0 %v865, 12
      %v959 = vpop.permute.xlu0 %958
      %960 = vrot.lane.b32.xlu0 %v866, 12
      %v961 = vpop.permute.xlu0 %960
      %962 = vrot.lane.b32.xlu0 %v867, 12
      %v963 = vpop.permute.xlu0 %962
      %vm996 = vcmask 130144
      %997 = vst.msk [vmem:[#allocation4] sm:$0xff] %vm996, %v901
      %998 = vst.msk [vmem:[#allocation4 + $0x8] sm:$0xff] %vm996, %v903
      %999 = vst.msk [vmem:[#allocation4 + $0x10] sm:$0xff] %vm996, %v905
      %1000 = vst.msk [vmem:[#allocation4 + $0x18] sm:$0xff] %vm996, %v907
      %1001 = vst.msk [vmem:[#allocation4 + $0x20] sm:$0xff] %vm996, %v909
      %1002 = vst.msk [vmem:[#allocation4 + $0x28] sm:$0xff] %vm996, %v911
      %1003 = vst.msk [vmem:[#allocation4 + $0x30] sm:$0xff] %vm996, %v913
      %1004 = vst.msk [vmem:[#allocation4 + $0x38] sm:$0xff] %vm996, %v915
      %1005 = vst.msk [vmem:[#allocation4 + $0x40] sm:$0xff] %vm996, %v917
      %1006 = vst.msk [vmem:[#allocation4 + $0x48] sm:$0xff] %vm996, %v919
      %1007 = vst.msk [vmem:[#allocation4 + $0x50] sm:$0xff] %vm996, %v921
      %1008 = vst.msk [vmem:[#allocation4 + $0x58] sm:$0xff] %vm996, %v923
      %1009 = vst.msk [vmem:[#allocation4 + $0x60] sm:$0xff] %vm996, %v925
      %1010 = vst.msk [vmem:[#allocation4 + $0x68] sm:$0xff] %vm996, %v927
      %1011 = vst.msk [vmem:[#allocation4 + $0x70] sm:$0xff] %vm996, %v929
      %1012 = vst.msk [vmem:[#allocation4 + $0x78] sm:$0xff] %vm996, %v931
      %1013 = vst.msk [vmem:[#allocation4 + $0x80] sm:$0xff] %vm996, %v933
      %1014 = vst.msk [vmem:[#allocation4 + $0x88] sm:$0xff] %vm996, %v935
      %1015 = vst.msk [vmem:[#allocation4 + $0x90] sm:$0xff] %vm996, %v937
      %1016 = vst.msk [vmem:[#allocation4 + $0x98] sm:$0xff] %vm996, %v939
      %1017 = vst.msk [vmem:[#allocation4 + $0xa0] sm:$0xff] %vm996, %v941
      %1018 = vst.msk [vmem:[#allocation4 + $0xa8] sm:$0xff] %vm996, %v943
      %1019 = vst.msk [vmem:[#allocation4 + $0xb0] sm:$0xff] %vm996, %v945
      %1020 = vst.msk [vmem:[#allocation4 + $0xb8] sm:$0xff] %vm996, %v947
      %1021 = vst.msk [vmem:[#allocation4 + $0xc0] sm:$0xff] %vm996, %v949
      %1022 = vst.msk [vmem:[#allocation4 + $0xc8] sm:$0xff] %vm996, %v951
      %1023 = vst.msk [vmem:[#allocation4 + $0xd0] sm:$0xff] %vm996, %v953
      %1024 = vst.msk [vmem:[#allocation4 + $0xd8] sm:$0xff] %vm996, %v955
      %1025 = vst.msk [vmem:[#allocation4 + $0xe0] sm:$0xff] %vm996, %v957
      %1026 = vst.msk [vmem:[#allocation4 + $0xe8] sm:$0xff] %vm996, %v959
      %1027 = vst.msk [vmem:[#allocation4 + $0xf0] sm:$0xff] %vm996, %v961
      %1028 = vst.msk [vmem:[#allocation4 + $0xf8] sm:$0xff] %vm996, %v963
      %v1029 = vld [vmem:[%s353 + $0x1] sm:$0xff]
      %v1030 = vld [vmem:[%s353 + $0x9] sm:$0xff]
      %v1031 = vld [vmem:[%s353 + $0x19] sm:$0xff]
      %v1032 = vld [vmem:[%s353 + $0x21] sm:$0xff]
      %v1033 = vld [vmem:[%s353 + $0x31] sm:$0xff]
      %v1034 = vld [vmem:[%s353 + $0x39] sm:$0xff]
      %v1035 = vld [vmem:[%s353 + $0x49] sm:$0xff]
      %v1036 = vld [vmem:[%s353 + $0x51] sm:$0xff]
      %v1037 = vld [vmem:[%s353 + $0x61] sm:$0xff]
      %v1038 = vld [vmem:[%s353 + $0x69] sm:$0xff]
      %v1039 = vld [vmem:[%s353 + $0x79] sm:$0xff]
      %v1040 = vld [vmem:[%s353 + $0x81] sm:$0xff]
      %v1041 = vld [vmem:[%s353 + $0x91] sm:$0xff]
      %v1042 = vld [vmem:[%s353 + $0x99] sm:$0xff]
      %v1043 = vld [vmem:[%s353 + $0xa9] sm:$0xff]
      %v1044 = vld [vmem:[%s353 + $0xb1] sm:$0xff]
      %v1045 = vld [vmem:[%s353 + $0xc1] sm:$0xff]
      %v1046 = vld [vmem:[%s353 + $0xc9] sm:$0xff]
      %v1047 = vld [vmem:[%s353 + $0xd9] sm:$0xff]
      %v1048 = vld [vmem:[%s353 + $0xe1] sm:$0xff]
      %v1049 = vld [vmem:[%s353 + $0xf1] sm:$0xff]
      %v1050 = vld [vmem:[%s353 + $0xf9] sm:$0xff]
      %v1051 = vld [vmem:[%s353 + $0x109] sm:$0xff]
      %v1052 = vld [vmem:[%s353 + $0x111] sm:$0xff]
      %v1053 = vld [vmem:[%s353 + $0x121] sm:$0xff]
      %v1054 = vld [vmem:[%s353 + $0x129] sm:$0xff]
      %v1055 = vld [vmem:[%s353 + $0x139] sm:$0xff]
      %v1056 = vld [vmem:[%s353 + $0x141] sm:$0xff]
      %v1057 = vld [vmem:[%s353 + $0x151] sm:$0xff]
      %v1058 = vld [vmem:[%s353 + $0x159] sm:$0xff]
      %v1059 = vld [vmem:[%s353 + $0x169] sm:$0xff]
      %v1060 = vld [vmem:[%s353 + $0x171] sm:$0xff]
      %1093 = vrot.lane.b32.xlu0 %v1029, 16
      %v1094 = vpop.permute.xlu0 %1093
      %1095 = vrot.lane.b32.xlu0 %v1030, 16
      %v1096 = vpop.permute.xlu0 %1095
      %1097 = vrot.lane.b32.xlu0 %v1031, 16
      %v1098 = vpop.permute.xlu0 %1097
      %1099 = vrot.lane.b32.xlu0 %v1032, 16
      %v1100 = vpop.permute.xlu0 %1099
      %1101 = vrot.lane.b32.xlu0 %v1033, 16
      %v1102 = vpop.permute.xlu0 %1101
      %1103 = vrot.lane.b32.xlu0 %v1034, 16
      %v1104 = vpop.permute.xlu0 %1103
      %1105 = vrot.lane.b32.xlu0 %v1035, 16
      %v1106 = vpop.permute.xlu0 %1105
      %1107 = vrot.lane.b32.xlu0 %v1036, 16
      %v1108 = vpop.permute.xlu0 %1107
      %1109 = vrot.lane.b32.xlu0 %v1037, 16
      %v1110 = vpop.permute.xlu0 %1109
      %1111 = vrot.lane.b32.xlu0 %v1038, 16
      %v1112 = vpop.permute.xlu0 %1111
      %1113 = vrot.lane.b32.xlu0 %v1039, 16
      %v1114 = vpop.permute.xlu0 %1113
      %1115 = vrot.lane.b32.xlu0 %v1040, 16
      %v1116 = vpop.permute.xlu0 %1115
      %1117 = vrot.lane.b32.xlu0 %v1041, 16
      %v1118 = vpop.permute.xlu0 %1117
      %1119 = vrot.lane.b32.xlu0 %v1042, 16
      %v1120 = vpop.permute.xlu0 %1119
      %1121 = vrot.lane.b32.xlu0 %v1043, 16
      %v1122 = vpop.permute.xlu0 %1121
      %1123 = vrot.lane.b32.xlu0 %v1044, 16
      %v1124 = vpop.permute.xlu0 %1123
      %1125 = vrot.lane.b32.xlu0 %v1045, 16
      %v1126 = vpop.permute.xlu0 %1125
      %1127 = vrot.lane.b32.xlu0 %v1046, 16
      %v1128 = vpop.permute.xlu0 %1127
      %1129 = vrot.lane.b32.xlu0 %v1047, 16
      %v1130 = vpop.permute.xlu0 %1129
      %1131 = vrot.lane.b32.xlu0 %v1048, 16
      %v1132 = vpop.permute.xlu0 %1131
      %1133 = vrot.lane.b32.xlu0 %v1049, 16
      %v1134 = vpop.permute.xlu0 %1133
      %1135 = vrot.lane.b32.xlu0 %v1050, 16
      %v1136 = vpop.permute.xlu0 %1135
      %1137 = vrot.lane.b32.xlu0 %v1051, 16
      %v1138 = vpop.permute.xlu0 %1137
      %1139 = vrot.lane.b32.xlu0 %v1052, 16
      %v1140 = vpop.permute.xlu0 %1139
      %1141 = vrot.lane.b32.xlu0 %v1053, 16
      %v1142 = vpop.permute.xlu0 %1141
      %1143 = vrot.lane.b32.xlu0 %v1054, 16
      %v1144 = vpop.permute.xlu0 %1143
      %1145 = vrot.lane.b32.xlu0 %v1055, 16
      %v1146 = vpop.permute.xlu0 %1145
      %1147 = vrot.lane.b32.xlu0 %v1056, 16
      %v1148 = vpop.permute.xlu0 %1147
      %1149 = vrot.lane.b32.xlu0 %v1057, 16
      %v1150 = vpop.permute.xlu0 %1149
      %1151 = vrot.lane.b32.xlu0 %v1058, 16
      %v1152 = vpop.permute.xlu0 %1151
      %1153 = vrot.lane.b32.xlu0 %v1059, 16
      %v1154 = vpop.permute.xlu0 %1153
      %1155 = vrot.lane.b32.xlu0 %v1060, 16
      %v1156 = vpop.permute.xlu0 %1155
      %vm1189 = vcmask 162944
      %1190 = vst.msk [vmem:[#allocation4] sm:$0xff] %vm1189, %v1094
      %1191 = vst.msk [vmem:[#allocation4 + $0x8] sm:$0xff] %vm1189, %v1096
      %1192 = vst.msk [vmem:[#allocation4 + $0x10] sm:$0xff] %vm1189, %v1098
      %1193 = vst.msk [vmem:[#allocation4 + $0x18] sm:$0xff] %vm1189, %v1100
      %1194 = vst.msk [vmem:[#allocation4 + $0x20] sm:$0xff] %vm1189, %v1102
      %1195 = vst.msk [vmem:[#allocation4 + $0x28] sm:$0xff] %vm1189, %v1104
      %1196 = vst.msk [vmem:[#allocation4 + $0x30] sm:$0xff] %vm1189, %v1106
      %1197 = vst.msk [vmem:[#allocation4 + $0x38] sm:$0xff] %vm1189, %v1108
      %1198 = vst.msk [vmem:[#allocation4 + $0x40] sm:$0xff] %vm1189, %v1110
      %1199 = vst.msk [vmem:[#allocation4 + $0x48] sm:$0xff] %vm1189, %v1112
      %1200 = vst.msk [vmem:[#allocation4 + $0x50] sm:$0xff] %vm1189, %v1114
      %1201 = vst.msk [vmem:[#allocation4 + $0x58] sm:$0xff] %vm1189, %v1116
      %1202 = vst.msk [vmem:[#allocation4 + $0x60] sm:$0xff] %vm1189, %v1118
      %1203 = vst.msk [vmem:[#allocation4 + $0x68] sm:$0xff] %vm1189, %v1120
      %1204 = vst.msk [vmem:[#allocation4 + $0x70] sm:$0xff] %vm1189, %v1122
      %1205 = vst.msk [vmem:[#allocation4 + $0x78] sm:$0xff] %vm1189, %v1124
      %1206 = vst.msk [vmem:[#allocation4 + $0x80] sm:$0xff] %vm1189, %v1126
      %1207 = vst.msk [vmem:[#allocation4 + $0x88] sm:$0xff] %vm1189, %v1128
      %1208 = vst.msk [vmem:[#allocation4 + $0x90] sm:$0xff] %vm1189, %v1130
      %1209 = vst.msk [vmem:[#allocation4 + $0x98] sm:$0xff] %vm1189, %v1132
      %1210 = vst.msk [vmem:[#allocation4 + $0xa0] sm:$0xff] %vm1189, %v1134
      %1211 = vst.msk [vmem:[#allocation4 + $0xa8] sm:$0xff] %vm1189, %v1136
      %1212 = vst.msk [vmem:[#allocation4 + $0xb0] sm:$0xff] %vm1189, %v1138
      %1213 = vst.msk [vmem:[#allocation4 + $0xb8] sm:$0xff] %vm1189, %v1140
      %1214 = vst.msk [vmem:[#allocation4 + $0xc0] sm:$0xff] %vm1189, %v1142
      %1215 = vst.msk [vmem:[#allocation4 + $0xc8] sm:$0xff] %vm1189, %v1144
      %1216 = vst.msk [vmem:[#allocation4 + $0xd0] sm:$0xff] %vm1189, %v1146
      %1217 = vst.msk [vmem:[#allocation4 + $0xd8] sm:$0xff] %vm1189, %v1148
      %1218 = vst.msk [vmem:[#allocation4 + $0xe0] sm:$0xff] %vm1189, %v1150
      %1219 = vst.msk [vmem:[#allocation4 + $0xe8] sm:$0xff] %vm1189, %v1152
      %1220 = vst.msk [vmem:[#allocation4 + $0xf0] sm:$0xff] %vm1189, %v1154
      %1221 = vst.msk [vmem:[#allocation4 + $0xf8] sm:$0xff] %vm1189, %v1156
      %v1222 = vld [vmem:[%s353 + $0x2] sm:$0xff]
      %v1223 = vld [vmem:[%s353 + $0xa] sm:$0xff]
      %v1224 = vld [vmem:[%s353 + $0x1a] sm:$0xff]
      %v1225 = vld [vmem:[%s353 + $0x22] sm:$0xff]
      %v1226 = vld [vmem:[%s353 + $0x32] sm:$0xff]
      %v1227 = vld [vmem:[%s353 + $0x3a] sm:$0xff]
      %v1228 = vld [vmem:[%s353 + $0x4a] sm:$0xff]
      %v1229 = vld [vmem:[%s353 + $0x52] sm:$0xff]
      %v1230 = vld [vmem:[%s353 + $0x62] sm:$0xff]
      %v1231 = vld [vmem:[%s353 + $0x6a] sm:$0xff]
      %v1232 = vld [vmem:[%s353 + $0x7a] sm:$0xff]
      %v1233 = vld [vmem:[%s353 + $0x82] sm:$0xff]
      %v1234 = vld [vmem:[%s353 + $0x92] sm:$0xff]
      %v1235 = vld [vmem:[%s353 + $0x9a] sm:$0xff]
      %v1236 = vld [vmem:[%s353 + $0xaa] sm:$0xff]
      %v1237 = vld [vmem:[%s353 + $0xb2] sm:$0xff]
      %v1238 = vld [vmem:[%s353 + $0xc2] sm:$0xff]
      %v1239 = vld [vmem:[%s353 + $0xca] sm:$0xff]
      %v1240 = vld [vmem:[%s353 + $0xda] sm:$0xff]
      %v1241 = vld [vmem:[%s353 + $0xe2] sm:$0xff]
      %v1242 = vld [vmem:[%s353 + $0xf2] sm:$0xff]
      %v1243 = vld [vmem:[%s353 + $0xfa] sm:$0xff]
      %v1244 = vld [vmem:[%s353 + $0x10a] sm:$0xff]
      %v1245 = vld [vmem:[%s353 + $0x112] sm:$0xff]
      %v1246 = vld [vmem:[%s353 + $0x122] sm:$0xff]
      %v1247 = vld [vmem:[%s353 + $0x12a] sm:$0xff]
      %v1248 = vld [vmem:[%s353 + $0x13a] sm:$0xff]
      %v1249 = vld [vmem:[%s353 + $0x142] sm:$0xff]
      %v1250 = vld [vmem:[%s353 + $0x152] sm:$0xff]
      %v1251 = vld [vmem:[%s353 + $0x15a] sm:$0xff]
      %v1252 = vld [vmem:[%s353 + $0x16a] sm:$0xff]
      %v1253 = vld [vmem:[%s353 + $0x172] sm:$0xff]
      %1286 = vrot.lane.b32.xlu0 %v1222, 20
      %v1287 = vpop.permute.xlu0 %1286
      %1288 = vrot.lane.b32.xlu0 %v1223, 20
      %v1289 = vpop.permute.xlu0 %1288
      %1290 = vrot.lane.b32.xlu0 %v1224, 20
      %v1291 = vpop.permute.xlu0 %1290
      %1292 = vrot.lane.b32.xlu0 %v1225, 20
      %v1293 = vpop.permute.xlu0 %1292
      %1294 = vrot.lane.b32.xlu0 %v1226, 20
      %v1295 = vpop.permute.xlu0 %1294
      %1296 = vrot.lane.b32.xlu0 %v1227, 20
      %v1297 = vpop.permute.xlu0 %1296
      %1298 = vrot.lane.b32.xlu0 %v1228, 20
      %v1299 = vpop.permute.xlu0 %1298
      %1300 = vrot.lane.b32.xlu0 %v1229, 20
      %v1301 = vpop.permute.xlu0 %1300
      %1302 = vrot.lane.b32.xlu0 %v1230, 20
      %v1303 = vpop.permute.xlu0 %1302
      %1304 = vrot.lane.b32.xlu0 %v1231, 20
      %v1305 = vpop.permute.xlu0 %1304
      %1306 = vrot.lane.b32.xlu0 %v1232, 20
      %v1307 = vpop.permute.xlu0 %1306
      %1308 = vrot.lane.b32.xlu0 %v1233, 20
      %v1309 = vpop.permute.xlu0 %1308
      %1310 = vrot.lane.b32.xlu0 %v1234, 20
      %v1311 = vpop.permute.xlu0 %1310
      %1312 = vrot.lane.b32.xlu0 %v1235, 20
      %v1313 = vpop.permute.xlu0 %1312
      %1314 = vrot.lane.b32.xlu0 %v1236, 20
      %v1315 = vpop.permute.xlu0 %1314
      %1316 = vrot.lane.b32.xlu0 %v1237, 20
      %v1317 = vpop.permute.xlu0 %1316
      %1318 = vrot.lane.b32.xlu0 %v1238, 20
      %v1319 = vpop.permute.xlu0 %1318
      %1320 = vrot.lane.b32.xlu0 %v1239, 20
      %v1321 = vpop.permute.xlu0 %1320
      %1322 = vrot.lane.b32.xlu0 %v1240, 20
      %v1323 = vpop.permute.xlu0 %1322
      %1324 = vrot.lane.b32.xlu0 %v1241, 20
      %v1325 = vpop.permute.xlu0 %1324
      %1326 = vrot.lane.b32.xlu0 %v1242, 20
      %v1327 = vpop.permute.xlu0 %1326
      %1328 = vrot.lane.b32.xlu0 %v1243, 20
      %v1329 = vpop.permute.xlu0 %1328
      %1330 = vrot.lane.b32.xlu0 %v1244, 20
      %v1331 = vpop.permute.xlu0 %1330
      %1332 = vrot.lane.b32.xlu0 %v1245, 20
      %v1333 = vpop.permute.xlu0 %1332
      %1334 = vrot.lane.b32.xlu0 %v1246, 20
      %v1335 = vpop.permute.xlu0 %1334
      %1336 = vrot.lane.b32.xlu0 %v1247, 20
      %v1337 = vpop.permute.xlu0 %1336
      %1338 = vrot.lane.b32.xlu0 %v1248, 20
      %v1339 = vpop.permute.xlu0 %1338
      %1340 = vrot.lane.b32.xlu0 %v1249, 20
      %v1341 = vpop.permute.xlu0 %1340
      %1342 = vrot.lane.b32.xlu0 %v1250, 20
      %v1343 = vpop.permute.xlu0 %1342
      %1344 = vrot.lane.b32.xlu0 %v1251, 20
      %v1345 = vpop.permute.xlu0 %1344
      %1346 = vrot.lane.b32.xlu0 %v1252, 20
      %v1347 = vpop.permute.xlu0 %1346
      %1348 = vrot.lane.b32.xlu0 %v1253, 20
      %v1349 = vpop.permute.xlu0 %1348
      %vm1382 = vcmask 195744
      %1383 = vst.msk [vmem:[#allocation4] sm:$0xff] %vm1382, %v1287
      %1384 = vst.msk [vmem:[#allocation4 + $0x8] sm:$0xff] %vm1382, %v1289
      %1385 = vst.msk [vmem:[#allocation4 + $0x10] sm:$0xff] %vm1382, %v1291
      %1386 = vst.msk [vmem:[#allocation4 + $0x18] sm:$0xff] %vm1382, %v1293
      %1387 = vst.msk [vmem:[#allocation4 + $0x20] sm:$0xff] %vm1382, %v1295
      %1388 = vst.msk [vmem:[#allocation4 + $0x28] sm:$0xff] %vm1382, %v1297
      %1389 = vst.msk [vmem:[#allocation4 + $0x30] sm:$0xff] %vm1382, %v1299
      %1390 = vst.msk [vmem:[#allocation4 + $0x38] sm:$0xff] %vm1382, %v1301
      %1391 = vst.msk [vmem:[#allocation4 + $0x40] sm:$0xff] %vm1382, %v1303
      %1392 = vst.msk [vmem:[#allocation4 + $0x48] sm:$0xff] %vm1382, %v1305
      %1393 = vst.msk [vmem:[#allocation4 + $0x50] sm:$0xff] %vm1382, %v1307
      %1394 = vst.msk [vmem:[#allocation4 + $0x58] sm:$0xff] %vm1382, %v1309
      %1395 = vst.msk [vmem:[#allocation4 + $0x60] sm:$0xff] %vm1382, %v1311
      %1396 = vst.msk [vmem:[#allocation4 + $0x68] sm:$0xff] %vm1382, %v1313
      %1397 = vst.msk [vmem:[#allocation4 + $0x70] sm:$0xff] %vm1382, %v1315
      %1398 = vst.msk [vmem:[#allocation4 + $0x78] sm:$0xff] %vm1382, %v1317
      %1399 = vst.msk [vmem:[#allocation4 + $0x80] sm:$0xff] %vm1382, %v1319
      %1400 = vst.msk [vmem:[#allocation4 + $0x88] sm:$0xff] %vm1382, %v1321
      %1401 = vst.msk [vmem:[#allocation4 + $0x90] sm:$0xff] %vm1382, %v1323
      %1402 = vst.msk [vmem:[#allocation4 + $0x98] sm:$0xff] %vm1382, %v1325
      %1403 = vst.msk [vmem:[#allocation4 + $0xa0] sm:$0xff] %vm1382, %v1327
      %1404 = vst.msk [vmem:[#allocation4 + $0xa8] sm:$0xff] %vm1382, %v1329
      %1405 = vst.msk [vmem:[#allocation4 + $0xb0] sm:$0xff] %vm1382, %v1331
      %1406 = vst.msk [vmem:[#allocation4 + $0xb8] sm:$0xff] %vm1382, %v1333
      %1407 = vst.msk [vmem:[#allocation4 + $0xc0] sm:$0xff] %vm1382, %v1335
      %1408 = vst.msk [vmem:[#allocation4 + $0xc8] sm:$0xff] %vm1382, %v1337
      %1409 = vst.msk [vmem:[#allocation4 + $0xd0] sm:$0xff] %vm1382, %v1339
      %1410 = vst.msk [vmem:[#allocation4 + $0xd8] sm:$0xff] %vm1382, %v1341
      %1411 = vst.msk [vmem:[#allocation4 + $0xe0] sm:$0xff] %vm1382, %v1343
      %1412 = vst.msk [vmem:[#allocation4 + $0xe8] sm:$0xff] %vm1382, %v1345
      %1413 = vst.msk [vmem:[#allocation4 + $0xf0] sm:$0xff] %vm1382, %v1347
      %1414 = vst.msk [vmem:[#allocation4 + $0xf8] sm:$0xff] %vm1382, %v1349
      %s1415 = scalar_lea.vmem [#allocation2], 48
      %v1416 = vld [vmem:[%s1415] sm:$0xff]
      %v1417 = vld [vmem:[%s1415 + $0x8] sm:$0xff]
      %v1418 = vld [vmem:[%s1415 + $0x18] sm:$0xff]
      %v1419 = vld [vmem:[%s1415 + $0x20] sm:$0xff]
      %v1420 = vld [vmem:[%s1415 + $0x30] sm:$0xff]
      %v1421 = vld [vmem:[%s1415 + $0x38] sm:$0xff]
      %v1422 = vld [vmem:[%s1415 + $0x48] sm:$0xff]
      %v1423 = vld [vmem:[%s1415 + $0x50] sm:$0xff]
      %v1424 = vld [vmem:[%s1415 + $0x60] sm:$0xff]
      %v1425 = vld [vmem:[%s1415 + $0x68] sm:$0xff]
      %v1426 = vld [vmem:[%s1415 + $0x78] sm:$0xff]
      %v1427 = vld [vmem:[%s1415 + $0x80] sm:$0xff]
      %v1428 = vld [vmem:[%s1415 + $0x90] sm:$0xff]
      %v1429 = vld [vmem:[%s1415 + $0x98] sm:$0xff]
      %v1430 = vld [vmem:[%s1415 + $0xa8] sm:$0xff]
      %v1431 = vld [vmem:[%s1415 + $0xb0] sm:$0xff]
      %v1432 = vld [vmem:[%s1415 + $0xc0] sm:$0xff]
      %v1433 = vld [vmem:[%s1415 + $0xc8] sm:$0xff]
      %v1434 = vld [vmem:[%s1415 + $0xd8] sm:$0xff]
      %v1435 = vld [vmem:[%s1415 + $0xe0] sm:$0xff]
      %v1436 = vld [vmem:[%s1415 + $0xf0] sm:$0xff]
      %v1437 = vld [vmem:[%s1415 + $0xf8] sm:$0xff]
      %v1438 = vld [vmem:[%s1415 + $0x108] sm:$0xff]
      %v1439 = vld [vmem:[%s1415 + $0x110] sm:$0xff]
      %v1440 = vld [vmem:[%s1415 + $0x120] sm:$0xff]
      %v1441 = vld [vmem:[%s1415 + $0x128] sm:$0xff]
      %v1442 = vld [vmem:[%s1415 + $0x138] sm:$0xff]
      %v1443 = vld [vmem:[%s1415 + $0x140] sm:$0xff]
      %v1444 = vld [vmem:[%s1415 + $0x150] sm:$0xff]
      %v1445 = vld [vmem:[%s1415 + $0x158] sm:$0xff]
      %v1446 = vld [vmem:[%s1415 + $0x168] sm:$0xff]
      %v1447 = vld [vmem:[%s1415 + $0x170] sm:$0xff]
      %1480 = vrot.lane.b32.xlu0 %v1416, 24
      %v1481 = vpop.permute.xlu0 %1480
      %1482 = vrot.lane.b32.xlu0 %v1417, 24
      %v1483 = vpop.permute.xlu0 %1482
      %1484 = vrot.lane.b32.xlu0 %v1418, 24
      %v1485 = vpop.permute.xlu0 %1484
      %1486 = vrot.lane.b32.xlu0 %v1419, 24
      %v1487 = vpop.permute.xlu0 %1486
      %1488 = vrot.lane.b32.xlu0 %v1420, 24
      %v1489 = vpop.permute.xlu0 %1488
      %1490 = vrot.lane.b32.xlu0 %v1421, 24
      %v1491 = vpop.permute.xlu0 %1490
      %1492 = vrot.lane.b32.xlu0 %v1422, 24
      %v1493 = vpop.permute.xlu0 %1492
      %1494 = vrot.lane.b32.xlu0 %v1423, 24
      %v1495 = vpop.permute.xlu0 %1494
      %1496 = vrot.lane.b32.xlu0 %v1424, 24
      %v1497 = vpop.permute.xlu0 %1496
      %1498 = vrot.lane.b32.xlu0 %v1425, 24
      %v1499 = vpop.permute.xlu0 %1498
      %1500 = vrot.lane.b32.xlu0 %v1426, 24
      %v1501 = vpop.permute.xlu0 %1500
      %1502 = vrot.lane.b32.xlu0 %v1427, 24
      %v1503 = vpop.permute.xlu0 %1502
      %1504 = vrot.lane.b32.xlu0 %v1428, 24
      %v1505 = vpop.permute.xlu0 %1504
      %1506 = vrot.lane.b32.xlu0 %v1429, 24
      %v1507 = vpop.permute.xlu0 %1506
      %1508 = vrot.lane.b32.xlu0 %v1430, 24
      %v1509 = vpop.permute.xlu0 %1508
      %1510 = vrot.lane.b32.xlu0 %v1431, 24
      %v1511 = vpop.permute.xlu0 %1510
      %1512 = vrot.lane.b32.xlu0 %v1432, 24
      %v1513 = vpop.permute.xlu0 %1512
      %1514 = vrot.lane.b32.xlu0 %v1433, 24
      %v1515 = vpop.permute.xlu0 %1514
      %1516 = vrot.lane.b32.xlu0 %v1434, 24
      %v1517 = vpop.permute.xlu0 %1516
      %1518 = vrot.lane.b32.xlu0 %v1435, 24
      %v1519 = vpop.permute.xlu0 %1518
      %1520 = vrot.lane.b32.xlu0 %v1436, 24
      %v1521 = vpop.permute.xlu0 %1520
      %1522 = vrot.lane.b32.xlu0 %v1437, 24
      %v1523 = vpop.permute.xlu0 %1522
      %1524 = vrot.lane.b32.xlu0 %v1438, 24
      %v1525 = vpop.permute.xlu0 %1524
      %1526 = vrot.lane.b32.xlu0 %v1439, 24
      %v1527 = vpop.permute.xlu0 %1526
      %1528 = vrot.lane.b32.xlu0 %v1440, 24
      %v1529 = vpop.permute.xlu0 %1528
      %1530 = vrot.lane.b32.xlu0 %v1441, 24
      %v1531 = vpop.permute.xlu0 %1530
      %1532 = vrot.lane.b32.xlu0 %v1442, 24
      %v1533 = vpop.permute.xlu0 %1532
      %1534 = vrot.lane.b32.xlu0 %v1443, 24
      %v1535 = vpop.permute.xlu0 %1534
      %1536 = vrot.lane.b32.xlu0 %v1444, 24
      %v1537 = vpop.permute.xlu0 %1536
      %1538 = vrot.lane.b32.xlu0 %v1445, 24
      %v1539 = vpop.permute.xlu0 %1538
      %1540 = vrot.lane.b32.xlu0 %v1446, 24
      %v1541 = vpop.permute.xlu0 %1540
      %1542 = vrot.lane.b32.xlu0 %v1447, 24
      %v1543 = vpop.permute.xlu0 %1542
      %vm1576 = vcmask 228544
      %1577 = vst.msk [vmem:[#allocation4] sm:$0xff] %vm1576, %v1481
      %1578 = vst.msk [vmem:[#allocation4 + $0x8] sm:$0xff] %vm1576, %v1483
      %1579 = vst.msk [vmem:[#allocation4 + $0x10] sm:$0xff] %vm1576, %v1485
      %1580 = vst.msk [vmem:[#allocation4 + $0x18] sm:$0xff] %vm1576, %v1487
      %1581 = vst.msk [vmem:[#allocation4 + $0x20] sm:$0xff] %vm1576, %v1489
      %1582 = vst.msk [vmem:[#allocation4 + $0x28] sm:$0xff] %vm1576, %v1491
      %1583 = vst.msk [vmem:[#allocation4 + $0x30] sm:$0xff] %vm1576, %v1493
      %1584 = vst.msk [vmem:[#allocation4 + $0x38] sm:$0xff] %vm1576, %v1495
      %1585 = vst.msk [vmem:[#allocation4 + $0x40] sm:$0xff] %vm1576, %v1497
      %1586 = vst.msk [vmem:[#allocation4 + $0x48] sm:$0xff] %vm1576, %v1499
      %1587 = vst.msk [vmem:[#allocation4 + $0x50] sm:$0xff] %vm1576, %v1501
      %1588 = vst.msk [vmem:[#allocation4 + $0x58] sm:$0xff] %vm1576, %v1503
      %1589 = vst.msk [vmem:[#allocation4 + $0x60] sm:$0xff] %vm1576, %v1505
      %1590 = vst.msk [vmem:[#allocation4 + $0x68] sm:$0xff] %vm1576, %v1507
      %1591 = vst.msk [vmem:[#allocation4 + $0x70] sm:$0xff] %vm1576, %v1509
      %1592 = vst.msk [vmem:[#allocation4 + $0x78] sm:$0xff] %vm1576, %v1511
      %1593 = vst.msk [vmem:[#allocation4 + $0x80] sm:$0xff] %vm1576, %v1513
      %1594 = vst.msk [vmem:[#allocation4 + $0x88] sm:$0xff] %vm1576, %v1515
      %1595 = vst.msk [vmem:[#allocation4 + $0x90] sm:$0xff] %vm1576, %v1517
      %1596 = vst.msk [vmem:[#allocation4 + $0x98] sm:$0xff] %vm1576, %v1519
      %1597 = vst.msk [vmem:[#allocation4 + $0xa0] sm:$0xff] %vm1576, %v1521
      %1598 = vst.msk [vmem:[#allocation4 + $0xa8] sm:$0xff] %vm1576, %v1523
      %1599 = vst.msk [vmem:[#allocation4 + $0xb0] sm:$0xff] %vm1576, %v1525
      %1600 = vst.msk [vmem:[#allocation4 + $0xb8] sm:$0xff] %vm1576, %v1527
      %1601 = vst.msk [vmem:[#allocation4 + $0xc0] sm:$0xff] %vm1576, %v1529
      %1602 = vst.msk [vmem:[#allocation4 + $0xc8] sm:$0xff] %vm1576, %v1531
      %1603 = vst.msk [vmem:[#allocation4 + $0xd0] sm:$0xff] %vm1576, %v1533
      %1604 = vst.msk [vmem:[#allocation4 + $0xd8] sm:$0xff] %vm1576, %v1535
      %1605 = vst.msk [vmem:[#allocation4 + $0xe0] sm:$0xff] %vm1576, %v1537
      %1606 = vst.msk [vmem:[#allocation4 + $0xe8] sm:$0xff] %vm1576, %v1539
      %1607 = vst.msk [vmem:[#allocation4 + $0xf0] sm:$0xff] %vm1576, %v1541
      %1608 = vst.msk [vmem:[#allocation4 + $0xf8] sm:$0xff] %vm1576, %v1543
      %v1609 = vld [vmem:[%s1415 + $0x1] sm:$0xff]
      %v1610 = vld [vmem:[%s1415 + $0x9] sm:$0xff]
      %v1611 = vld [vmem:[%s1415 + $0x19] sm:$0xff]
      %v1612 = vld [vmem:[%s1415 + $0x21] sm:$0xff]
      %v1613 = vld [vmem:[%s1415 + $0x31] sm:$0xff]
      %v1614 = vld [vmem:[%s1415 + $0x39] sm:$0xff]
      %v1615 = vld [vmem:[%s1415 + $0x49] sm:$0xff]
      %v1616 = vld [vmem:[%s1415 + $0x51] sm:$0xff]
      %v1617 = vld [vmem:[%s1415 + $0x61] sm:$0xff]
      %v1618 = vld [vmem:[%s1415 + $0x69] sm:$0xff]
      %v1619 = vld [vmem:[%s1415 + $0x79] sm:$0xff]
      %v1620 = vld [vmem:[%s1415 + $0x81] sm:$0xff]
      %v1621 = vld [vmem:[%s1415 + $0x91] sm:$0xff]
      %v1622 = vld [vmem:[%s1415 + $0x99] sm:$0xff]
      %v1623 = vld [vmem:[%s1415 + $0xa9] sm:$0xff]
      %v1624 = vld [vmem:[%s1415 + $0xb1] sm:$0xff]
      %v1625 = vld [vmem:[%s1415 + $0xc1] sm:$0xff]
      %v1626 = vld [vmem:[%s1415 + $0xc9] sm:$0xff]
      %v1627 = vld [vmem:[%s1415 + $0xd9] sm:$0xff]
      %v1628 = vld [vmem:[%s1415 + $0xe1] sm:$0xff]
      %v1629 = vld [vmem:[%s1415 + $0xf1] sm:$0xff]
      %v1630 = vld [vmem:[%s1415 + $0xf9] sm:$0xff]
      %v1631 = vld [vmem:[%s1415 + $0x109] sm:$0xff]
      %v1632 = vld [vmem:[%s1415 + $0x111] sm:$0xff]
      %v1633 = vld [vmem:[%s1415 + $0x121] sm:$0xff]
      %v1634 = vld [vmem:[%s1415 + $0x129] sm:$0xff]
      %v1635 = vld [vmem:[%s1415 + $0x139] sm:$0xff]
      %v1636 = vld [vmem:[%s1415 + $0x141] sm:$0xff]
      %v1637 = vld [vmem:[%s1415 + $0x151] sm:$0xff]
      %v1638 = vld [vmem:[%s1415 + $0x159] sm:$0xff]
      %v1639 = vld [vmem:[%s1415 + $0x169] sm:$0xff]
      %v1640 = vld [vmem:[%s1415 + $0x171] sm:$0xff]
      %1673 = vrot.lane.b32.xlu0 %v1609, 28
      %v1674 = vpop.permute.xlu0 %1673
      %1675 = vrot.lane.b32.xlu0 %v1610, 28
      %v1676 = vpop.permute.xlu0 %1675
      %1677 = vrot.lane.b32.xlu0 %v1611, 28
      %v1678 = vpop.permute.xlu0 %1677
      %1679 = vrot.lane.b32.xlu0 %v1612, 28
      %v1680 = vpop.permute.xlu0 %1679
      %1681 = vrot.lane.b32.xlu0 %v1613, 28
      %v1682 = vpop.permute.xlu0 %1681
      %1683 = vrot.lane.b32.xlu0 %v1614, 28
      %v1684 = vpop.permute.xlu0 %1683
      %1685 = vrot.lane.b32.xlu0 %v1615, 28
      %v1686 = vpop.permute.xlu0 %1685
      %1687 = vrot.lane.b32.xlu0 %v1616, 28
      %v1688 = vpop.permute.xlu0 %1687
      %1689 = vrot.lane.b32.xlu0 %v1617, 28
      %v1690 = vpop.permute.xlu0 %1689
      %1691 = vrot.lane.b32.xlu0 %v1618, 28
      %v1692 = vpop.permute.xlu0 %1691
      %1693 = vrot.lane.b32.xlu0 %v1619, 28
      %v1694 = vpop.permute.xlu0 %1693
      %1695 = vrot.lane.b32.xlu0 %v1620, 28
      %v1696 = vpop.permute.xlu0 %1695
      %1697 = vrot.lane.b32.xlu0 %v1621, 28
      %v1698 = vpop.permute.xlu0 %1697
      %1699 = vrot.lane.b32.xlu0 %v1622, 28
      %v1700 = vpop.permute.xlu0 %1699
      %1701 = vrot.lane.b32.xlu0 %v1623, 28
      %v1702 = vpop.permute.xlu0 %1701
      %1703 = vrot.lane.b32.xlu0 %v1624, 28
      %v1704 = vpop.permute.xlu0 %1703
      %1705 = vrot.lane.b32.xlu0 %v1625, 28
      %v1706 = vpop.permute.xlu0 %1705
      %1707 = vrot.lane.b32.xlu0 %v1626, 28
      %v1708 = vpop.permute.xlu0 %1707
      %1709 = vrot.lane.b32.xlu0 %v1627, 28
      %v1710 = vpop.permute.xlu0 %1709
      %1711 = vrot.lane.b32.xlu0 %v1628, 28
      %v1712 = vpop.permute.xlu0 %1711
      %1713 = vrot.lane.b32.xlu0 %v1629, 28
      %v1714 = vpop.permute.xlu0 %1713
      %1715 = vrot.lane.b32.xlu0 %v1630, 28
      %v1716 = vpop.permute.xlu0 %1715
      %1717 = vrot.lane.b32.xlu0 %v1631, 28
      %v1718 = vpop.permute.xlu0 %1717
      %1719 = vrot.lane.b32.xlu0 %v1632, 28
      %v1720 = vpop.permute.xlu0 %1719
      %1721 = vrot.lane.b32.xlu0 %v1633, 28
      %v1722 = vpop.permute.xlu0 %1721
      %1723 = vrot.lane.b32.xlu0 %v1634, 28
      %v1724 = vpop.permute.xlu0 %1723
      %1725 = vrot.lane.b32.xlu0 %v1635, 28
      %v1726 = vpop.permute.xlu0 %1725
      %1727 = vrot.lane.b32.xlu0 %v1636, 28
      %v1728 = vpop.permute.xlu0 %1727
      %1729 = vrot.lane.b32.xlu0 %v1637, 28
      %v1730 = vpop.permute.xlu0 %1729
      %1731 = vrot.lane.b32.xlu0 %v1638, 28
      %v1732 = vpop.permute.xlu0 %1731
      %1733 = vrot.lane.b32.xlu0 %v1639, 28
      %v1734 = vpop.permute.xlu0 %1733
      %1735 = vrot.lane.b32.xlu0 %v1640, 28
      %v1736 = vpop.permute.xlu0 %1735
      %vm1769 = vcmask 261344
      %1770 = vst.msk [vmem:[#allocation4] sm:$0xff] %vm1769, %v1674
      %1771 = vst.msk [vmem:[#allocation4 + $0x8] sm:$0xff] %vm1769, %v1676
      %1772 = vst.msk [vmem:[#allocation4 + $0x10] sm:$0xff] %vm1769, %v1678
      %1773 = vst.msk [vmem:[#allocation4 + $0x18] sm:$0xff] %vm1769, %v1680
      %1774 = vst.msk [vmem:[#allocation4 + $0x20] sm:$0xff] %vm1769, %v1682
      %1775 = vst.msk [vmem:[#allocation4 + $0x28] sm:$0xff] %vm1769, %v1684
      %1776 = vst.msk [vmem:[#allocation4 + $0x30] sm:$0xff] %vm1769, %v1686
      %1777 = vst.msk [vmem:[#allocation4 + $0x38] sm:$0xff] %vm1769, %v1688
      %1778 = vst.msk [vmem:[#allocation4 + $0x40] sm:$0xff] %vm1769, %v1690
      %1779 = vst.msk [vmem:[#allocation4 + $0x48] sm:$0xff] %vm1769, %v1692
      %1780 = vst.msk [vmem:[#allocation4 + $0x50] sm:$0xff] %vm1769, %v1694
      %1781 = vst.msk [vmem:[#allocation4 + $0x58] sm:$0xff] %vm1769, %v1696
      %1782 = vst.msk [vmem:[#allocation4 + $0x60] sm:$0xff] %vm1769, %v1698
      %1783 = vst.msk [vmem:[#allocation4 + $0x68] sm:$0xff] %vm1769, %v1700
      %1784 = vst.msk [vmem:[#allocation4 + $0x70] sm:$0xff] %vm1769, %v1702
      %1785 = vst.msk [vmem:[#allocation4 + $0x78] sm:$0xff] %vm1769, %v1704
      %1786 = vst.msk [vmem:[#allocation4 + $0x80] sm:$0xff] %vm1769, %v1706
      %1787 = vst.msk [vmem:[#allocation4 + $0x88] sm:$0xff] %vm1769, %v1708
      %1788 = vst.msk [vmem:[#allocation4 + $0x90] sm:$0xff] %vm1769, %v1710
      %1789 = vst.msk [vmem:[#allocation4 + $0x98] sm:$0xff] %vm1769, %v1712
      %1790 = vst.msk [vmem:[#allocation4 + $0xa0] sm:$0xff] %vm1769, %v1714
      %1791 = vst.msk [vmem:[#allocation4 + $0xa8] sm:$0xff] %vm1769, %v1716
      %1792 = vst.msk [vmem:[#allocation4 + $0xb0] sm:$0xff] %vm1769, %v1718
      %1793 = vst.msk [vmem:[#allocation4 + $0xb8] sm:$0xff] %vm1769, %v1720
      %1794 = vst.msk [vmem:[#allocation4 + $0xc0] sm:$0xff] %vm1769, %v1722
      %1795 = vst.msk [vmem:[#allocation4 + $0xc8] sm:$0xff] %vm1769, %v1724
      %1796 = vst.msk [vmem:[#allocation4 + $0xd0] sm:$0xff] %vm1769, %v1726
      %1797 = vst.msk [vmem:[#allocation4 + $0xd8] sm:$0xff] %vm1769, %v1728
      %1798 = vst.msk [vmem:[#allocation4 + $0xe0] sm:$0xff] %vm1769, %v1730
      %1799 = vst.msk [vmem:[#allocation4 + $0xe8] sm:$0xff] %vm1769, %v1732
      %1800 = vst.msk [vmem:[#allocation4 + $0xf0] sm:$0xff] %vm1769, %v1734
      %1801 = vst.msk [vmem:[#allocation4 + $0xf8] sm:$0xff] %vm1769, %v1736
      %v1802 = vld [vmem:[%s1415 + $0x2] sm:$0xff]
      %v1803 = vld [vmem:[%s1415 + $0xa] sm:$0xff]
      %v1804 = vld [vmem:[%s1415 + $0x1a] sm:$0xff]
      %v1805 = vld [vmem:[%s1415 + $0x22] sm:$0xff]
      %v1806 = vld [vmem:[%s1415 + $0x32] sm:$0xff]
      %v1807 = vld [vmem:[%s1415 + $0x3a] sm:$0xff]
      %v1808 = vld [vmem:[%s1415 + $0x4a] sm:$0xff]
      %v1809 = vld [vmem:[%s1415 + $0x52] sm:$0xff]
      %v1810 = vld [vmem:[%s1415 + $0x62] sm:$0xff]
      %v1811 = vld [vmem:[%s1415 + $0x6a] sm:$0xff]
      %v1812 = vld [vmem:[%s1415 + $0x7a] sm:$0xff]
      %v1813 = vld [vmem:[%s1415 + $0x82] sm:$0xff]
      %v1814 = vld [vmem:[%s1415 + $0x92] sm:$0xff]
      %v1815 = vld [vmem:[%s1415 + $0x9a] sm:$0xff]
      %v1816 = vld [vmem:[%s1415 + $0xaa] sm:$0xff]
      %v1817 = vld [vmem:[%s1415 + $0xb2] sm:$0xff]
      %v1818 = vld [vmem:[%s1415 + $0xc2] sm:$0xff]
      %v1819 = vld [vmem:[%s1415 + $0xca] sm:$0xff]
      %v1820 = vld [vmem:[%s1415 + $0xda] sm:$0xff]
      %v1821 = vld [vmem:[%s1415 + $0xe2] sm:$0xff]
      %v1822 = vld [vmem:[%s1415 + $0xf2] sm:$0xff]
      %v1823 = vld [vmem:[%s1415 + $0xfa] sm:$0xff]
      %v1824 = vld [vmem:[%s1415 + $0x10a] sm:$0xff]
      %v1825 = vld [vmem:[%s1415 + $0x112] sm:$0xff]
      %v1826 = vld [vmem:[%s1415 + $0x122] sm:$0xff]
      %v1827 = vld [vmem:[%s1415 + $0x12a] sm:$0xff]
      %v1828 = vld [vmem:[%s1415 + $0x13a] sm:$0xff]
      %v1829 = vld [vmem:[%s1415 + $0x142] sm:$0xff]
      %v1830 = vld [vmem:[%s1415 + $0x152] sm:$0xff]
      %v1831 = vld [vmem:[%s1415 + $0x15a] sm:$0xff]
      %v1832 = vld [vmem:[%s1415 + $0x16a] sm:$0xff]
      %v1833 = vld [vmem:[%s1415 + $0x172] sm:$0xff]
      %1866 = vrot.lane.b32.xlu0 %v1802, 32
      %v1867 = vpop.permute.xlu0 %1866
      %1868 = vrot.lane.b32.xlu0 %v1803, 32
      %v1869 = vpop.permute.xlu0 %1868
      %1870 = vrot.lane.b32.xlu0 %v1804, 32
      %v1871 = vpop.permute.xlu0 %1870
      %1872 = vrot.lane.b32.xlu0 %v1805, 32
      %v1873 = vpop.permute.xlu0 %1872
      %1874 = vrot.lane.b32.xlu0 %v1806, 32
      %v1875 = vpop.permute.xlu0 %1874
      %1876 = vrot.lane.b32.xlu0 %v1807, 32
      %v1877 = vpop.permute.xlu0 %1876
      %1878 = vrot.lane.b32.xlu0 %v1808, 32
      %v1879 = vpop.permute.xlu0 %1878
      %1880 = vrot.lane.b32.xlu0 %v1809, 32
      %v1881 = vpop.permute.xlu0 %1880
      %1882 = vrot.lane.b32.xlu0 %v1810, 32
      %v1883 = vpop.permute.xlu0 %1882
      %1884 = vrot.lane.b32.xlu0 %v1811, 32
      %v1885 = vpop.permute.xlu0 %1884
      %1886 = vrot.lane.b32.xlu0 %v1812, 32
      %v1887 = vpop.permute.xlu0 %1886
      %1888 = vrot.lane.b32.xlu0 %v1813, 32
      %v1889 = vpop.permute.xlu0 %1888
      %1890 = vrot.lane.b32.xlu0 %v1814, 32
      %v1891 = vpop.permute.xlu0 %1890
      %1892 = vrot.lane.b32.xlu0 %v1815, 32
      %v1893 = vpop.permute.xlu0 %1892
      %1894 = vrot.lane.b32.xlu0 %v1816, 32
      %v1895 = vpop.permute.xlu0 %1894
      %1896 = vrot.lane.b32.xlu0 %v1817, 32
      %v1897 = vpop.permute.xlu0 %1896
      %1898 = vrot.lane.b32.xlu0 %v1818, 32
      %v1899 = vpop.permute.xlu0 %1898
      %1900 = vrot.lane.b32.xlu0 %v1819, 32
      %v1901 = vpop.permute.xlu0 %1900
      %1902 = vrot.lane.b32.xlu0 %v1820, 32
      %v1903 = vpop.permute.xlu0 %1902
      %1904 = vrot.lane.b32.xlu0 %v1821, 32
      %v1905 = vpop.permute.xlu0 %1904
      %1906 = vrot.lane.b32.xlu0 %v1822, 32
      %v1907 = vpop.permute.xlu0 %1906
      %1908 = vrot.lane.b32.xlu0 %v1823, 32
      %v1909 = vpop.permute.xlu0 %1908
      %1910 = vrot.lane.b32.xlu0 %v1824, 32
      %v1911 = vpop.permute.xlu0 %1910
      %1912 = vrot.lane.b32.xlu0 %v1825, 32
      %v1913 = vpop.permute.xlu0 %1912
      %1914 = vrot.lane.b32.xlu0 %v1826, 32
      %v1915 = vpop.permute.xlu0 %1914
      %1916 = vrot.lane.b32.xlu0 %v1827, 32
      %v1917 = vpop.permute.xlu0 %1916
      %1918 = vrot.lane.b32.xlu0 %v1828, 32
      %v1919 = vpop.permute.xlu0 %1918
      %1920 = vrot.lane.b32.xlu0 %v1829, 32
      %v1921 = vpop.permute.xlu0 %1920
      %1922 = vrot.lane.b32.xlu0 %v1830, 32
      %v1923 = vpop.permute.xlu0 %1922
      %1924 = vrot.lane.b32.xlu0 %v1831, 32
      %v1925 = vpop.permute.xlu0 %1924
      %1926 = vrot.lane.b32.xlu0 %v1832, 32
      %v1927 = vpop.permute.xlu0 %1926
      %1928 = vrot.lane.b32.xlu0 %v1833, 32
      %v1929 = vpop.permute.xlu0 %1928
      %vm1962 = vcmask 294144
      %1963 = vst.msk [vmem:[#allocation4] sm:$0xff] %vm1962, %v1867
      %1964 = vst.msk [vmem:[#allocation4 + $0x8] sm:$0xff] %vm1962, %v1869
      %1965 = vst.msk [vmem:[#allocation4 + $0x10] sm:$0xff] %vm1962, %v1871
      %1966 = vst.msk [vmem:[#allocation4 + $0x18] sm:$0xff] %vm1962, %v1873
      %1967 = vst.msk [vmem:[#allocation4 + $0x20] sm:$0xff] %vm1962, %v1875
      %1968 = vst.msk [vmem:[#allocation4 + $0x28] sm:$0xff] %vm1962, %v1877
      %1969 = vst.msk [vmem:[#allocation4 + $0x30] sm:$0xff] %vm1962, %v1879
      %1970 = vst.msk [vmem:[#allocation4 + $0x38] sm:$0xff] %vm1962, %v1881
      %1971 = vst.msk [vmem:[#allocation4 + $0x40] sm:$0xff] %vm1962, %v1883
      %1972 = vst.msk [vmem:[#allocation4 + $0x48] sm:$0xff] %vm1962, %v1885
      %1973 = vst.msk [vmem:[#allocation4 + $0x50] sm:$0xff] %vm1962, %v1887
      %1974 = vst.msk [vmem:[#allocation4 + $0x58] sm:$0xff] %vm1962, %v1889
      %1975 = vst.msk [vmem:[#allocation4 + $0x60] sm:$0xff] %vm1962, %v1891
      %1976 = vst.msk [vmem:[#allocation4 + $0x68] sm:$0xff] %vm1962, %v1893
      %1977 = vst.msk [vmem:[#allocation4 + $0x70] sm:$0xff] %vm1962, %v1895
      %1978 = vst.msk [vmem:[#allocation4 + $0x78] sm:$0xff] %vm1962, %v1897
      %1979 = vst.msk [vmem:[#allocation4 + $0x80] sm:$0xff] %vm1962, %v1899
      %1980 = vst.msk [vmem:[#allocation4 + $0x88] sm:$0xff] %vm1962, %v1901
      %1981 = vst.msk [vmem:[#allocation4 + $0x90] sm:$0xff] %vm1962, %v1903
      %1982 = vst.msk [vmem:[#allocation4 + $0x98] sm:$0xff] %vm1962, %v1905
      %1983 = vst.msk [vmem:[#allocation4 + $0xa0] sm:$0xff] %vm1962, %v1907
      %1984 = vst.msk [vmem:[#allocation4 + $0xa8] sm:$0xff] %vm1962, %v1909
      %1985 = vst.msk [vmem:[#allocation4 + $0xb0] sm:$0xff] %vm1962, %v1911
      %1986 = vst.msk [vmem:[#allocation4 + $0xb8] sm:$0xff] %vm1962, %v1913
      %1987 = vst.msk [vmem:[#allocation4 + $0xc0] sm:$0xff] %vm1962, %v1915
      %1988 = vst.msk [vmem:[#allocation4 + $0xc8] sm:$0xff] %vm1962, %v1917
      %1989 = vst.msk [vmem:[#allocation4 + $0xd0] sm:$0xff] %vm1962, %v1919
      %1990 = vst.msk [vmem:[#allocation4 + $0xd8] sm:$0xff] %vm1962, %v1921
      %1991 = vst.msk [vmem:[#allocation4 + $0xe0] sm:$0xff] %vm1962, %v1923
      %1992 = vst.msk [vmem:[#allocation4 + $0xe8] sm:$0xff] %vm1962, %v1925
      %1993 = vst.msk [vmem:[#allocation4 + $0xf0] sm:$0xff] %vm1962, %v1927
      %1994 = vst.msk [vmem:[#allocation4 + $0xf8] sm:$0xff] %vm1962, %v1929
      %v1995 = vld [vmem:[#allocation4] sm:$0xff]
      %v1996 = vld [vmem:[#allocation4 + $0x8] sm:$0xff]
      %v1997 = vld [vmem:[#allocation4 + $0x10] sm:$0xff]
      %v1998 = vld [vmem:[#allocation4 + $0x18] sm:$0xff]
      %v1999 = vld [vmem:[#allocation4 + $0x20] sm:$0xff]
      %v2000 = vld [vmem:[#allocation4 + $0x28] sm:$0xff]
      %v2001 = vld [vmem:[#allocation4 + $0x30] sm:$0xff]
      %v2002 = vld [vmem:[#allocation4 + $0x38] sm:$0xff]
      %v2003 = vld [vmem:[#allocation4 + $0x40] sm:$0xff]
      %v2004 = vld [vmem:[#allocation4 + $0x48] sm:$0xff]
      %v2005 = vld [vmem:[#allocation4 + $0x50] sm:$0xff]
      %v2006 = vld [vmem:[#allocation4 + $0x58] sm:$0xff]
      %v2007 = vld [vmem:[#allocation4 + $0x60] sm:$0xff]
      %v2008 = vld [vmem:[#allocation4 + $0x68] sm:$0xff]
      %v2009 = vld [vmem:[#allocation4 + $0x70] sm:$0xff]
      %v2010 = vld [vmem:[#allocation4 + $0x78] sm:$0xff]
      %v2011 = vld [vmem:[#allocation4 + $0x80] sm:$0xff]
      %v2012 = vld [vmem:[#allocation4 + $0x88] sm:$0xff]
      %v2013 = vld [vmem:[#allocation4 + $0x90] sm:$0xff]
      %v2014 = vld [vmem:[#allocation4 + $0x98] sm:$0xff]
      %v2015 = vld [vmem:[#allocation4 + $0xa0] sm:$0xff]
      %v2016 = vld [vmem:[#allocation4 + $0xa8] sm:$0xff]
      %v2017 = vld [vmem:[#allocation4 + $0xb0] sm:$0xff]
      %v2018 = vld [vmem:[#allocation4 + $0xb8] sm:$0xff]
      %v2019 = vld [vmem:[#allocation4 + $0xc0] sm:$0xff]
      %v2020 = vld [vmem:[#allocation4 + $0xc8] sm:$0xff]
      %v2021 = vld [vmem:[#allocation4 + $0xd0] sm:$0xff]
      %v2022 = vld [vmem:[#allocation4 + $0xd8] sm:$0xff]
      %v2023 = vld [vmem:[#allocation4 + $0xe0] sm:$0xff]
      %v2024 = vld [vmem:[#allocation4 + $0xe8] sm:$0xff]
      %v2025 = vld [vmem:[#allocation4 + $0xf0] sm:$0xff]
      %v2026 = vld [vmem:[#allocation4 + $0xf8] sm:$0xff]
      %v2027 = vld [vmem:[%s1] sm:$0xff]
      %v2028 = vld [vmem:[%s1 + $0x8] sm:$0xff]
      %v2029 = vld [vmem:[%s1 + $0x10] sm:$0xff]
      %v2030 = vld [vmem:[%s1 + $0x18] sm:$0xff]
      %v2031 = vld [vmem:[%s1 + $0x20] sm:$0xf]
      %v2032 = vld [vmem:[%s2] sm:$0x1]
      %v2034 = vlaneseq
      %v2035 = vshrl.u32 %v2034, 7
      %v2036 = vsub.s32 0, %v2035
      %v2037 = vrot.slane %v2032, %v2036
      %vm2039 = vcmask 293888
      %v2041 = vsel %vm2039, %v1995, 0
      %v2044 = vsel %vm2039, %v1996, 0
      %v2047 = vsel %vm2039, %v1997, 0
      %v2050 = vsel %vm2039, %v1998, 0
      %v2053 = vsel %vm2039, %v1999, 0
      %v2056 = vsel %vm2039, %v2000, 0
      %v2059 = vsel %vm2039, %v2001, 0
      %v2062 = vsel %vm2039, %v2002, 0
      %v2065 = vsel %vm2039, %v2003, 0
      %v2068 = vsel %vm2039, %v2004, 0
      %v2071 = vsel %vm2039, %v2005, 0
      %v2074 = vsel %vm2039, %v2006, 0
      %v2077 = vsel %vm2039, %v2007, 0
      %v2080 = vsel %vm2039, %v2008, 0
      %v2083 = vsel %vm2039, %v2009, 0
      %v2086 = vsel %vm2039, %v2010, 0
      %v2089 = vsel %vm2039, %v2011, 0
      %v2092 = vsel %vm2039, %v2012, 0
      %v2095 = vsel %vm2039, %v2013, 0
      %v2098 = vsel %vm2039, %v2014, 0
      %v2101 = vsel %vm2039, %v2015, 0
      %v2104 = vsel %vm2039, %v2016, 0
      %v2107 = vsel %vm2039, %v2017, 0
      %v2110 = vsel %vm2039, %v2018, 0
      %v2113 = vsel %vm2039, %v2019, 0
      %v2116 = vsel %vm2039, %v2020, 0
      %v2119 = vsel %vm2039, %v2021, 0
      %v2122 = vsel %vm2039, %v2022, 0
      %v2125 = vsel %vm2039, %v2023, 0
      %v2128 = vsel %vm2039, %v2024, 0
      %v2131 = vsel %vm2039, %v2025, 0
      %v2134 = vsel %vm2039, %v2026, 0
      %vm2136 = vcmask 1043456
      %v2138 = vsel %vm2136, %v2031, 0
      %2140 = vmatprep.subr.mxu0 0.0
      %2141 = vmatpush1.msra.mxu0 0.0
      %2142 = vmatprep.subr.mxu0 0.0
      %2143 = vmatpush1.msra.mxu0 0.0
      %2144 = vmatprep.subr.mxu0 0.0
      %2145 = vmatpush1.msra.mxu0 0.0
      %2146 = vmatprep.subr.mxu0 0.0
      %2147 = vmatpush1.msra.mxu0 0.0
      %2148 = vmatprep.subr.mxu0 0.0
      %2149 = vmatpush1.msra.mxu0 0.0
      %2150 = vmatprep.subr.mxu0 0.0
      %2151 = vmatpush1.msra.mxu0 0.0
      %2152 = vmatprep.subr.mxu0 0.0
      %2153 = vmatpush1.msra.mxu0 0.0
      %2154 = vmatprep.subr.mxu0 0.0
      %2155 = vmatpush1.msra.mxu0 0.0
      %2156 = vmatprep.subr.mxu0 0.0
      %2157 = vmatpush1.msra.mxu0 0.0
      %2158 = vmatprep.subr.mxu0 0.0
      %2159 = vmatpush1.msra.mxu0 0.0
      %2160 = vmatprep.subr.mxu0 0.0
      %2161 = vmatpush1.msra.mxu0 0.0
      %2162 = vmatprep.subr.mxu0 0.0
      %2163 = vmatpush1.msra.mxu0 %v2138
      %2164 = vmatprep.subr.mxu0 0.0
      %2165 = vmatpush1.msra.mxu0 %v2030
      %2166 = vmatprep.subr.mxu0 0.0
      %2167 = vmatpush1.msra.mxu0 %v2029
      %2168 = vmatprep.subr.mxu0 0.0
      %2169 = vmatpush1.msra.mxu0 %v2028
      %2170 = vmatprep.subr.mxu0 0.0
      %2171 = vmatpush1.msra.mxu0 %v2027
      %2172 = vmatprep.subr.mxu0 0.0
      %2173 = vmatpush2.msra.mxu0 0.0
      %2174 = vmatprep.subr.mxu0 0.0
      %2175 = vmatpush2.msra.mxu0 0.0
      %2176 = vmatprep.subr.mxu0 0.0
      %2177 = vmatpush2.msra.mxu0 0.0
      %2178 = vmatprep.subr.mxu0 0.0
      %2179 = vmatpush2.msra.mxu0 0.0
      %2180 = vmatprep.subr.mxu0 0.0
      %2181 = vmatpush2.msra.mxu0 0.0
      %2182 = vmatprep.subr.mxu0 0.0
      %2183 = vmatpush2.msra.mxu0 0.0
      %2184 = vmatprep.subr.mxu0 0.0
      %2185 = vmatpush2.msra.mxu0 0.0
      %2186 = vmatprep.subr.mxu0 0.0
      %2187 = vmatpush2.msra.mxu0 0.0
      %2188 = vmatprep.subr.mxu0 0.0
      %2189 = vmatpush2.msra.mxu0 0.0
      %2190 = vmatprep.subr.mxu0 0.0
      %2191 = vmatpush2.msra.mxu0 0.0
      %2192 = vmatprep.subr.mxu0 0.0
      %2193 = vmatpush2.msra.mxu0 0.0
      %2194 = vmatprep.subr.mxu0 0.0
      %2195 = vmatpush2.msra.mxu0 0.0
      %2196 = vmatprep.subr.mxu0 0.0
      %2197 = vmatpush2.msra.mxu0 0.0
      %2198 = vmatprep.subr.mxu0 0.0
      %2199 = vmatpush2.msra.mxu0 0.0
      %2200 = vmatprep.subr.mxu0 0.0
      %2201 = vmatpush2.msra.mxu0 0.0
      %2202 = vmatprep.subr.mxu0 0.0
      %2203 = vmatpush2.msra.mxu0 0.0
      %2204 = vmatprep.mubr.f32.mxu0 0.0
      %2205 = vmatmul.mubr.f32.gmra.mxu0 %v2041
      %v2206 = vpop.f32.mrf.mxu0
      %v2207 = vadd.f32 %v2037, %v2206
      %v2208 = vpop.f32.mrf.mxu0
      %2209 = vmatprep.mubr.f32.mxu0 0.0
      %2210 = vmatmul.mubr.f32.gmra.mxu0 %v2044
      %v2211 = vpop.f32.mrf.mxu0
      %v2212 = vadd.f32 %v2037, %v2211
      %v2213 = vpop.f32.mrf.mxu0
      %2214 = vmatprep.mubr.f32.mxu0 0.0
      %2215 = vmatmul.mubr.f32.gmra.mxu0 %v2047
      %v2216 = vpop.f32.mrf.mxu0
      %v2217 = vadd.f32 %v2037, %v2216
      %v2218 = vpop.f32.mrf.mxu0
      %2219 = vmatprep.mubr.f32.mxu0 0.0
      %2220 = vmatmul.mubr.f32.gmra.mxu0 %v2050
      %v2221 = vpop.f32.mrf.mxu0
      %v2222 = vadd.f32 %v2037, %v2221
      %v2223 = vpop.f32.mrf.mxu0
      %2224 = vmatprep.mubr.f32.mxu0 0.0
      %2225 = vmatmul.mubr.f32.gmra.mxu0 %v2053
      %v2226 = vpop.f32.mrf.mxu0
      %v2227 = vadd.f32 %v2037, %v2226
      %v2228 = vpop.f32.mrf.mxu0
      %2229 = vmatprep.mubr.f32.mxu0 0.0
      %2230 = vmatmul.mubr.f32.gmra.mxu0 %v2056
      %v2231 = vpop.f32.mrf.mxu0
      %v2232 = vadd.f32 %v2037, %v2231
      %v2233 = vpop.f32.mrf.mxu0
      %2234 = vmatprep.mubr.f32.mxu0 0.0
      %2235 = vmatmul.mubr.f32.gmra.mxu0 %v2059
      %v2236 = vpop.f32.mrf.mxu0
      %v2237 = vadd.f32 %v2037, %v2236
      %v2238 = vpop.f32.mrf.mxu0
      %2239 = vmatprep.mubr.f32.mxu0 0.0
      %2240 = vmatmul.mubr.f32.gmra.mxu0 %v2062
      %v2241 = vpop.f32.mrf.mxu0
      %v2242 = vadd.f32 %v2037, %v2241
      %v2243 = vpop.f32.mrf.mxu0
      %2244 = vmatprep.mubr.f32.mxu0 0.0
      %2245 = vmatmul.mubr.f32.gmra.mxu0 %v2065
      %v2246 = vpop.f32.mrf.mxu0
      %v2247 = vadd.f32 %v2037, %v2246
      %v2248 = vpop.f32.mrf.mxu0
      %2249 = vmatprep.mubr.f32.mxu0 0.0
      %2250 = vmatmul.mubr.f32.gmra.mxu0 %v2068
      %v2251 = vpop.f32.mrf.mxu0
      %v2252 = vadd.f32 %v2037, %v2251
      %v2253 = vpop.f32.mrf.mxu0
      %2254 = vmatprep.mubr.f32.mxu0 0.0
      %2255 = vmatmul.mubr.f32.gmra.mxu0 %v2071
      %v2256 = vpop.f32.mrf.mxu0
      %v2257 = vadd.f32 %v2037, %v2256
      %v2258 = vpop.f32.mrf.mxu0
      %2259 = vmatprep.mubr.f32.mxu0 0.0
      %2260 = vmatmul.mubr.f32.gmra.mxu0 %v2074
      %v2261 = vpop.f32.mrf.mxu0
      %v2262 = vadd.f32 %v2037, %v2261
      %v2263 = vpop.f32.mrf.mxu0
      %2264 = vmatprep.mubr.f32.mxu0 0.0
      %2265 = vmatmul.mubr.f32.gmra.mxu0 %v2077
      %v2266 = vpop.f32.mrf.mxu0
      %v2267 = vadd.f32 %v2037, %v2266
      %v2268 = vpop.f32.mrf.mxu0
      %2269 = vmatprep.mubr.f32.mxu0 0.0
      %2270 = vmatmul.mubr.f32.gmra.mxu0 %v2080
      %v2271 = vpop.f32.mrf.mxu0
      %v2272 = vadd.f32 %v2037, %v2271
      %v2273 = vpop.f32.mrf.mxu0
      %2274 = vmatprep.mubr.f32.mxu0 0.0
      %2275 = vmatmul.mubr.f32.gmra.mxu0 %v2083
      %v2276 = vpop.f32.mrf.mxu0
      %v2277 = vadd.f32 %v2037, %v2276
      %v2278 = vpop.f32.mrf.mxu0
      %2279 = vmatprep.mubr.f32.mxu0 0.0
      %2280 = vmatmul.mubr.f32.gmra.mxu0 %v2086
      %v2281 = vpop.f32.mrf.mxu0
      %v2282 = vadd.f32 %v2037, %v2281
      %v2283 = vpop.f32.mrf.mxu0
      %2284 = vmatprep.mubr.f32.mxu0 0.0
      %2285 = vmatmul.mubr.f32.gmra.mxu0 %v2089
      %v2286 = vpop.f32.mrf.mxu0
      %v2287 = vadd.f32 %v2037, %v2286
      %v2288 = vpop.f32.mrf.mxu0
      %2289 = vmatprep.mubr.f32.mxu0 0.0
      %2290 = vmatmul.mubr.f32.gmra.mxu0 %v2092
      %v2291 = vpop.f32.mrf.mxu0
      %v2292 = vadd.f32 %v2037, %v2291
      %v2293 = vpop.f32.mrf.mxu0
      %2294 = vmatprep.mubr.f32.mxu0 0.0
      %2295 = vmatmul.mubr.f32.gmra.mxu0 %v2095
      %v2296 = vpop.f32.mrf.mxu0
      %v2297 = vadd.f32 %v2037, %v2296
      %v2298 = vpop.f32.mrf.mxu0
      %2299 = vmatprep.mubr.f32.mxu0 0.0
      %2300 = vmatmul.mubr.f32.gmra.mxu0 %v2098
      %v2301 = vpop.f32.mrf.mxu0
      %v2302 = vadd.f32 %v2037, %v2301
      %v2303 = vpop.f32.mrf.mxu0
      %2304 = vmatprep.mubr.f32.mxu0 0.0
      %2305 = vmatmul.mubr.f32.gmra.mxu0 %v2101
      %v2306 = vpop.f32.mrf.mxu0
      %v2307 = vadd.f32 %v2037, %v2306
      %v2308 = vpop.f32.mrf.mxu0
      %2309 = vmatprep.mubr.f32.mxu0 0.0
      %2310 = vmatmul.mubr.f32.gmra.mxu0 %v2104
      %v2311 = vpop.f32.mrf.mxu0
      %v2312 = vadd.f32 %v2037, %v2311
      %v2313 = vpop.f32.mrf.mxu0
      %2314 = vmatprep.mubr.f32.mxu0 0.0
      %2315 = vmatmul.mubr.f32.gmra.mxu0 %v2107
      %v2316 = vpop.f32.mrf.mxu0
      %v2317 = vadd.f32 %v2037, %v2316
      %v2318 = vpop.f32.mrf.mxu0
      %2319 = vmatprep.mubr.f32.mxu0 0.0
      %2320 = vmatmul.mubr.f32.gmra.mxu0 %v2110
      %v2321 = vpop.f32.mrf.mxu0
      %v2322 = vadd.f32 %v2037, %v2321
      %v2323 = vpop.f32.mrf.mxu0
      %2324 = vmatprep.mubr.f32.mxu0 0.0
      %2325 = vmatmul.mubr.f32.gmra.mxu0 %v2113
      %v2326 = vpop.f32.mrf.mxu0
      %v2327 = vadd.f32 %v2037, %v2326
      %v2328 = vpop.f32.mrf.mxu0
      %2329 = vmatprep.mubr.f32.mxu0 0.0
      %2330 = vmatmul.mubr.f32.gmra.mxu0 %v2116
      %v2331 = vpop.f32.mrf.mxu0
      %v2332 = vadd.f32 %v2037, %v2331
      %v2333 = vpop.f32.mrf.mxu0
      %2334 = vmatprep.mubr.f32.mxu0 0.0
      %2335 = vmatmul.mubr.f32.gmra.mxu0 %v2119
      %v2336 = vpop.f32.mrf.mxu0
      %v2337 = vadd.f32 %v2037, %v2336
      %v2338 = vpop.f32.mrf.mxu0
      %2339 = vmatprep.mubr.f32.mxu0 0.0
      %2340 = vmatmul.mubr.f32.gmra.mxu0 %v2122
      %v2341 = vpop.f32.mrf.mxu0
      %v2342 = vadd.f32 %v2037, %v2341
      %v2343 = vpop.f32.mrf.mxu0
      %2344 = vmatprep.mubr.f32.mxu0 0.0
      %2345 = vmatmul.mubr.f32.gmra.mxu0 %v2125
      %v2346 = vpop.f32.mrf.mxu0
      %v2347 = vadd.f32 %v2037, %v2346
      %v2348 = vpop.f32.mrf.mxu0
      %2349 = vmatprep.mubr.f32.mxu0 0.0
      %2350 = vmatmul.mubr.f32.gmra.mxu0 %v2128
      %v2351 = vpop.f32.mrf.mxu0
      %v2352 = vadd.f32 %v2037, %v2351
      %v2353 = vpop.f32.mrf.mxu0
      %2354 = vmatprep.mubr.f32.mxu0 0.0
      %2355 = vmatmul.mubr.f32.gmra.mxu0 %v2131
      %v2356 = vpop.f32.mrf.mxu0
      %v2357 = vadd.f32 %v2037, %v2356
      %v2358 = vpop.f32.mrf.mxu0
      %2359 = vmatprep.mubr.f32.mxu0 0.0
      %2360 = vmatmul.mubr.f32.gmra.mxu0 %v2134
      %v2361 = vpop.f32.mrf.mxu0
      %v2362 = vadd.f32 %v2037, %v2361
      %v2363 = vpop.f32.mrf.mxu0
      %2364 = vdwg.mxu0
      %v2365 = vmax.f32 %v2207, 0.0
      %v2366 = vmax.f32 %v2212, 0.0
      %v2367 = vmax.f32 %v2217, 0.0
      %v2368 = vmax.f32 %v2222, 0.0
      %v2369 = vmax.f32 %v2227, 0.0
      %v2370 = vmax.f32 %v2232, 0.0
      %v2371 = vmax.f32 %v2237, 0.0
      %v2372 = vmax.f32 %v2242, 0.0
      %v2373 = vmax.f32 %v2247, 0.0
      %v2374 = vmax.f32 %v2252, 0.0
      %v2375 = vmax.f32 %v2257, 0.0
      %v2376 = vmax.f32 %v2262, 0.0
      %v2377 = vmax.f32 %v2267, 0.0
      %v2378 = vmax.f32 %v2272, 0.0
      %v2379 = vmax.f32 %v2277, 0.0
      %v2380 = vmax.f32 %v2282, 0.0
      %v2381 = vmax.f32 %v2287, 0.0
      %v2382 = vmax.f32 %v2292, 0.0
      %v2383 = vmax.f32 %v2297, 0.0
      %v2384 = vmax.f32 %v2302, 0.0
      %v2385 = vmax.f32 %v2307, 0.0
      %v2386 = vmax.f32 %v2312, 0.0
      %v2387 = vmax.f32 %v2317, 0.0
      %v2388 = vmax.f32 %v2322, 0.0
      %v2389 = vmax.f32 %v2327, 0.0
      %v2390 = vmax.f32 %v2332, 0.0
      %v2391 = vmax.f32 %v2337, 0.0
      %v2392 = vmax.f32 %v2342, 0.0
      %v2393 = vmax.f32 %v2347, 0.0
      %v2394 = vmax.f32 %v2352, 0.0
      %v2395 = vmax.f32 %v2357, 0.0
      %v2396 = vmax.f32 %v2362, 0.0
      %vm2397 = vcmask 64512
      %2398 = vst.msk [vmem:[#allocation3] sm:$0xff] %vm2397, 0.0
      %2399 = vst.msk [vmem:[#allocation3 + $0x8] sm:$0xff] %vm2397, 0.0
      %vm2400 = vcmask 58368
      %2401 = vst.msk [vmem:[#allocation3 + $0x10] sm:$0x3] %vm2400, 0.0
      %2402 = vst.msk [vmem:[#allocation3 + $0x18] sm:$0xff] %vm2397, 0.0
      %2403 = vst.msk [vmem:[#allocation3 + $0x20] sm:$0xff] %vm2397, 0.0
      %2404 = vst.msk [vmem:[#allocation3 + $0x28] sm:$0x3] %vm2400, 0.0
      %2405 = vst.msk [vmem:[#allocation3 + $0x30] sm:$0xff] %vm2397, 0.0
      %2406 = vst.msk [vmem:[#allocation3 + $0x38] sm:$0xff] %vm2397, 0.0
      %2407 = vst.msk [vmem:[#allocation3 + $0x40] sm:$0x3] %vm2400, 0.0
      %2408 = vst.msk [vmem:[#allocation3 + $0x48] sm:$0xff] %vm2397, 0.0
      %2409 = vst.msk [vmem:[#allocation3 + $0x50] sm:$0xff] %vm2397, 0.0
      %2410 = vst.msk [vmem:[#allocation3 + $0x58] sm:$0x3] %vm2400, 0.0
      %2411 = vst.msk [vmem:[#allocation3 + $0x60] sm:$0xff] %vm2397, 0.0
      %2412 = vst.msk [vmem:[#allocation3 + $0x68] sm:$0xff] %vm2397, 0.0
      %2413 = vst.msk [vmem:[#allocation3 + $0x70] sm:$0x3] %vm2400, 0.0
      %2414 = vst.msk [vmem:[#allocation3 + $0x78] sm:$0xff] %vm2397, 0.0
      %2415 = vst.msk [vmem:[#allocation3 + $0x80] sm:$0xff] %vm2397, 0.0
      %2416 = vst.msk [vmem:[#allocation3 + $0x88] sm:$0x3] %vm2400, 0.0
      %2417 = vst.msk [vmem:[#allocation3 + $0x90] sm:$0xff] %vm2397, 0.0
      %2418 = vst.msk [vmem:[#allocation3 + $0x98] sm:$0xff] %vm2397, 0.0
      %2419 = vst.msk [vmem:[#allocation3 + $0xa0] sm:$0x3] %vm2400, 0.0
      %2420 = vst.msk [vmem:[#allocation3 + $0xa8] sm:$0xff] %vm2397, 0.0
      %2421 = vst.msk [vmem:[#allocation3 + $0xb0] sm:$0xff] %vm2397, 0.0
      %2422 = vst.msk [vmem:[#allocation3 + $0xb8] sm:$0x3] %vm2400, 0.0
      %2423 = vst.msk [vmem:[#allocation3 + $0xc0] sm:$0xff] %vm2397, 0.0
      %2424 = vst.msk [vmem:[#allocation3 + $0xc8] sm:$0xff] %vm2397, 0.0
      %2425 = vst.msk [vmem:[#allocation3 + $0xd0] sm:$0x3] %vm2400, 0.0
      %2426 = vst.msk [vmem:[#allocation3 + $0xd8] sm:$0xff] %vm2397, 0.0
      %2427 = vst.msk [vmem:[#allocation3 + $0xe0] sm:$0xff] %vm2397, 0.0
      %2428 = vst.msk [vmem:[#allocation3 + $0xe8] sm:$0x3] %vm2400, 0.0
      %2429 = vst.msk [vmem:[#allocation3 + $0xf0] sm:$0xff] %vm2397, 0.0
      %2430 = vst.msk [vmem:[#allocation3 + $0xf8] sm:$0xff] %vm2397, 0.0
      %2431 = vst.msk [vmem:[#allocation3 + $0x100] sm:$0x3] %vm2400, 0.0
      %2432 = vst.msk [vmem:[#allocation3 + $0x108] sm:$0xff] %vm2397, 0.0
      %2433 = vst.msk [vmem:[#allocation3 + $0x110] sm:$0xff] %vm2397, 0.0
      %2434 = vst.msk [vmem:[#allocation3 + $0x118] sm:$0x3] %vm2400, 0.0
      %2435 = vst.msk [vmem:[#allocation3 + $0x120] sm:$0xff] %vm2397, 0.0
      %2436 = vst.msk [vmem:[#allocation3 + $0x128] sm:$0xff] %vm2397, 0.0
      %2437 = vst.msk [vmem:[#allocation3 + $0x130] sm:$0x3] %vm2400, 0.0
      %2438 = vst.msk [vmem:[#allocation3 + $0x138] sm:$0xff] %vm2397, 0.0
      %2439 = vst.msk [vmem:[#allocation3 + $0x140] sm:$0xff] %vm2397, 0.0
      %2440 = vst.msk [vmem:[#allocation3 + $0x148] sm:$0x3] %vm2400, 0.0
      %2441 = vst.msk [vmem:[#allocation3 + $0x150] sm:$0xff] %vm2397, 0.0
      %2442 = vst.msk [vmem:[#allocation3 + $0x158] sm:$0xff] %vm2397, 0.0
      %2443 = vst.msk [vmem:[#allocation3 + $0x160] sm:$0x3] %vm2400, 0.0
      %2444 = vst.msk [vmem:[#allocation3 + $0x168] sm:$0xff] %vm2397, 0.0
      %2445 = vst.msk [vmem:[#allocation3 + $0x170] sm:$0xff] %vm2397, 0.0
      %2446 = vst.msk [vmem:[#allocation3 + $0x178] sm:$0x3] %vm2400, 0.0
      %2447 = vst.msk [vmem:[#allocation3 + $0x180] sm:$0xff] %vm2397, 0.0
      %2448 = vst.msk [vmem:[#allocation3 + $0x188] sm:$0xff] %vm2397, 0.0
      %2449 = vst.msk [vmem:[#allocation3 + $0x190] sm:$0x3] %vm2400, 0.0
      %2450 = vst.msk [vmem:[#allocation3 + $0x198] sm:$0xff] %vm2397, 0.0
      %2451 = vst.msk [vmem:[#allocation3 + $0x1a0] sm:$0xff] %vm2397, 0.0
      %2452 = vst.msk [vmem:[#allocation3 + $0x1a8] sm:$0x3] %vm2400, 0.0
      %s2453 = scalar_lea.vmem [#allocation3], 24
      %2454 = vst.msk [vmem:[%s2453 + $0x1] sm:$0xff] %vm2397, %v2365
      %2455 = vst.msk [vmem:[%s2453 + $0x9] sm:$0xff] %vm2397, %v2366
      %2456 = vst.msk [vmem:[%s2453 + $0x19] sm:$0xff] %vm2397, %v2367
      %2457 = vst.msk [vmem:[%s2453 + $0x21] sm:$0xff] %vm2397, %v2368
      %2458 = vst.msk [vmem:[%s2453 + $0x31] sm:$0xff] %vm2397, %v2369
      %2459 = vst.msk [vmem:[%s2453 + $0x39] sm:$0xff] %vm2397, %v2370
      %2460 = vst.msk [vmem:[%s2453 + $0x49] sm:$0xff] %vm2397, %v2371
      %2461 = vst.msk [vmem:[%s2453 + $0x51] sm:$0xff] %vm2397, %v2372
      %2462 = vst.msk [vmem:[%s2453 + $0x61] sm:$0xff] %vm2397, %v2373
      %2463 = vst.msk [vmem:[%s2453 + $0x69] sm:$0xff] %vm2397, %v2374
      %2464 = vst.msk [vmem:[%s2453 + $0x79] sm:$0xff] %vm2397, %v2375
      %2465 = vst.msk [vmem:[%s2453 + $0x81] sm:$0xff] %vm2397, %v2376
      %2466 = vst.msk [vmem:[%s2453 + $0x91] sm:$0xff] %vm2397, %v2377
      %2467 = vst.msk [vmem:[%s2453 + $0x99] sm:$0xff] %vm2397, %v2378
      %2468 = vst.msk [vmem:[%s2453 + $0xa9] sm:$0xff] %vm2397, %v2379
      %2469 = vst.msk [vmem:[%s2453 + $0xb1] sm:$0xff] %vm2397, %v2380
      %2470 = vst.msk [vmem:[%s2453 + $0xc1] sm:$0xff] %vm2397, %v2381
      %2471 = vst.msk [vmem:[%s2453 + $0xc9] sm:$0xff] %vm2397, %v2382
      %2472 = vst.msk [vmem:[%s2453 + $0xd9] sm:$0xff] %vm2397, %v2383
      %2473 = vst.msk [vmem:[%s2453 + $0xe1] sm:$0xff] %vm2397, %v2384
      %2474 = vst.msk [vmem:[%s2453 + $0xf1] sm:$0xff] %vm2397, %v2385
      %2475 = vst.msk [vmem:[%s2453 + $0xf9] sm:$0xff] %vm2397, %v2386
      %2476 = vst.msk [vmem:[%s2453 + $0x109] sm:$0xff] %vm2397, %v2387
      %2477 = vst.msk [vmem:[%s2453 + $0x111] sm:$0xff] %vm2397, %v2388
      %2478 = vst.msk [vmem:[%s2453 + $0x121] sm:$0xff] %vm2397, %v2389
      %2479 = vst.msk [vmem:[%s2453 + $0x129] sm:$0xff] %vm2397, %v2390
      %2480 = vst.msk [vmem:[%s2453 + $0x139] sm:$0xff] %vm2397, %v2391
      %2481 = vst.msk [vmem:[%s2453 + $0x141] sm:$0xff] %vm2397, %v2392
      %2482 = vst.msk [vmem:[%s2453 + $0x151] sm:$0xff] %vm2397, %v2393
      %2483 = vst.msk [vmem:[%s2453 + $0x159] sm:$0xff] %vm2397, %v2394
      %2484 = vst.msk [vmem:[%s2453 + $0x169] sm:$0xff] %vm2397, %v2395
      %2485 = vst.msk [vmem:[%s2453 + $0x171] sm:$0xff] %vm2397, %v2396
      %v2486 = vld [vmem:[#allocation3] sm:$0xff]
      %v2487 = vld [vmem:[#allocation3 + $0x8] sm:$0xff]
      %v2488 = vld [vmem:[#allocation3 + $0x18] sm:$0xff]
      %v2489 = vld [vmem:[#allocation3 + $0x20] sm:$0xff]
      %v2490 = vld [vmem:[#allocation3 + $0x30] sm:$0xff]
      %v2491 = vld [vmem:[#allocation3 + $0x38] sm:$0xff]
      %v2492 = vld [vmem:[#allocation3 + $0x48] sm:$0xff]
      %v2493 = vld [vmem:[#allocation3 + $0x50] sm:$0xff]
      %v2494 = vld [vmem:[#allocation3 + $0x60] sm:$0xff]
      %v2495 = vld [vmem:[#allocation3 + $0x68] sm:$0xff]
      %v2496 = vld [vmem:[#allocation3 + $0x78] sm:$0xff]
      %v2497 = vld [vmem:[#allocation3 + $0x80] sm:$0xff]
      %v2498 = vld [vmem:[#allocation3 + $0x90] sm:$0xff]
      %v2499 = vld [vmem:[#allocation3 + $0x98] sm:$0xff]
      %v2500 = vld [vmem:[#allocation3 + $0xa8] sm:$0xff]
      %v2501 = vld [vmem:[#allocation3 + $0xb0] sm:$0xff]
      %v2502 = vld [vmem:[#allocation3 + $0xc0] sm:$0xff]
      %v2503 = vld [vmem:[#allocation3 + $0xc8] sm:$0xff]
      %v2504 = vld [vmem:[#allocation3 + $0xd8] sm:$0xff]
      %v2505 = vld [vmem:[#allocation3 + $0xe0] sm:$0xff]
      %v2506 = vld [vmem:[#allocation3 + $0xf0] sm:$0xff]
      %v2507 = vld [vmem:[#allocation3 + $0xf8] sm:$0xff]
      %v2508 = vld [vmem:[#allocation3 + $0x108] sm:$0xff]
      %v2509 = vld [vmem:[#allocation3 + $0x110] sm:$0xff]
      %v2510 = vld [vmem:[#allocation3 + $0x120] sm:$0xff]
      %v2511 = vld [vmem:[#allocation3 + $0x128] sm:$0xff]
      %v2512 = vld [vmem:[#allocation3 + $0x138] sm:$0xff]
      %v2513 = vld [vmem:[#allocation3 + $0x140] sm:$0xff]
      %v2514 = vld [vmem:[#allocation3 + $0x150] sm:$0xff]
      %v2515 = vld [vmem:[#allocation3 + $0x158] sm:$0xff]
      %v2516 = vld [vmem:[#allocation3 + $0x168] sm:$0xff]
      %v2517 = vld [vmem:[#allocation3 + $0x170] sm:$0xff]
      %2518 = vst.msk [vmem:[#allocation5] sm:$0xff] %vm2397, %v2486
      %2519 = vst.msk [vmem:[#allocation5 + $0x8] sm:$0xff] %vm2397, %v2487
      %2520 = vst.msk [vmem:[#allocation5 + $0x10] sm:$0xff] %vm2397, %v2488
      %2521 = vst.msk [vmem:[#allocation5 + $0x18] sm:$0xff] %vm2397, %v2489
      %2522 = vst.msk [vmem:[#allocation5 + $0x20] sm:$0xff] %vm2397, %v2490
      %2523 = vst.msk [vmem:[#allocation5 + $0x28] sm:$0xff] %vm2397, %v2491
      %2524 = vst.msk [vmem:[#allocation5 + $0x30] sm:$0xff] %vm2397, %v2492
      %2525 = vst.msk [vmem:[#allocation5 + $0x38] sm:$0xff] %vm2397, %v2493
      %2526 = vst.msk [vmem:[#allocation5 + $0x40] sm:$0xff] %vm2397, %v2494
      %2527 = vst.msk [vmem:[#allocation5 + $0x48] sm:$0xff] %vm2397, %v2495
      %2528 = vst.msk [vmem:[#allocation5 + $0x50] sm:$0xff] %vm2397, %v2496
      %2529 = vst.msk [vmem:[#allocation5 + $0x58] sm:$0xff] %vm2397, %v2497
      %2530 = vst.msk [vmem:[#allocation5 + $0x60] sm:$0xff] %vm2397, %v2498
      %2531 = vst.msk [vmem:[#allocation5 + $0x68] sm:$0xff] %vm2397, %v2499
      %2532 = vst.msk [vmem:[#allocation5 + $0x70] sm:$0xff] %vm2397, %v2500
      %2533 = vst.msk [vmem:[#allocation5 + $0x78] sm:$0xff] %vm2397, %v2501
      %2534 = vst.msk [vmem:[#allocation5 + $0x80] sm:$0xff] %vm2397, %v2502
      %2535 = vst.msk [vmem:[#allocation5 + $0x88] sm:$0xff] %vm2397, %v2503
      %2536 = vst.msk [vmem:[#allocation5 + $0x90] sm:$0xff] %vm2397, %v2504
      %2537 = vst.msk [vmem:[#allocation5 + $0x98] sm:$0xff] %vm2397, %v2505
      %2538 = vst.msk [vmem:[#allocation5 + $0xa0] sm:$0xff] %vm2397, %v2506
      %2539 = vst.msk [vmem:[#allocation5 + $0xa8] sm:$0xff] %vm2397, %v2507
      %2540 = vst.msk [vmem:[#allocation5 + $0xb0] sm:$0xff] %vm2397, %v2508
      %2541 = vst.msk [vmem:[#allocation5 + $0xb8] sm:$0xff] %vm2397, %v2509
      %2542 = vst.msk [vmem:[#allocation5 + $0xc0] sm:$0xff] %vm2397, %v2510
      %2543 = vst.msk [vmem:[#allocation5 + $0xc8] sm:$0xff] %vm2397, %v2511
      %2544 = vst.msk [vmem:[#allocation5 + $0xd0] sm:$0xff] %vm2397, %v2512
      %2545 = vst.msk [vmem:[#allocation5 + $0xd8] sm:$0xff] %vm2397, %v2513
      %2546 = vst.msk [vmem:[#allocation5 + $0xe0] sm:$0xff] %vm2397, %v2514
      %2547 = vst.msk [vmem:[#allocation5 + $0xe8] sm:$0xff] %vm2397, %v2515
      %2548 = vst.msk [vmem:[#allocation5 + $0xf0] sm:$0xff] %vm2397, %v2516
      %2549 = vst.msk [vmem:[#allocation5 + $0xf8] sm:$0xff] %vm2397, %v2517
      %v2550 = vld [vmem:[#allocation3 + $0x1] sm:$0xff]
      %v2551 = vld [vmem:[#allocation3 + $0x9] sm:$0xff]
      %v2552 = vld [vmem:[#allocation3 + $0x19] sm:$0xff]
      %v2553 = vld [vmem:[#allocation3 + $0x21] sm:$0xff]
      %v2554 = vld [vmem:[#allocation3 + $0x31] sm:$0xff]
      %v2555 = vld [vmem:[#allocation3 + $0x39] sm:$0xff]
      %v2556 = vld [vmem:[#allocation3 + $0x49] sm:$0xff]
      %v2557 = vld [vmem:[#allocation3 + $0x51] sm:$0xff]
      %v2558 = vld [vmem:[#allocation3 + $0x61] sm:$0xff]
      %v2559 = vld [vmem:[#allocation3 + $0x69] sm:$0xff]
      %v2560 = vld [vmem:[#allocation3 + $0x79] sm:$0xff]
      %v2561 = vld [vmem:[#allocation3 + $0x81] sm:$0xff]
      %v2562 = vld [vmem:[#allocation3 + $0x91] sm:$0xff]
      %v2563 = vld [vmem:[#allocation3 + $0x99] sm:$0xff]
      %v2564 = vld [vmem:[#allocation3 + $0xa9] sm:$0xff]
      %v2565 = vld [vmem:[#allocation3 + $0xb1] sm:$0xff]
      %v2566 = vld [vmem:[#allocation3 + $0xc1] sm:$0xff]
      %v2567 = vld [vmem:[#allocation3 + $0xc9] sm:$0xff]
      %v2568 = vld [vmem:[#allocation3 + $0xd9] sm:$0xff]
      %v2569 = vld [vmem:[#allocation3 + $0xe1] sm:$0xff]
      %v2570 = vld [vmem:[#allocation3 + $0xf1] sm:$0xff]
      %v2571 = vld [vmem:[#allocation3 + $0xf9] sm:$0xff]
      %v2572 = vld [vmem:[#allocation3 + $0x109] sm:$0xff]
      %v2573 = vld [vmem:[#allocation3 + $0x111] sm:$0xff]
      %v2574 = vld [vmem:[#allocation3 + $0x121] sm:$0xff]
      %v2575 = vld [vmem:[#allocation3 + $0x129] sm:$0xff]
      %v2576 = vld [vmem:[#allocation3 + $0x139] sm:$0xff]
      %v2577 = vld [vmem:[#allocation3 + $0x141] sm:$0xff]
      %v2578 = vld [vmem:[#allocation3 + $0x151] sm:$0xff]
      %v2579 = vld [vmem:[#allocation3 + $0x159] sm:$0xff]
      %v2580 = vld [vmem:[#allocation3 + $0x169] sm:$0xff]
      %v2581 = vld [vmem:[#allocation3 + $0x171] sm:$0xff]
      %2614 = vrot.lane.b32.xlu0 %v2550, 8
      %v2615 = vpop.permute.xlu0 %2614
      %2616 = vrot.lane.b32.xlu0 %v2551, 8
      %v2617 = vpop.permute.xlu0 %2616
      %2618 = vrot.lane.b32.xlu0 %v2552, 8
      %v2619 = vpop.permute.xlu0 %2618
      %2620 = vrot.lane.b32.xlu0 %v2553, 8
      %v2621 = vpop.permute.xlu0 %2620
      %2622 = vrot.lane.b32.xlu0 %v2554, 8
      %v2623 = vpop.permute.xlu0 %2622
      %2624 = vrot.lane.b32.xlu0 %v2555, 8
      %v2625 = vpop.permute.xlu0 %2624
      %2626 = vrot.lane.b32.xlu0 %v2556, 8
      %v2627 = vpop.permute.xlu0 %2626
      %2628 = vrot.lane.b32.xlu0 %v2557, 8
      %v2629 = vpop.permute.xlu0 %2628
      %2630 = vrot.lane.b32.xlu0 %v2558, 8
      %v2631 = vpop.permute.xlu0 %2630
      %2632 = vrot.lane.b32.xlu0 %v2559, 8
      %v2633 = vpop.permute.xlu0 %2632
      %2634 = vrot.lane.b32.xlu0 %v2560, 8
      %v2635 = vpop.permute.xlu0 %2634
      %2636 = vrot.lane.b32.xlu0 %v2561, 8
      %v2637 = vpop.permute.xlu0 %2636
      %2638 = vrot.lane.b32.xlu0 %v2562, 8
      %v2639 = vpop.permute.xlu0 %2638
      %2640 = vrot.lane.b32.xlu0 %v2563, 8
      %v2641 = vpop.permute.xlu0 %2640
      %2642 = vrot.lane.b32.xlu0 %v2564, 8
      %v2643 = vpop.permute.xlu0 %2642
      %2644 = vrot.lane.b32.xlu0 %v2565, 8
      %v2645 = vpop.permute.xlu0 %2644
      %2646 = vrot.lane.b32.xlu0 %v2566, 8
      %v2647 = vpop.permute.xlu0 %2646
      %2648 = vrot.lane.b32.xlu0 %v2567, 8
      %v2649 = vpop.permute.xlu0 %2648
      %2650 = vrot.lane.b32.xlu0 %v2568, 8
      %v2651 = vpop.permute.xlu0 %2650
      %2652 = vrot.lane.b32.xlu0 %v2569, 8
      %v2653 = vpop.permute.xlu0 %2652
      %2654 = vrot.lane.b32.xlu0 %v2570, 8
      %v2655 = vpop.permute.xlu0 %2654
      %2656 = vrot.lane.b32.xlu0 %v2571, 8
      %v2657 = vpop.permute.xlu0 %2656
      %2658 = vrot.lane.b32.xlu0 %v2572, 8
      %v2659 = vpop.permute.xlu0 %2658
      %2660 = vrot.lane.b32.xlu0 %v2573, 8
      %v2661 = vpop.permute.xlu0 %2660
      %2662 = vrot.lane.b32.xlu0 %v2574, 8
      %v2663 = vpop.permute.xlu0 %2662
      %2664 = vrot.lane.b32.xlu0 %v2575, 8
      %v2665 = vpop.permute.xlu0 %2664
      %2666 = vrot.lane.b32.xlu0 %v2576, 8
      %v2667 = vpop.permute.xlu0 %2666
      %2668 = vrot.lane.b32.xlu0 %v2577, 8
      %v2669 = vpop.permute.xlu0 %2668
      %2670 = vrot.lane.b32.xlu0 %v2578, 8
      %v2671 = vpop.permute.xlu0 %2670
      %2672 = vrot.lane.b32.xlu0 %v2579, 8
      %v2673 = vpop.permute.xlu0 %2672
      %2674 = vrot.lane.b32.xlu0 %v2580, 8
      %v2675 = vpop.permute.xlu0 %2674
      %2676 = vrot.lane.b32.xlu0 %v2581, 8
      %v2677 = vpop.permute.xlu0 %2676
      %vm2710 = vcmask 130112
      %2711 = vst.msk [vmem:[#allocation5] sm:$0xff] %vm2710, %v2615
      %2712 = vst.msk [vmem:[#allocation5 + $0x8] sm:$0xff] %vm2710, %v2617
      %2713 = vst.msk [vmem:[#allocation5 + $0x10] sm:$0xff] %vm2710, %v2619
      %2714 = vst.msk [vmem:[#allocation5 + $0x18] sm:$0xff] %vm2710, %v2621
      %2715 = vst.msk [vmem:[#allocation5 + $0x20] sm:$0xff] %vm2710, %v2623
      %2716 = vst.msk [vmem:[#allocation5 + $0x28] sm:$0xff] %vm2710, %v2625
      %2717 = vst.msk [vmem:[#allocation5 + $0x30] sm:$0xff] %vm2710, %v2627
      %2718 = vst.msk [vmem:[#allocation5 + $0x38] sm:$0xff] %vm2710, %v2629
      %2719 = vst.msk [vmem:[#allocation5 + $0x40] sm:$0xff] %vm2710, %v2631
      %2720 = vst.msk [vmem:[#allocation5 + $0x48] sm:$0xff] %vm2710, %v2633
      %2721 = vst.msk [vmem:[#allocation5 + $0x50] sm:$0xff] %vm2710, %v2635
      %2722 = vst.msk [vmem:[#allocation5 + $0x58] sm:$0xff] %vm2710, %v2637
      %2723 = vst.msk [vmem:[#allocation5 + $0x60] sm:$0xff] %vm2710, %v2639
      %2724 = vst.msk [vmem:[#allocation5 + $0x68] sm:$0xff] %vm2710, %v2641
      %2725 = vst.msk [vmem:[#allocation5 + $0x70] sm:$0xff] %vm2710, %v2643
      %2726 = vst.msk [vmem:[#allocation5 + $0x78] sm:$0xff] %vm2710, %v2645
      %2727 = vst.msk [vmem:[#allocation5 + $0x80] sm:$0xff] %vm2710, %v2647
      %2728 = vst.msk [vmem:[#allocation5 + $0x88] sm:$0xff] %vm2710, %v2649
      %2729 = vst.msk [vmem:[#allocation5 + $0x90] sm:$0xff] %vm2710, %v2651
      %2730 = vst.msk [vmem:[#allocation5 + $0x98] sm:$0xff] %vm2710, %v2653
      %2731 = vst.msk [vmem:[#allocation5 + $0xa0] sm:$0xff] %vm2710, %v2655
      %2732 = vst.msk [vmem:[#allocation5 + $0xa8] sm:$0xff] %vm2710, %v2657
      %2733 = vst.msk [vmem:[#allocation5 + $0xb0] sm:$0xff] %vm2710, %v2659
      %2734 = vst.msk [vmem:[#allocation5 + $0xb8] sm:$0xff] %vm2710, %v2661
      %2735 = vst.msk [vmem:[#allocation5 + $0xc0] sm:$0xff] %vm2710, %v2663
      %2736 = vst.msk [vmem:[#allocation5 + $0xc8] sm:$0xff] %vm2710, %v2665
      %2737 = vst.msk [vmem:[#allocation5 + $0xd0] sm:$0xff] %vm2710, %v2667
      %2738 = vst.msk [vmem:[#allocation5 + $0xd8] sm:$0xff] %vm2710, %v2669
      %2739 = vst.msk [vmem:[#allocation5 + $0xe0] sm:$0xff] %vm2710, %v2671
      %2740 = vst.msk [vmem:[#allocation5 + $0xe8] sm:$0xff] %vm2710, %v2673
      %2741 = vst.msk [vmem:[#allocation5 + $0xf0] sm:$0xff] %vm2710, %v2675
      %2742 = vst.msk [vmem:[#allocation5 + $0xf8] sm:$0xff] %vm2710, %v2677
      %v2743 = vld [vmem:[#allocation3 + $0x2] sm:$0xff]
      %v2744 = vld [vmem:[#allocation3 + $0xa] sm:$0xff]
      %v2745 = vld [vmem:[#allocation3 + $0x1a] sm:$0xff]
      %v2746 = vld [vmem:[#allocation3 + $0x22] sm:$0xff]
      %v2747 = vld [vmem:[#allocation3 + $0x32] sm:$0xff]
      %v2748 = vld [vmem:[#allocation3 + $0x3a] sm:$0xff]
      %v2749 = vld [vmem:[#allocation3 + $0x4a] sm:$0xff]
      %v2750 = vld [vmem:[#allocation3 + $0x52] sm:$0xff]
      %v2751 = vld [vmem:[#allocation3 + $0x62] sm:$0xff]
      %v2752 = vld [vmem:[#allocation3 + $0x6a] sm:$0xff]
      %v2753 = vld [vmem:[#allocation3 + $0x7a] sm:$0xff]
      %v2754 = vld [vmem:[#allocation3 + $0x82] sm:$0xff]
      %v2755 = vld [vmem:[#allocation3 + $0x92] sm:$0xff]
      %v2756 = vld [vmem:[#allocation3 + $0x9a] sm:$0xff]
      %v2757 = vld [vmem:[#allocation3 + $0xaa] sm:$0xff]
      %v2758 = vld [vmem:[#allocation3 + $0xb2] sm:$0xff]
      %v2759 = vld [vmem:[#allocation3 + $0xc2] sm:$0xff]
      %v2760 = vld [vmem:[#allocation3 + $0xca] sm:$0xff]
      %v2761 = vld [vmem:[#allocation3 + $0xda] sm:$0xff]
      %v2762 = vld [vmem:[#allocation3 + $0xe2] sm:$0xff]
      %v2763 = vld [vmem:[#allocation3 + $0xf2] sm:$0xff]
      %v2764 = vld [vmem:[#allocation3 + $0xfa] sm:$0xff]
      %v2765 = vld [vmem:[#allocation3 + $0x10a] sm:$0xff]
      %v2766 = vld [vmem:[#allocation3 + $0x112] sm:$0xff]
      %v2767 = vld [vmem:[#allocation3 + $0x122] sm:$0xff]
      %v2768 = vld [vmem:[#allocation3 + $0x12a] sm:$0xff]
      %v2769 = vld [vmem:[#allocation3 + $0x13a] sm:$0xff]
      %v2770 = vld [vmem:[#allocation3 + $0x142] sm:$0xff]
      %v2771 = vld [vmem:[#allocation3 + $0x152] sm:$0xff]
      %v2772 = vld [vmem:[#allocation3 + $0x15a] sm:$0xff]
      %v2773 = vld [vmem:[#allocation3 + $0x16a] sm:$0xff]
      %v2774 = vld [vmem:[#allocation3 + $0x172] sm:$0xff]
      %2807 = vrot.lane.b32.xlu0 %v2743, 16
      %v2808 = vpop.permute.xlu0 %2807
      %2809 = vrot.lane.b32.xlu0 %v2744, 16
      %v2810 = vpop.permute.xlu0 %2809
      %2811 = vrot.lane.b32.xlu0 %v2745, 16
      %v2812 = vpop.permute.xlu0 %2811
      %2813 = vrot.lane.b32.xlu0 %v2746, 16
      %v2814 = vpop.permute.xlu0 %2813
      %2815 = vrot.lane.b32.xlu0 %v2747, 16
      %v2816 = vpop.permute.xlu0 %2815
      %2817 = vrot.lane.b32.xlu0 %v2748, 16
      %v2818 = vpop.permute.xlu0 %2817
      %2819 = vrot.lane.b32.xlu0 %v2749, 16
      %v2820 = vpop.permute.xlu0 %2819
      %2821 = vrot.lane.b32.xlu0 %v2750, 16
      %v2822 = vpop.permute.xlu0 %2821
      %2823 = vrot.lane.b32.xlu0 %v2751, 16
      %v2824 = vpop.permute.xlu0 %2823
      %2825 = vrot.lane.b32.xlu0 %v2752, 16
      %v2826 = vpop.permute.xlu0 %2825
      %2827 = vrot.lane.b32.xlu0 %v2753, 16
      %v2828 = vpop.permute.xlu0 %2827
      %2829 = vrot.lane.b32.xlu0 %v2754, 16
      %v2830 = vpop.permute.xlu0 %2829
      %2831 = vrot.lane.b32.xlu0 %v2755, 16
      %v2832 = vpop.permute.xlu0 %2831
      %2833 = vrot.lane.b32.xlu0 %v2756, 16
      %v2834 = vpop.permute.xlu0 %2833
      %2835 = vrot.lane.b32.xlu0 %v2757, 16
      %v2836 = vpop.permute.xlu0 %2835
      %2837 = vrot.lane.b32.xlu0 %v2758, 16
      %v2838 = vpop.permute.xlu0 %2837
      %2839 = vrot.lane.b32.xlu0 %v2759, 16
      %v2840 = vpop.permute.xlu0 %2839
      %2841 = vrot.lane.b32.xlu0 %v2760, 16
      %v2842 = vpop.permute.xlu0 %2841
      %2843 = vrot.lane.b32.xlu0 %v2761, 16
      %v2844 = vpop.permute.xlu0 %2843
      %2845 = vrot.lane.b32.xlu0 %v2762, 16
      %v2846 = vpop.permute.xlu0 %2845
      %2847 = vrot.lane.b32.xlu0 %v2763, 16
      %v2848 = vpop.permute.xlu0 %2847
      %2849 = vrot.lane.b32.xlu0 %v2764, 16
      %v2850 = vpop.permute.xlu0 %2849
      %2851 = vrot.lane.b32.xlu0 %v2765, 16
      %v2852 = vpop.permute.xlu0 %2851
      %2853 = vrot.lane.b32.xlu0 %v2766, 16
      %v2854 = vpop.permute.xlu0 %2853
      %2855 = vrot.lane.b32.xlu0 %v2767, 16
      %v2856 = vpop.permute.xlu0 %2855
      %2857 = vrot.lane.b32.xlu0 %v2768, 16
      %v2858 = vpop.permute.xlu0 %2857
      %2859 = vrot.lane.b32.xlu0 %v2769, 16
      %v2860 = vpop.permute.xlu0 %2859
      %2861 = vrot.lane.b32.xlu0 %v2770, 16
      %v2862 = vpop.permute.xlu0 %2861
      %2863 = vrot.lane.b32.xlu0 %v2771, 16
      %v2864 = vpop.permute.xlu0 %2863
      %2865 = vrot.lane.b32.xlu0 %v2772, 16
      %v2866 = vpop.permute.xlu0 %2865
      %2867 = vrot.lane.b32.xlu0 %v2773, 16
      %v2868 = vpop.permute.xlu0 %2867
      %2869 = vrot.lane.b32.xlu0 %v2774, 16
      %v2870 = vpop.permute.xlu0 %2869
      %vm2903 = vcmask 195712
      %2904 = vst.msk [vmem:[#allocation5] sm:$0xff] %vm2903, %v2808
      %2905 = vst.msk [vmem:[#allocation5 + $0x8] sm:$0xff] %vm2903, %v2810
      %2906 = vst.msk [vmem:[#allocation5 + $0x10] sm:$0xff] %vm2903, %v2812
      %2907 = vst.msk [vmem:[#allocation5 + $0x18] sm:$0xff] %vm2903, %v2814
      %2908 = vst.msk [vmem:[#allocation5 + $0x20] sm:$0xff] %vm2903, %v2816
      %2909 = vst.msk [vmem:[#allocation5 + $0x28] sm:$0xff] %vm2903, %v2818
      %2910 = vst.msk [vmem:[#allocation5 + $0x30] sm:$0xff] %vm2903, %v2820
      %2911 = vst.msk [vmem:[#allocation5 + $0x38] sm:$0xff] %vm2903, %v2822
      %2912 = vst.msk [vmem:[#allocation5 + $0x40] sm:$0xff] %vm2903, %v2824
      %2913 = vst.msk [vmem:[#allocation5 + $0x48] sm:$0xff] %vm2903, %v2826
      %2914 = vst.msk [vmem:[#allocation5 + $0x50] sm:$0xff] %vm2903, %v2828
      %2915 = vst.msk [vmem:[#allocation5 + $0x58] sm:$0xff] %vm2903, %v2830
      %2916 = vst.msk [vmem:[#allocation5 + $0x60] sm:$0xff] %vm2903, %v2832
      %2917 = vst.msk [vmem:[#allocation5 + $0x68] sm:$0xff] %vm2903, %v2834
      %2918 = vst.msk [vmem:[#allocation5 + $0x70] sm:$0xff] %vm2903, %v2836
      %2919 = vst.msk [vmem:[#allocation5 + $0x78] sm:$0xff] %vm2903, %v2838
      %2920 = vst.msk [vmem:[#allocation5 + $0x80] sm:$0xff] %vm2903, %v2840
      %2921 = vst.msk [vmem:[#allocation5 + $0x88] sm:$0xff] %vm2903, %v2842
      %2922 = vst.msk [vmem:[#allocation5 + $0x90] sm:$0xff] %vm2903, %v2844
      %2923 = vst.msk [vmem:[#allocation5 + $0x98] sm:$0xff] %vm2903, %v2846
      %2924 = vst.msk [vmem:[#allocation5 + $0xa0] sm:$0xff] %vm2903, %v2848
      %2925 = vst.msk [vmem:[#allocation5 + $0xa8] sm:$0xff] %vm2903, %v2850
      %2926 = vst.msk [vmem:[#allocation5 + $0xb0] sm:$0xff] %vm2903, %v2852
      %2927 = vst.msk [vmem:[#allocation5 + $0xb8] sm:$0xff] %vm2903, %v2854
      %2928 = vst.msk [vmem:[#allocation5 + $0xc0] sm:$0xff] %vm2903, %v2856
      %2929 = vst.msk [vmem:[#allocation5 + $0xc8] sm:$0xff] %vm2903, %v2858
      %2930 = vst.msk [vmem:[#allocation5 + $0xd0] sm:$0xff] %vm2903, %v2860
      %2931 = vst.msk [vmem:[#allocation5 + $0xd8] sm:$0xff] %vm2903, %v2862
      %2932 = vst.msk [vmem:[#allocation5 + $0xe0] sm:$0xff] %vm2903, %v2864
      %2933 = vst.msk [vmem:[#allocation5 + $0xe8] sm:$0xff] %vm2903, %v2866
      %2934 = vst.msk [vmem:[#allocation5 + $0xf0] sm:$0xff] %vm2903, %v2868
      %2935 = vst.msk [vmem:[#allocation5 + $0xf8] sm:$0xff] %vm2903, %v2870
      %v2936 = vld [vmem:[%s2453] sm:$0xff]
      %v2937 = vld [vmem:[%s2453 + $0x8] sm:$0xff]
      %v2938 = vld [vmem:[%s2453 + $0x18] sm:$0xff]
      %v2939 = vld [vmem:[%s2453 + $0x20] sm:$0xff]
      %v2940 = vld [vmem:[%s2453 + $0x30] sm:$0xff]
      %v2941 = vld [vmem:[%s2453 + $0x38] sm:$0xff]
      %v2942 = vld [vmem:[%s2453 + $0x48] sm:$0xff]
      %v2943 = vld [vmem:[%s2453 + $0x50] sm:$0xff]
      %v2944 = vld [vmem:[%s2453 + $0x60] sm:$0xff]
      %v2945 = vld [vmem:[%s2453 + $0x68] sm:$0xff]
      %v2946 = vld [vmem:[%s2453 + $0x78] sm:$0xff]
      %v2947 = vld [vmem:[%s2453 + $0x80] sm:$0xff]
      %v2948 = vld [vmem:[%s2453 + $0x90] sm:$0xff]
      %v2949 = vld [vmem:[%s2453 + $0x98] sm:$0xff]
      %v2950 = vld [vmem:[%s2453 + $0xa8] sm:$0xff]
      %v2951 = vld [vmem:[%s2453 + $0xb0] sm:$0xff]
      %v2952 = vld [vmem:[%s2453 + $0xc0] sm:$0xff]
      %v2953 = vld [vmem:[%s2453 + $0xc8] sm:$0xff]
      %v2954 = vld [vmem:[%s2453 + $0xd8] sm:$0xff]
      %v2955 = vld [vmem:[%s2453 + $0xe0] sm:$0xff]
      %v2956 = vld [vmem:[%s2453 + $0xf0] sm:$0xff]
      %v2957 = vld [vmem:[%s2453 + $0xf8] sm:$0xff]
      %v2958 = vld [vmem:[%s2453 + $0x108] sm:$0xff]
      %v2959 = vld [vmem:[%s2453 + $0x110] sm:$0xff]
      %v2960 = vld [vmem:[%s2453 + $0x120] sm:$0xff]
      %v2961 = vld [vmem:[%s2453 + $0x128] sm:$0xff]
      %v2962 = vld [vmem:[%s2453 + $0x138] sm:$0xff]
      %v2963 = vld [vmem:[%s2453 + $0x140] sm:$0xff]
      %v2964 = vld [vmem:[%s2453 + $0x150] sm:$0xff]
      %v2965 = vld [vmem:[%s2453 + $0x158] sm:$0xff]
      %v2966 = vld [vmem:[%s2453 + $0x168] sm:$0xff]
      %v2967 = vld [vmem:[%s2453 + $0x170] sm:$0xff]
      %3000 = vrot.lane.b32.xlu0 %v2936, 24
      %v3001 = vpop.permute.xlu0 %3000
      %3002 = vrot.lane.b32.xlu0 %v2937, 24
      %v3003 = vpop.permute.xlu0 %3002
      %3004 = vrot.lane.b32.xlu0 %v2938, 24
      %v3005 = vpop.permute.xlu0 %3004
      %3006 = vrot.lane.b32.xlu0 %v2939, 24
      %v3007 = vpop.permute.xlu0 %3006
      %3008 = vrot.lane.b32.xlu0 %v2940, 24
      %v3009 = vpop.permute.xlu0 %3008
      %3010 = vrot.lane.b32.xlu0 %v2941, 24
      %v3011 = vpop.permute.xlu0 %3010
      %3012 = vrot.lane.b32.xlu0 %v2942, 24
      %v3013 = vpop.permute.xlu0 %3012
      %3014 = vrot.lane.b32.xlu0 %v2943, 24
      %v3015 = vpop.permute.xlu0 %3014
      %3016 = vrot.lane.b32.xlu0 %v2944, 24
      %v3017 = vpop.permute.xlu0 %3016
      %3018 = vrot.lane.b32.xlu0 %v2945, 24
      %v3019 = vpop.permute.xlu0 %3018
      %3020 = vrot.lane.b32.xlu0 %v2946, 24
      %v3021 = vpop.permute.xlu0 %3020
      %3022 = vrot.lane.b32.xlu0 %v2947, 24
      %v3023 = vpop.permute.xlu0 %3022
      %3024 = vrot.lane.b32.xlu0 %v2948, 24
      %v3025 = vpop.permute.xlu0 %3024
      %3026 = vrot.lane.b32.xlu0 %v2949, 24
      %v3027 = vpop.permute.xlu0 %3026
      %3028 = vrot.lane.b32.xlu0 %v2950, 24
      %v3029 = vpop.permute.xlu0 %3028
      %3030 = vrot.lane.b32.xlu0 %v2951, 24
      %v3031 = vpop.permute.xlu0 %3030
      %3032 = vrot.lane.b32.xlu0 %v2952, 24
      %v3033 = vpop.permute.xlu0 %3032
      %3034 = vrot.lane.b32.xlu0 %v2953, 24
      %v3035 = vpop.permute.xlu0 %3034
      %3036 = vrot.lane.b32.xlu0 %v2954, 24
      %v3037 = vpop.permute.xlu0 %3036
      %3038 = vrot.lane.b32.xlu0 %v2955, 24
      %v3039 = vpop.permute.xlu0 %3038
      %3040 = vrot.lane.b32.xlu0 %v2956, 24
      %v3041 = vpop.permute.xlu0 %3040
      %3042 = vrot.lane.b32.xlu0 %v2957, 24
      %v3043 = vpop.permute.xlu0 %3042
      %3044 = vrot.lane.b32.xlu0 %v2958, 24
      %v3045 = vpop.permute.xlu0 %3044
      %3046 = vrot.lane.b32.xlu0 %v2959, 24
      %v3047 = vpop.permute.xlu0 %3046
      %3048 = vrot.lane.b32.xlu0 %v2960, 24
      %v3049 = vpop.permute.xlu0 %3048
      %3050 = vrot.lane.b32.xlu0 %v2961, 24
      %v3051 = vpop.permute.xlu0 %3050
      %3052 = vrot.lane.b32.xlu0 %v2962, 24
      %v3053 = vpop.permute.xlu0 %3052
      %3054 = vrot.lane.b32.xlu0 %v2963, 24
      %v3055 = vpop.permute.xlu0 %3054
      %3056 = vrot.lane.b32.xlu0 %v2964, 24
      %v3057 = vpop.permute.xlu0 %3056
      %3058 = vrot.lane.b32.xlu0 %v2965, 24
      %v3059 = vpop.permute.xlu0 %3058
      %3060 = vrot.lane.b32.xlu0 %v2966, 24
      %v3061 = vpop.permute.xlu0 %3060
      %3062 = vrot.lane.b32.xlu0 %v2967, 24
      %v3063 = vpop.permute.xlu0 %3062
      %vm3096 = vcmask 261312
      %3097 = vst.msk [vmem:[#allocation5] sm:$0xff] %vm3096, %v3001
      %3098 = vst.msk [vmem:[#allocation5 + $0x8] sm:$0xff] %vm3096, %v3003
      %3099 = vst.msk [vmem:[#allocation5 + $0x10] sm:$0xff] %vm3096, %v3005
      %3100 = vst.msk [vmem:[#allocation5 + $0x18] sm:$0xff] %vm3096, %v3007
      %3101 = vst.msk [vmem:[#allocation5 + $0x20] sm:$0xff] %vm3096, %v3009
      %3102 = vst.msk [vmem:[#allocation5 + $0x28] sm:$0xff] %vm3096, %v3011
      %3103 = vst.msk [vmem:[#allocation5 + $0x30] sm:$0xff] %vm3096, %v3013
      %3104 = vst.msk [vmem:[#allocation5 + $0x38] sm:$0xff] %vm3096, %v3015
      %3105 = vst.msk [vmem:[#allocation5 + $0x40] sm:$0xff] %vm3096, %v3017
      %3106 = vst.msk [vmem:[#allocation5 + $0x48] sm:$0xff] %vm3096, %v3019
      %3107 = vst.msk [vmem:[#allocation5 + $0x50] sm:$0xff] %vm3096, %v3021
      %3108 = vst.msk [vmem:[#allocation5 + $0x58] sm:$0xff] %vm3096, %v3023
      %3109 = vst.msk [vmem:[#allocation5 + $0x60] sm:$0xff] %vm3096, %v3025
      %3110 = vst.msk [vmem:[#allocation5 + $0x68] sm:$0xff] %vm3096, %v3027
      %3111 = vst.msk [vmem:[#allocation5 + $0x70] sm:$0xff] %vm3096, %v3029
      %3112 = vst.msk [vmem:[#allocation5 + $0x78] sm:$0xff] %vm3096, %v3031
      %3113 = vst.msk [vmem:[#allocation5 + $0x80] sm:$0xff] %vm3096, %v3033
      %3114 = vst.msk [vmem:[#allocation5 + $0x88] sm:$0xff] %vm3096, %v3035
      %3115 = vst.msk [vmem:[#allocation5 + $0x90] sm:$0xff] %vm3096, %v3037
      %3116 = vst.msk [vmem:[#allocation5 + $0x98] sm:$0xff] %vm3096, %v3039
      %3117 = vst.msk [vmem:[#allocation5 + $0xa0] sm:$0xff] %vm3096, %v3041
      %3118 = vst.msk [vmem:[#allocation5 + $0xa8] sm:$0xff] %vm3096, %v3043
      %3119 = vst.msk [vmem:[#allocation5 + $0xb0] sm:$0xff] %vm3096, %v3045
      %3120 = vst.msk [vmem:[#allocation5 + $0xb8] sm:$0xff] %vm3096, %v3047
      %3121 = vst.msk [vmem:[#allocation5 + $0xc0] sm:$0xff] %vm3096, %v3049
      %3122 = vst.msk [vmem:[#allocation5 + $0xc8] sm:$0xff] %vm3096, %v3051
      %3123 = vst.msk [vmem:[#allocation5 + $0xd0] sm:$0xff] %vm3096, %v3053
      %3124 = vst.msk [vmem:[#allocation5 + $0xd8] sm:$0xff] %vm3096, %v3055
      %3125 = vst.msk [vmem:[#allocation5 + $0xe0] sm:$0xff] %vm3096, %v3057
      %3126 = vst.msk [vmem:[#allocation5 + $0xe8] sm:$0xff] %vm3096, %v3059
      %3127 = vst.msk [vmem:[#allocation5 + $0xf0] sm:$0xff] %vm3096, %v3061
      %3128 = vst.msk [vmem:[#allocation5 + $0xf8] sm:$0xff] %vm3096, %v3063
      %v3129 = vld [vmem:[%s2453 + $0x1] sm:$0xff]
      %v3130 = vld [vmem:[%s2453 + $0x9] sm:$0xff]
      %v3131 = vld [vmem:[%s2453 + $0x19] sm:$0xff]
      %v3132 = vld [vmem:[%s2453 + $0x21] sm:$0xff]
      %v3133 = vld [vmem:[%s2453 + $0x31] sm:$0xff]
      %v3134 = vld [vmem:[%s2453 + $0x39] sm:$0xff]
      %v3135 = vld [vmem:[%s2453 + $0x49] sm:$0xff]
      %v3136 = vld [vmem:[%s2453 + $0x51] sm:$0xff]
      %v3137 = vld [vmem:[%s2453 + $0x61] sm:$0xff]
      %v3138 = vld [vmem:[%s2453 + $0x69] sm:$0xff]
      %v3139 = vld [vmem:[%s2453 + $0x79] sm:$0xff]
      %v3140 = vld [vmem:[%s2453 + $0x81] sm:$0xff]
      %v3141 = vld [vmem:[%s2453 + $0x91] sm:$0xff]
      %v3142 = vld [vmem:[%s2453 + $0x99] sm:$0xff]
      %v3143 = vld [vmem:[%s2453 + $0xa9] sm:$0xff]
      %v3144 = vld [vmem:[%s2453 + $0xb1] sm:$0xff]
      %v3145 = vld [vmem:[%s2453 + $0xc1] sm:$0xff]
      %v3146 = vld [vmem:[%s2453 + $0xc9] sm:$0xff]
      %v3147 = vld [vmem:[%s2453 + $0xd9] sm:$0xff]
      %v3148 = vld [vmem:[%s2453 + $0xe1] sm:$0xff]
      %v3149 = vld [vmem:[%s2453 + $0xf1] sm:$0xff]
      %v3150 = vld [vmem:[%s2453 + $0xf9] sm:$0xff]
      %v3151 = vld [vmem:[%s2453 + $0x109] sm:$0xff]
      %v3152 = vld [vmem:[%s2453 + $0x111] sm:$0xff]
      %v3153 = vld [vmem:[%s2453 + $0x121] sm:$0xff]
      %v3154 = vld [vmem:[%s2453 + $0x129] sm:$0xff]
      %v3155 = vld [vmem:[%s2453 + $0x139] sm:$0xff]
      %v3156 = vld [vmem:[%s2453 + $0x141] sm:$0xff]
      %v3157 = vld [vmem:[%s2453 + $0x151] sm:$0xff]
      %v3158 = vld [vmem:[%s2453 + $0x159] sm:$0xff]
      %v3159 = vld [vmem:[%s2453 + $0x169] sm:$0xff]
      %v3160 = vld [vmem:[%s2453 + $0x171] sm:$0xff]
      %3193 = vrot.lane.b32.xlu0 %v3129, 32
      %v3194 = vpop.permute.xlu0 %3193
      %3195 = vrot.lane.b32.xlu0 %v3130, 32
      %v3196 = vpop.permute.xlu0 %3195
      %3197 = vrot.lane.b32.xlu0 %v3131, 32
      %v3198 = vpop.permute.xlu0 %3197
      %3199 = vrot.lane.b32.xlu0 %v3132, 32
      %v3200 = vpop.permute.xlu0 %3199
      %3201 = vrot.lane.b32.xlu0 %v3133, 32
      %v3202 = vpop.permute.xlu0 %3201
      %3203 = vrot.lane.b32.xlu0 %v3134, 32
      %v3204 = vpop.permute.xlu0 %3203
      %3205 = vrot.lane.b32.xlu0 %v3135, 32
      %v3206 = vpop.permute.xlu0 %3205
      %3207 = vrot.lane.b32.xlu0 %v3136, 32
      %v3208 = vpop.permute.xlu0 %3207
      %3209 = vrot.lane.b32.xlu0 %v3137, 32
      %v3210 = vpop.permute.xlu0 %3209
      %3211 = vrot.lane.b32.xlu0 %v3138, 32
      %v3212 = vpop.permute.xlu0 %3211
      %3213 = vrot.lane.b32.xlu0 %v3139, 32
      %v3214 = vpop.permute.xlu0 %3213
      %3215 = vrot.lane.b32.xlu0 %v3140, 32
      %v3216 = vpop.permute.xlu0 %3215
      %3217 = vrot.lane.b32.xlu0 %v3141, 32
      %v3218 = vpop.permute.xlu0 %3217
      %3219 = vrot.lane.b32.xlu0 %v3142, 32
      %v3220 = vpop.permute.xlu0 %3219
      %3221 = vrot.lane.b32.xlu0 %v3143, 32
      %v3222 = vpop.permute.xlu0 %3221
      %3223 = vrot.lane.b32.xlu0 %v3144, 32
      %v3224 = vpop.permute.xlu0 %3223
      %3225 = vrot.lane.b32.xlu0 %v3145, 32
      %v3226 = vpop.permute.xlu0 %3225
      %3227 = vrot.lane.b32.xlu0 %v3146, 32
      %v3228 = vpop.permute.xlu0 %3227
      %3229 = vrot.lane.b32.xlu0 %v3147, 32
      %v3230 = vpop.permute.xlu0 %3229
      %3231 = vrot.lane.b32.xlu0 %v3148, 32
      %v3232 = vpop.permute.xlu0 %3231
      %3233 = vrot.lane.b32.xlu0 %v3149, 32
      %v3234 = vpop.permute.xlu0 %3233
      %3235 = vrot.lane.b32.xlu0 %v3150, 32
      %v3236 = vpop.permute.xlu0 %3235
      %3237 = vrot.lane.b32.xlu0 %v3151, 32
      %v3238 = vpop.permute.xlu0 %3237
      %3239 = vrot.lane.b32.xlu0 %v3152, 32
      %v3240 = vpop.permute.xlu0 %3239
      %3241 = vrot.lane.b32.xlu0 %v3153, 32
      %v3242 = vpop.permute.xlu0 %3241
      %3243 = vrot.lane.b32.xlu0 %v3154, 32
      %v3244 = vpop.permute.xlu0 %3243
      %3245 = vrot.lane.b32.xlu0 %v3155, 32
      %v3246 = vpop.permute.xlu0 %3245
      %3247 = vrot.lane.b32.xlu0 %v3156, 32
      %v3248 = vpop.permute.xlu0 %3247
      %3249 = vrot.lane.b32.xlu0 %v3157, 32
      %v3250 = vpop.permute.xlu0 %3249
      %3251 = vrot.lane.b32.xlu0 %v3158, 32
      %v3252 = vpop.permute.xlu0 %3251
      %3253 = vrot.lane.b32.xlu0 %v3159, 32
      %v3254 = vpop.permute.xlu0 %3253
      %3255 = vrot.lane.b32.xlu0 %v3160, 32
      %v3256 = vpop.permute.xlu0 %3255
      %vm3289 = vcmask 326912
      %3290 = vst.msk [vmem:[#allocation5] sm:$0xff] %vm3289, %v3194
      %3291 = vst.msk [vmem:[#allocation5 + $0x8] sm:$0xff] %vm3289, %v3196
      %3292 = vst.msk [vmem:[#allocation5 + $0x10] sm:$0xff] %vm3289, %v3198
      %3293 = vst.msk [vmem:[#allocation5 + $0x18] sm:$0xff] %vm3289, %v3200
      %3294 = vst.msk [vmem:[#allocation5 + $0x20] sm:$0xff] %vm3289, %v3202
      %3295 = vst.msk [vmem:[#allocation5 + $0x28] sm:$0xff] %vm3289, %v3204
      %3296 = vst.msk [vmem:[#allocation5 + $0x30] sm:$0xff] %vm3289, %v3206
      %3297 = vst.msk [vmem:[#allocation5 + $0x38] sm:$0xff] %vm3289, %v3208
      %3298 = vst.msk [vmem:[#allocation5 + $0x40] sm:$0xff] %vm3289, %v3210
      %3299 = vst.msk [vmem:[#allocation5 + $0x48] sm:$0xff] %vm3289, %v3212
      %3300 = vst.msk [vmem:[#allocation5 + $0x50] sm:$0xff] %vm3289, %v3214
      %3301 = vst.msk [vmem:[#allocation5 + $0x58] sm:$0xff] %vm3289, %v3216
      %3302 = vst.msk [vmem:[#allocation5 + $0x60] sm:$0xff] %vm3289, %v3218
      %3303 = vst.msk [vmem:[#allocation5 + $0x68] sm:$0xff] %vm3289, %v3220
      %3304 = vst.msk [vmem:[#allocation5 + $0x70] sm:$0xff] %vm3289, %v3222
      %3305 = vst.msk [vmem:[#allocation5 + $0x78] sm:$0xff] %vm3289, %v3224
      %3306 = vst.msk [vmem:[#allocation5 + $0x80] sm:$0xff] %vm3289, %v3226
      %3307 = vst.msk [vmem:[#allocation5 + $0x88] sm:$0xff] %vm3289, %v3228
      %3308 = vst.msk [vmem:[#allocation5 + $0x90] sm:$0xff] %vm3289, %v3230
      %3309 = vst.msk [vmem:[#allocation5 + $0x98] sm:$0xff] %vm3289, %v3232
      %3310 = vst.msk [vmem:[#allocation5 + $0xa0] sm:$0xff] %vm3289, %v3234
      %3311 = vst.msk [vmem:[#allocation5 + $0xa8] sm:$0xff] %vm3289, %v3236
      %3312 = vst.msk [vmem:[#allocation5 + $0xb0] sm:$0xff] %vm3289, %v3238
      %3313 = vst.msk [vmem:[#allocation5 + $0xb8] sm:$0xff] %vm3289, %v3240
      %3314 = vst.msk [vmem:[#allocation5 + $0xc0] sm:$0xff] %vm3289, %v3242
      %3315 = vst.msk [vmem:[#allocation5 + $0xc8] sm:$0xff] %vm3289, %v3244
      %3316 = vst.msk [vmem:[#allocation5 + $0xd0] sm:$0xff] %vm3289, %v3246
      %3317 = vst.msk [vmem:[#allocation5 + $0xd8] sm:$0xff] %vm3289, %v3248
      %3318 = vst.msk [vmem:[#allocation5 + $0xe0] sm:$0xff] %vm3289, %v3250
      %3319 = vst.msk [vmem:[#allocation5 + $0xe8] sm:$0xff] %vm3289, %v3252
      %3320 = vst.msk [vmem:[#allocation5 + $0xf0] sm:$0xff] %vm3289, %v3254
      %3321 = vst.msk [vmem:[#allocation5 + $0xf8] sm:$0xff] %vm3289, %v3256
      %v3322 = vld [vmem:[%s2453 + $0x2] sm:$0xff]
      %v3323 = vld [vmem:[%s2453 + $0xa] sm:$0xff]
      %v3324 = vld [vmem:[%s2453 + $0x1a] sm:$0xff]
      %v3325 = vld [vmem:[%s2453 + $0x22] sm:$0xff]
      %v3326 = vld [vmem:[%s2453 + $0x32] sm:$0xff]
      %v3327 = vld [vmem:[%s2453 + $0x3a] sm:$0xff]
      %v3328 = vld [vmem:[%s2453 + $0x4a] sm:$0xff]
      %v3329 = vld [vmem:[%s2453 + $0x52] sm:$0xff]
      %v3330 = vld [vmem:[%s2453 + $0x62] sm:$0xff]
      %v3331 = vld [vmem:[%s2453 + $0x6a] sm:$0xff]
      %v3332 = vld [vmem:[%s2453 + $0x7a] sm:$0xff]
      %v3333 = vld [vmem:[%s2453 + $0x82] sm:$0xff]
      %v3334 = vld [vmem:[%s2453 + $0x92] sm:$0xff]
      %v3335 = vld [vmem:[%s2453 + $0x9a] sm:$0xff]
      %v3336 = vld [vmem:[%s2453 + $0xaa] sm:$0xff]
      %v3337 = vld [vmem:[%s2453 + $0xb2] sm:$0xff]
      %v3338 = vld [vmem:[%s2453 + $0xc2] sm:$0xff]
      %v3339 = vld [vmem:[%s2453 + $0xca] sm:$0xff]
      %v3340 = vld [vmem:[%s2453 + $0xda] sm:$0xff]
      %v3341 = vld [vmem:[%s2453 + $0xe2] sm:$0xff]
      %v3342 = vld [vmem:[%s2453 + $0xf2] sm:$0xff]
      %v3343 = vld [vmem:[%s2453 + $0xfa] sm:$0xff]
      %v3344 = vld [vmem:[%s2453 + $0x10a] sm:$0xff]
      %v3345 = vld [vmem:[%s2453 + $0x112] sm:$0xff]
      %v3346 = vld [vmem:[%s2453 + $0x122] sm:$0xff]
      %v3347 = vld [vmem:[%s2453 + $0x12a] sm:$0xff]
      %v3348 = vld [vmem:[%s2453 + $0x13a] sm:$0xff]
      %v3349 = vld [vmem:[%s2453 + $0x142] sm:$0xff]
      %v3350 = vld [vmem:[%s2453 + $0x152] sm:$0xff]
      %v3351 = vld [vmem:[%s2453 + $0x15a] sm:$0xff]
      %v3352 = vld [vmem:[%s2453 + $0x16a] sm:$0xff]
      %v3353 = vld [vmem:[%s2453 + $0x172] sm:$0xff]
      %3386 = vrot.lane.b32.xlu0 %v3322, 40
      %v3387 = vpop.permute.xlu0 %3386
      %3388 = vrot.lane.b32.xlu0 %v3323, 40
      %v3389 = vpop.permute.xlu0 %3388
      %3390 = vrot.lane.b32.xlu0 %v3324, 40
      %v3391 = vpop.permute.xlu0 %3390
      %3392 = vrot.lane.b32.xlu0 %v3325, 40
      %v3393 = vpop.permute.xlu0 %3392
      %3394 = vrot.lane.b32.xlu0 %v3326, 40
      %v3395 = vpop.permute.xlu0 %3394
      %3396 = vrot.lane.b32.xlu0 %v3327, 40
      %v3397 = vpop.permute.xlu0 %3396
      %3398 = vrot.lane.b32.xlu0 %v3328, 40
      %v3399 = vpop.permute.xlu0 %3398
      %3400 = vrot.lane.b32.xlu0 %v3329, 40
      %v3401 = vpop.permute.xlu0 %3400
      %3402 = vrot.lane.b32.xlu0 %v3330, 40
      %v3403 = vpop.permute.xlu0 %3402
      %3404 = vrot.lane.b32.xlu0 %v3331, 40
      %v3405 = vpop.permute.xlu0 %3404
      %3406 = vrot.lane.b32.xlu0 %v3332, 40
      %v3407 = vpop.permute.xlu0 %3406
      %3408 = vrot.lane.b32.xlu0 %v3333, 40
      %v3409 = vpop.permute.xlu0 %3408
      %3410 = vrot.lane.b32.xlu0 %v3334, 40
      %v3411 = vpop.permute.xlu0 %3410
      %3412 = vrot.lane.b32.xlu0 %v3335, 40
      %v3413 = vpop.permute.xlu0 %3412
      %3414 = vrot.lane.b32.xlu0 %v3336, 40
      %v3415 = vpop.permute.xlu0 %3414
      %3416 = vrot.lane.b32.xlu0 %v3337, 40
      %v3417 = vpop.permute.xlu0 %3416
      %3418 = vrot.lane.b32.xlu0 %v3338, 40
      %v3419 = vpop.permute.xlu0 %3418
      %3420 = vrot.lane.b32.xlu0 %v3339, 40
      %v3421 = vpop.permute.xlu0 %3420
      %3422 = vrot.lane.b32.xlu0 %v3340, 40
      %v3423 = vpop.permute.xlu0 %3422
      %3424 = vrot.lane.b32.xlu0 %v3341, 40
      %v3425 = vpop.permute.xlu0 %3424
      %3426 = vrot.lane.b32.xlu0 %v3342, 40
      %v3427 = vpop.permute.xlu0 %3426
      %3428 = vrot.lane.b32.xlu0 %v3343, 40
      %v3429 = vpop.permute.xlu0 %3428
      %3430 = vrot.lane.b32.xlu0 %v3344, 40
      %v3431 = vpop.permute.xlu0 %3430
      %3432 = vrot.lane.b32.xlu0 %v3345, 40
      %v3433 = vpop.permute.xlu0 %3432
      %3434 = vrot.lane.b32.xlu0 %v3346, 40
      %v3435 = vpop.permute.xlu0 %3434
      %3436 = vrot.lane.b32.xlu0 %v3347, 40
      %v3437 = vpop.permute.xlu0 %3436
      %3438 = vrot.lane.b32.xlu0 %v3348, 40
      %v3439 = vpop.permute.xlu0 %3438
      %3440 = vrot.lane.b32.xlu0 %v3349, 40
      %v3441 = vpop.permute.xlu0 %3440
      %3442 = vrot.lane.b32.xlu0 %v3350, 40
      %v3443 = vpop.permute.xlu0 %3442
      %3444 = vrot.lane.b32.xlu0 %v3351, 40
      %v3445 = vpop.permute.xlu0 %3444
      %3446 = vrot.lane.b32.xlu0 %v3352, 40
      %v3447 = vpop.permute.xlu0 %3446
      %3448 = vrot.lane.b32.xlu0 %v3353, 40
      %v3449 = vpop.permute.xlu0 %3448
      %vm3482 = vcmask 392512
      %3483 = vst.msk [vmem:[#allocation5] sm:$0xff] %vm3482, %v3387
      %3484 = vst.msk [vmem:[#allocation5 + $0x8] sm:$0xff] %vm3482, %v3389
      %3485 = vst.msk [vmem:[#allocation5 + $0x10] sm:$0xff] %vm3482, %v3391
      %3486 = vst.msk [vmem:[#allocation5 + $0x18] sm:$0xff] %vm3482, %v3393
      %3487 = vst.msk [vmem:[#allocation5 + $0x20] sm:$0xff] %vm3482, %v3395
      %3488 = vst.msk [vmem:[#allocation5 + $0x28] sm:$0xff] %vm3482, %v3397
      %3489 = vst.msk [vmem:[#allocation5 + $0x30] sm:$0xff] %vm3482, %v3399
      %3490 = vst.msk [vmem:[#allocation5 + $0x38] sm:$0xff] %vm3482, %v3401
      %3491 = vst.msk [vmem:[#allocation5 + $0x40] sm:$0xff] %vm3482, %v3403
      %3492 = vst.msk [vmem:[#allocation5 + $0x48] sm:$0xff] %vm3482, %v3405
      %3493 = vst.msk [vmem:[#allocation5 + $0x50] sm:$0xff] %vm3482, %v3407
      %3494 = vst.msk [vmem:[#allocation5 + $0x58] sm:$0xff] %vm3482, %v3409
      %3495 = vst.msk [vmem:[#allocation5 + $0x60] sm:$0xff] %vm3482, %v3411
      %3496 = vst.msk [vmem:[#allocation5 + $0x68] sm:$0xff] %vm3482, %v3413
      %3497 = vst.msk [vmem:[#allocation5 + $0x70] sm:$0xff] %vm3482, %v3415
      %3498 = vst.msk [vmem:[#allocation5 + $0x78] sm:$0xff] %vm3482, %v3417
      %3499 = vst.msk [vmem:[#allocation5 + $0x80] sm:$0xff] %vm3482, %v3419
      %3500 = vst.msk [vmem:[#allocation5 + $0x88] sm:$0xff] %vm3482, %v3421
      %3501 = vst.msk [vmem:[#allocation5 + $0x90] sm:$0xff] %vm3482, %v3423
      %3502 = vst.msk [vmem:[#allocation5 + $0x98] sm:$0xff] %vm3482, %v3425
      %3503 = vst.msk [vmem:[#allocation5 + $0xa0] sm:$0xff] %vm3482, %v3427
      %3504 = vst.msk [vmem:[#allocation5 + $0xa8] sm:$0xff] %vm3482, %v3429
      %3505 = vst.msk [vmem:[#allocation5 + $0xb0] sm:$0xff] %vm3482, %v3431
      %3506 = vst.msk [vmem:[#allocation5 + $0xb8] sm:$0xff] %vm3482, %v3433
      %3507 = vst.msk [vmem:[#allocation5 + $0xc0] sm:$0xff] %vm3482, %v3435
      %3508 = vst.msk [vmem:[#allocation5 + $0xc8] sm:$0xff] %vm3482, %v3437
      %3509 = vst.msk [vmem:[#allocation5 + $0xd0] sm:$0xff] %vm3482, %v3439
      %3510 = vst.msk [vmem:[#allocation5 + $0xd8] sm:$0xff] %vm3482, %v3441
      %3511 = vst.msk [vmem:[#allocation5 + $0xe0] sm:$0xff] %vm3482, %v3443
      %3512 = vst.msk [vmem:[#allocation5 + $0xe8] sm:$0xff] %vm3482, %v3445
      %3513 = vst.msk [vmem:[#allocation5 + $0xf0] sm:$0xff] %vm3482, %v3447
      %3514 = vst.msk [vmem:[#allocation5 + $0xf8] sm:$0xff] %vm3482, %v3449
      %s3515 = scalar_lea.vmem [#allocation3], 48
      %v3516 = vld [vmem:[%s3515] sm:$0xff]
      %v3517 = vld [vmem:[%s3515 + $0x8] sm:$0xff]
      %v3518 = vld [vmem:[%s3515 + $0x18] sm:$0xff]
      %v3519 = vld [vmem:[%s3515 + $0x20] sm:$0xff]
      %v3520 = vld [vmem:[%s3515 + $0x30] sm:$0xff]
      %v3521 = vld [vmem:[%s3515 + $0x38] sm:$0xff]
      %v3522 = vld [vmem:[%s3515 + $0x48] sm:$0xff]
      %v3523 = vld [vmem:[%s3515 + $0x50] sm:$0xff]
      %v3524 = vld [vmem:[%s3515 + $0x60] sm:$0xff]
      %v3525 = vld [vmem:[%s3515 + $0x68] sm:$0xff]
      %v3526 = vld [vmem:[%s3515 + $0x78] sm:$0xff]
      %v3527 = vld [vmem:[%s3515 + $0x80] sm:$0xff]
      %v3528 = vld [vmem:[%s3515 + $0x90] sm:$0xff]
      %v3529 = vld [vmem:[%s3515 + $0x98] sm:$0xff]
      %v3530 = vld [vmem:[%s3515 + $0xa8] sm:$0xff]
      %v3531 = vld [vmem:[%s3515 + $0xb0] sm:$0xff]
      %v3532 = vld [vmem:[%s3515 + $0xc0] sm:$0xff]
      %v3533 = vld [vmem:[%s3515 + $0xc8] sm:$0xff]
      %v3534 = vld [vmem:[%s3515 + $0xd8] sm:$0xff]
      %v3535 = vld [vmem:[%s3515 + $0xe0] sm:$0xff]
      %v3536 = vld [vmem:[%s3515 + $0xf0] sm:$0xff]
      %v3537 = vld [vmem:[%s3515 + $0xf8] sm:$0xff]
      %v3538 = vld [vmem:[%s3515 + $0x108] sm:$0xff]
      %v3539 = vld [vmem:[%s3515 + $0x110] sm:$0xff]
      %v3540 = vld [vmem:[%s3515 + $0x120] sm:$0xff]
      %v3541 = vld [vmem:[%s3515 + $0x128] sm:$0xff]
      %v3542 = vld [vmem:[%s3515 + $0x138] sm:$0xff]
      %v3543 = vld [vmem:[%s3515 + $0x140] sm:$0xff]
      %v3544 = vld [vmem:[%s3515 + $0x150] sm:$0xff]
      %v3545 = vld [vmem:[%s3515 + $0x158] sm:$0xff]
      %v3546 = vld [vmem:[%s3515 + $0x168] sm:$0xff]
      %v3547 = vld [vmem:[%s3515 + $0x170] sm:$0xff]
      %3580 = vrot.lane.b32.xlu0 %v3516, 48
      %v3581 = vpop.permute.xlu0 %3580
      %3582 = vrot.lane.b32.xlu0 %v3517, 48
      %v3583 = vpop.permute.xlu0 %3582
      %3584 = vrot.lane.b32.xlu0 %v3518, 48
      %v3585 = vpop.permute.xlu0 %3584
      %3586 = vrot.lane.b32.xlu0 %v3519, 48
      %v3587 = vpop.permute.xlu0 %3586
      %3588 = vrot.lane.b32.xlu0 %v3520, 48
      %v3589 = vpop.permute.xlu0 %3588
      %3590 = vrot.lane.b32.xlu0 %v3521, 48
      %v3591 = vpop.permute.xlu0 %3590
      %3592 = vrot.lane.b32.xlu0 %v3522, 48
      %v3593 = vpop.permute.xlu0 %3592
      %3594 = vrot.lane.b32.xlu0 %v3523, 48
      %v3595 = vpop.permute.xlu0 %3594
      %3596 = vrot.lane.b32.xlu0 %v3524, 48
      %v3597 = vpop.permute.xlu0 %3596
      %3598 = vrot.lane.b32.xlu0 %v3525, 48
      %v3599 = vpop.permute.xlu0 %3598
      %3600 = vrot.lane.b32.xlu0 %v3526, 48
      %v3601 = vpop.permute.xlu0 %3600
      %3602 = vrot.lane.b32.xlu0 %v3527, 48
      %v3603 = vpop.permute.xlu0 %3602
      %3604 = vrot.lane.b32.xlu0 %v3528, 48
      %v3605 = vpop.permute.xlu0 %3604
      %3606 = vrot.lane.b32.xlu0 %v3529, 48
      %v3607 = vpop.permute.xlu0 %3606
      %3608 = vrot.lane.b32.xlu0 %v3530, 48
      %v3609 = vpop.permute.xlu0 %3608
      %3610 = vrot.lane.b32.xlu0 %v3531, 48
      %v3611 = vpop.permute.xlu0 %3610
      %3612 = vrot.lane.b32.xlu0 %v3532, 48
      %v3613 = vpop.permute.xlu0 %3612
      %3614 = vrot.lane.b32.xlu0 %v3533, 48
      %v3615 = vpop.permute.xlu0 %3614
      %3616 = vrot.lane.b32.xlu0 %v3534, 48
      %v3617 = vpop.permute.xlu0 %3616
      %3618 = vrot.lane.b32.xlu0 %v3535, 48
      %v3619 = vpop.permute.xlu0 %3618
      %3620 = vrot.lane.b32.xlu0 %v3536, 48
      %v3621 = vpop.permute.xlu0 %3620
      %3622 = vrot.lane.b32.xlu0 %v3537, 48
      %v3623 = vpop.permute.xlu0 %3622
      %3624 = vrot.lane.b32.xlu0 %v3538, 48
      %v3625 = vpop.permute.xlu0 %3624
      %3626 = vrot.lane.b32.xlu0 %v3539, 48
      %v3627 = vpop.permute.xlu0 %3626
      %3628 = vrot.lane.b32.xlu0 %v3540, 48
      %v3629 = vpop.permute.xlu0 %3628
      %3630 = vrot.lane.b32.xlu0 %v3541, 48
      %v3631 = vpop.permute.xlu0 %3630
      %3632 = vrot.lane.b32.xlu0 %v3542, 48
      %v3633 = vpop.permute.xlu0 %3632
      %3634 = vrot.lane.b32.xlu0 %v3543, 48
      %v3635 = vpop.permute.xlu0 %3634
      %3636 = vrot.lane.b32.xlu0 %v3544, 48
      %v3637 = vpop.permute.xlu0 %3636
      %3638 = vrot.lane.b32.xlu0 %v3545, 48
      %v3639 = vpop.permute.xlu0 %3638
      %3640 = vrot.lane.b32.xlu0 %v3546, 48
      %v3641 = vpop.permute.xlu0 %3640
      %3642 = vrot.lane.b32.xlu0 %v3547, 48
      %v3643 = vpop.permute.xlu0 %3642
      %vm3676 = vcmask 458112
      %3677 = vst.msk [vmem:[#allocation5] sm:$0xff] %vm3676, %v3581
      %3678 = vst.msk [vmem:[#allocation5 + $0x8] sm:$0xff] %vm3676, %v3583
      %3679 = vst.msk [vmem:[#allocation5 + $0x10] sm:$0xff] %vm3676, %v3585
      %3680 = vst.msk [vmem:[#allocation5 + $0x18] sm:$0xff] %vm3676, %v3587
      %3681 = vst.msk [vmem:[#allocation5 + $0x20] sm:$0xff] %vm3676, %v3589
      %3682 = vst.msk [vmem:[#allocation5 + $0x28] sm:$0xff] %vm3676, %v3591
      %3683 = vst.msk [vmem:[#allocation5 + $0x30] sm:$0xff] %vm3676, %v3593
      %3684 = vst.msk [vmem:[#allocation5 + $0x38] sm:$0xff] %vm3676, %v3595
      %3685 = vst.msk [vmem:[#allocation5 + $0x40] sm:$0xff] %vm3676, %v3597
      %3686 = vst.msk [vmem:[#allocation5 + $0x48] sm:$0xff] %vm3676, %v3599
      %3687 = vst.msk [vmem:[#allocation5 + $0x50] sm:$0xff] %vm3676, %v3601
      %3688 = vst.msk [vmem:[#allocation5 + $0x58] sm:$0xff] %vm3676, %v3603
      %3689 = vst.msk [vmem:[#allocation5 + $0x60] sm:$0xff] %vm3676, %v3605
      %3690 = vst.msk [vmem:[#allocation5 + $0x68] sm:$0xff] %vm3676, %v3607
      %3691 = vst.msk [vmem:[#allocation5 + $0x70] sm:$0xff] %vm3676, %v3609
      %3692 = vst.msk [vmem:[#allocation5 + $0x78] sm:$0xff] %vm3676, %v3611
      %3693 = vst.msk [vmem:[#allocation5 + $0x80] sm:$0xff] %vm3676, %v3613
      %3694 = vst.msk [vmem:[#allocation5 + $0x88] sm:$0xff] %vm3676, %v3615
      %3695 = vst.msk [vmem:[#allocation5 + $0x90] sm:$0xff] %vm3676, %v3617
      %3696 = vst.msk [vmem:[#allocation5 + $0x98] sm:$0xff] %vm3676, %v3619
      %3697 = vst.msk [vmem:[#allocation5 + $0xa0] sm:$0xff] %vm3676, %v3621
      %3698 = vst.msk [vmem:[#allocation5 + $0xa8] sm:$0xff] %vm3676, %v3623
      %3699 = vst.msk [vmem:[#allocation5 + $0xb0] sm:$0xff] %vm3676, %v3625
      %3700 = vst.msk [vmem:[#allocation5 + $0xb8] sm:$0xff] %vm3676, %v3627
      %3701 = vst.msk [vmem:[#allocation5 + $0xc0] sm:$0xff] %vm3676, %v3629
      %3702 = vst.msk [vmem:[#allocation5 + $0xc8] sm:$0xff] %vm3676, %v3631
      %3703 = vst.msk [vmem:[#allocation5 + $0xd0] sm:$0xff] %vm3676, %v3633
      %3704 = vst.msk [vmem:[#allocation5 + $0xd8] sm:$0xff] %vm3676, %v3635
      %3705 = vst.msk [vmem:[#allocation5 + $0xe0] sm:$0xff] %vm3676, %v3637
      %3706 = vst.msk [vmem:[#allocation5 + $0xe8] sm:$0xff] %vm3676, %v3639
      %3707 = vst.msk [vmem:[#allocation5 + $0xf0] sm:$0xff] %vm3676, %v3641
      %3708 = vst.msk [vmem:[#allocation5 + $0xf8] sm:$0xff] %vm3676, %v3643
      %v3709 = vld [vmem:[%s3515 + $0x1] sm:$0xff]
      %v3710 = vld [vmem:[%s3515 + $0x9] sm:$0xff]
      %v3711 = vld [vmem:[%s3515 + $0x19] sm:$0xff]
      %v3712 = vld [vmem:[%s3515 + $0x21] sm:$0xff]
      %v3713 = vld [vmem:[%s3515 + $0x31] sm:$0xff]
      %v3714 = vld [vmem:[%s3515 + $0x39] sm:$0xff]
      %v3715 = vld [vmem:[%s3515 + $0x49] sm:$0xff]
      %v3716 = vld [vmem:[%s3515 + $0x51] sm:$0xff]
      %v3717 = vld [vmem:[%s3515 + $0x61] sm:$0xff]
      %v3718 = vld [vmem:[%s3515 + $0x69] sm:$0xff]
      %v3719 = vld [vmem:[%s3515 + $0x79] sm:$0xff]
      %v3720 = vld [vmem:[%s3515 + $0x81] sm:$0xff]
      %v3721 = vld [vmem:[%s3515 + $0x91] sm:$0xff]
      %v3722 = vld [vmem:[%s3515 + $0x99] sm:$0xff]
      %v3723 = vld [vmem:[%s3515 + $0xa9] sm:$0xff]
      %v3724 = vld [vmem:[%s3515 + $0xb1] sm:$0xff]
      %v3725 = vld [vmem:[%s3515 + $0xc1] sm:$0xff]
      %v3726 = vld [vmem:[%s3515 + $0xc9] sm:$0xff]
      %v3727 = vld [vmem:[%s3515 + $0xd9] sm:$0xff]
      %v3728 = vld [vmem:[%s3515 + $0xe1] sm:$0xff]
      %v3729 = vld [vmem:[%s3515 + $0xf1] sm:$0xff]
      %v3730 = vld [vmem:[%s3515 + $0xf9] sm:$0xff]
      %v3731 = vld [vmem:[%s3515 + $0x109] sm:$0xff]
      %v3732 = vld [vmem:[%s3515 + $0x111] sm:$0xff]
      %v3733 = vld [vmem:[%s3515 + $0x121] sm:$0xff]
      %v3734 = vld [vmem:[%s3515 + $0x129] sm:$0xff]
      %v3735 = vld [vmem:[%s3515 + $0x139] sm:$0xff]
      %v3736 = vld [vmem:[%s3515 + $0x141] sm:$0xff]
      %v3737 = vld [vmem:[%s3515 + $0x151] sm:$0xff]
      %v3738 = vld [vmem:[%s3515 + $0x159] sm:$0xff]
      %v3739 = vld [vmem:[%s3515 + $0x169] sm:$0xff]
      %v3740 = vld [vmem:[%s3515 + $0x171] sm:$0xff]
      %3773 = vrot.lane.b32.xlu0 %v3709, 56
      %v3774 = vpop.permute.xlu0 %3773
      %3775 = vrot.lane.b32.xlu0 %v3710, 56
      %v3776 = vpop.permute.xlu0 %3775
      %3777 = vrot.lane.b32.xlu0 %v3711, 56
      %v3778 = vpop.permute.xlu0 %3777
      %3779 = vrot.lane.b32.xlu0 %v3712, 56
      %v3780 = vpop.permute.xlu0 %3779
      %3781 = vrot.lane.b32.xlu0 %v3713, 56
      %v3782 = vpop.permute.xlu0 %3781
      %3783 = vrot.lane.b32.xlu0 %v3714, 56
      %v3784 = vpop.permute.xlu0 %3783
      %3785 = vrot.lane.b32.xlu0 %v3715, 56
      %v3786 = vpop.permute.xlu0 %3785
      %3787 = vrot.lane.b32.xlu0 %v3716, 56
      %v3788 = vpop.permute.xlu0 %3787
      %3789 = vrot.lane.b32.xlu0 %v3717, 56
      %v3790 = vpop.permute.xlu0 %3789
      %3791 = vrot.lane.b32.xlu0 %v3718, 56
      %v3792 = vpop.permute.xlu0 %3791
      %3793 = vrot.lane.b32.xlu0 %v3719, 56
      %v3794 = vpop.permute.xlu0 %3793
      %3795 = vrot.lane.b32.xlu0 %v3720, 56
      %v3796 = vpop.permute.xlu0 %3795
      %3797 = vrot.lane.b32.xlu0 %v3721, 56
      %v3798 = vpop.permute.xlu0 %3797
      %3799 = vrot.lane.b32.xlu0 %v3722, 56
      %v3800 = vpop.permute.xlu0 %3799
      %3801 = vrot.lane.b32.xlu0 %v3723, 56
      %v3802 = vpop.permute.xlu0 %3801
      %3803 = vrot.lane.b32.xlu0 %v3724, 56
      %v3804 = vpop.permute.xlu0 %3803
      %3805 = vrot.lane.b32.xlu0 %v3725, 56
      %v3806 = vpop.permute.xlu0 %3805
      %3807 = vrot.lane.b32.xlu0 %v3726, 56
      %v3808 = vpop.permute.xlu0 %3807
      %3809 = vrot.lane.b32.xlu0 %v3727, 56
      %v3810 = vpop.permute.xlu0 %3809
      %3811 = vrot.lane.b32.xlu0 %v3728, 56
      %v3812 = vpop.permute.xlu0 %3811
      %3813 = vrot.lane.b32.xlu0 %v3729, 56
      %v3814 = vpop.permute.xlu0 %3813
      %3815 = vrot.lane.b32.xlu0 %v3730, 56
      %v3816 = vpop.permute.xlu0 %3815
      %3817 = vrot.lane.b32.xlu0 %v3731, 56
      %v3818 = vpop.permute.xlu0 %3817
      %3819 = vrot.lane.b32.xlu0 %v3732, 56
      %v3820 = vpop.permute.xlu0 %3819
      %3821 = vrot.lane.b32.xlu0 %v3733, 56
      %v3822 = vpop.permute.xlu0 %3821
      %3823 = vrot.lane.b32.xlu0 %v3734, 56
      %v3824 = vpop.permute.xlu0 %3823
      %3825 = vrot.lane.b32.xlu0 %v3735, 56
      %v3826 = vpop.permute.xlu0 %3825
      %3827 = vrot.lane.b32.xlu0 %v3736, 56
      %v3828 = vpop.permute.xlu0 %3827
      %3829 = vrot.lane.b32.xlu0 %v3737, 56
      %v3830 = vpop.permute.xlu0 %3829
      %3831 = vrot.lane.b32.xlu0 %v3738, 56
      %v3832 = vpop.permute.xlu0 %3831
      %3833 = vrot.lane.b32.xlu0 %v3739, 56
      %v3834 = vpop.permute.xlu0 %3833
      %3835 = vrot.lane.b32.xlu0 %v3740, 56
      %v3836 = vpop.permute.xlu0 %3835
      %vm3869 = vcmask 523712
      %3870 = vst.msk [vmem:[#allocation5] sm:$0xff] %vm3869, %v3774
      %3871 = vst.msk [vmem:[#allocation5 + $0x8] sm:$0xff] %vm3869, %v3776
      %3872 = vst.msk [vmem:[#allocation5 + $0x10] sm:$0xff] %vm3869, %v3778
      %3873 = vst.msk [vmem:[#allocation5 + $0x18] sm:$0xff] %vm3869, %v3780
      %3874 = vst.msk [vmem:[#allocation5 + $0x20] sm:$0xff] %vm3869, %v3782
      %3875 = vst.msk [vmem:[#allocation5 + $0x28] sm:$0xff] %vm3869, %v3784
      %3876 = vst.msk [vmem:[#allocation5 + $0x30] sm:$0xff] %vm3869, %v3786
      %3877 = vst.msk [vmem:[#allocation5 + $0x38] sm:$0xff] %vm3869, %v3788
      %3878 = vst.msk [vmem:[#allocation5 + $0x40] sm:$0xff] %vm3869, %v3790
      %3879 = vst.msk [vmem:[#allocation5 + $0x48] sm:$0xff] %vm3869, %v3792
      %3880 = vst.msk [vmem:[#allocation5 + $0x50] sm:$0xff] %vm3869, %v3794
      %3881 = vst.msk [vmem:[#allocation5 + $0x58] sm:$0xff] %vm3869, %v3796
      %3882 = vst.msk [vmem:[#allocation5 + $0x60] sm:$0xff] %vm3869, %v3798
      %3883 = vst.msk [vmem:[#allocation5 + $0x68] sm:$0xff] %vm3869, %v3800
      %3884 = vst.msk [vmem:[#allocation5 + $0x70] sm:$0xff] %vm3869, %v3802
      %3885 = vst.msk [vmem:[#allocation5 + $0x78] sm:$0xff] %vm3869, %v3804
      %3886 = vst.msk [vmem:[#allocation5 + $0x80] sm:$0xff] %vm3869, %v3806
      %3887 = vst.msk [vmem:[#allocation5 + $0x88] sm:$0xff] %vm3869, %v3808
      %3888 = vst.msk [vmem:[#allocation5 + $0x90] sm:$0xff] %vm3869, %v3810
      %3889 = vst.msk [vmem:[#allocation5 + $0x98] sm:$0xff] %vm3869, %v3812
      %3890 = vst.msk [vmem:[#allocation5 + $0xa0] sm:$0xff] %vm3869, %v3814
      %3891 = vst.msk [vmem:[#allocation5 + $0xa8] sm:$0xff] %vm3869, %v3816
      %3892 = vst.msk [vmem:[#allocation5 + $0xb0] sm:$0xff] %vm3869, %v3818
      %3893 = vst.msk [vmem:[#allocation5 + $0xb8] sm:$0xff] %vm3869, %v3820
      %3894 = vst.msk [vmem:[#allocation5 + $0xc0] sm:$0xff] %vm3869, %v3822
      %3895 = vst.msk [vmem:[#allocation5 + $0xc8] sm:$0xff] %vm3869, %v3824
      %3896 = vst.msk [vmem:[#allocation5 + $0xd0] sm:$0xff] %vm3869, %v3826
      %3897 = vst.msk [vmem:[#allocation5 + $0xd8] sm:$0xff] %vm3869, %v3828
      %3898 = vst.msk [vmem:[#allocation5 + $0xe0] sm:$0xff] %vm3869, %v3830
      %3899 = vst.msk [vmem:[#allocation5 + $0xe8] sm:$0xff] %vm3869, %v3832
      %3900 = vst.msk [vmem:[#allocation5 + $0xf0] sm:$0xff] %vm3869, %v3834
      %3901 = vst.msk [vmem:[#allocation5 + $0xf8] sm:$0xff] %vm3869, %v3836
      %v3902 = vld [vmem:[%s3515 + $0x2] sm:$0xff]
      %v3903 = vld [vmem:[%s3515 + $0xa] sm:$0xff]
      %v3904 = vld [vmem:[%s3515 + $0x1a] sm:$0xff]
      %v3905 = vld [vmem:[%s3515 + $0x22] sm:$0xff]
      %v3906 = vld [vmem:[%s3515 + $0x32] sm:$0xff]
      %v3907 = vld [vmem:[%s3515 + $0x3a] sm:$0xff]
      %v3908 = vld [vmem:[%s3515 + $0x4a] sm:$0xff]
      %v3909 = vld [vmem:[%s3515 + $0x52] sm:$0xff]
      %v3910 = vld [vmem:[%s3515 + $0x62] sm:$0xff]
      %v3911 = vld [vmem:[%s3515 + $0x6a] sm:$0xff]
      %v3912 = vld [vmem:[%s3515 + $0x7a] sm:$0xff]
      %v3913 = vld [vmem:[%s3515 + $0x82] sm:$0xff]
      %v3914 = vld [vmem:[%s3515 + $0x92] sm:$0xff]
      %v3915 = vld [vmem:[%s3515 + $0x9a] sm:$0xff]
      %v3916 = vld [vmem:[%s3515 + $0xaa] sm:$0xff]
      %v3917 = vld [vmem:[%s3515 + $0xb2] sm:$0xff]
      %v3918 = vld [vmem:[%s3515 + $0xc2] sm:$0xff]
      %v3919 = vld [vmem:[%s3515 + $0xca] sm:$0xff]
      %v3920 = vld [vmem:[%s3515 + $0xda] sm:$0xff]
      %v3921 = vld [vmem:[%s3515 + $0xe2] sm:$0xff]
      %v3922 = vld [vmem:[%s3515 + $0xf2] sm:$0xff]
      %v3923 = vld [vmem:[%s3515 + $0xfa] sm:$0xff]
      %v3924 = vld [vmem:[%s3515 + $0x10a] sm:$0xff]
      %v3925 = vld [vmem:[%s3515 + $0x112] sm:$0xff]
      %v3926 = vld [vmem:[%s3515 + $0x122] sm:$0xff]
      %v3927 = vld [vmem:[%s3515 + $0x12a] sm:$0xff]
      %v3928 = vld [vmem:[%s3515 + $0x13a] sm:$0xff]
      %v3929 = vld [vmem:[%s3515 + $0x142] sm:$0xff]
      %v3930 = vld [vmem:[%s3515 + $0x152] sm:$0xff]
      %v3931 = vld [vmem:[%s3515 + $0x15a] sm:$0xff]
      %v3932 = vld [vmem:[%s3515 + $0x16a] sm:$0xff]
      %v3933 = vld [vmem:[%s3515 + $0x172] sm:$0xff]
      %3966 = vrot.lane.b32.xlu0 %v3902, 64
      %v3967 = vpop.permute.xlu0 %3966
      %3968 = vrot.lane.b32.xlu0 %v3903, 64
      %v3969 = vpop.permute.xlu0 %3968
      %3970 = vrot.lane.b32.xlu0 %v3904, 64
      %v3971 = vpop.permute.xlu0 %3970
      %3972 = vrot.lane.b32.xlu0 %v3905, 64
      %v3973 = vpop.permute.xlu0 %3972
      %3974 = vrot.lane.b32.xlu0 %v3906, 64
      %v3975 = vpop.permute.xlu0 %3974
      %3976 = vrot.lane.b32.xlu0 %v3907, 64
      %v3977 = vpop.permute.xlu0 %3976
      %3978 = vrot.lane.b32.xlu0 %v3908, 64
      %v3979 = vpop.permute.xlu0 %3978
      %3980 = vrot.lane.b32.xlu0 %v3909, 64
      %v3981 = vpop.permute.xlu0 %3980
      %3982 = vrot.lane.b32.xlu0 %v3910, 64
      %v3983 = vpop.permute.xlu0 %3982
      %3984 = vrot.lane.b32.xlu0 %v3911, 64
      %v3985 = vpop.permute.xlu0 %3984
      %3986 = vrot.lane.b32.xlu0 %v3912, 64
      %v3987 = vpop.permute.xlu0 %3986
      %3988 = vrot.lane.b32.xlu0 %v3913, 64
      %v3989 = vpop.permute.xlu0 %3988
      %3990 = vrot.lane.b32.xlu0 %v3914, 64
      %v3991 = vpop.permute.xlu0 %3990
      %3992 = vrot.lane.b32.xlu0 %v3915, 64
      %v3993 = vpop.permute.xlu0 %3992
      %3994 = vrot.lane.b32.xlu0 %v3916, 64
      %v3995 = vpop.permute.xlu0 %3994
      %3996 = vrot.lane.b32.xlu0 %v3917, 64
      %v3997 = vpop.permute.xlu0 %3996
      %3998 = vrot.lane.b32.xlu0 %v3918, 64
      %v3999 = vpop.permute.xlu0 %3998
      %4000 = vrot.lane.b32.xlu0 %v3919, 64
      %v4001 = vpop.permute.xlu0 %4000
      %4002 = vrot.lane.b32.xlu0 %v3920, 64
      %v4003 = vpop.permute.xlu0 %4002
      %4004 = vrot.lane.b32.xlu0 %v3921, 64
      %v4005 = vpop.permute.xlu0 %4004
      %4006 = vrot.lane.b32.xlu0 %v3922, 64
      %v4007 = vpop.permute.xlu0 %4006
      %4008 = vrot.lane.b32.xlu0 %v3923, 64
      %v4009 = vpop.permute.xlu0 %4008
      %4010 = vrot.lane.b32.xlu0 %v3924, 64
      %v4011 = vpop.permute.xlu0 %4010
      %4012 = vrot.lane.b32.xlu0 %v3925, 64
      %v4013 = vpop.permute.xlu0 %4012
      %4014 = vrot.lane.b32.xlu0 %v3926, 64
      %v4015 = vpop.permute.xlu0 %4014
      %4016 = vrot.lane.b32.xlu0 %v3927, 64
      %v4017 = vpop.permute.xlu0 %4016
      %4018 = vrot.lane.b32.xlu0 %v3928, 64
      %v4019 = vpop.permute.xlu0 %4018
      %4020 = vrot.lane.b32.xlu0 %v3929, 64
      %v4021 = vpop.permute.xlu0 %4020
      %4022 = vrot.lane.b32.xlu0 %v3930, 64
      %v4023 = vpop.permute.xlu0 %4022
      %4024 = vrot.lane.b32.xlu0 %v3931, 64
      %v4025 = vpop.permute.xlu0 %4024
      %4026 = vrot.lane.b32.xlu0 %v3932, 64
      %v4027 = vpop.permute.xlu0 %4026
      %4028 = vrot.lane.b32.xlu0 %v3933, 64
      %v4029 = vpop.permute.xlu0 %4028
      %vm4062 = vcmask 589312
      %4063 = vst.msk [vmem:[#allocation5] sm:$0xff] %vm4062, %v3967
      %4064 = vst.msk [vmem:[#allocation5 + $0x8] sm:$0xff] %vm4062, %v3969
      %4065 = vst.msk [vmem:[#allocation5 + $0x10] sm:$0xff] %vm4062, %v3971
      %4066 = vst.msk [vmem:[#allocation5 + $0x18] sm:$0xff] %vm4062, %v3973
      %4067 = vst.msk [vmem:[#allocation5 + $0x20] sm:$0xff] %vm4062, %v3975
      %4068 = vst.msk [vmem:[#allocation5 + $0x28] sm:$0xff] %vm4062, %v3977
      %4069 = vst.msk [vmem:[#allocation5 + $0x30] sm:$0xff] %vm4062, %v3979
      %4070 = vst.msk [vmem:[#allocation5 + $0x38] sm:$0xff] %vm4062, %v3981
      %4071 = vst.msk [vmem:[#allocation5 + $0x40] sm:$0xff] %vm4062, %v3983
      %4072 = vst.msk [vmem:[#allocation5 + $0x48] sm:$0xff] %vm4062, %v3985
      %4073 = vst.msk [vmem:[#allocation5 + $0x50] sm:$0xff] %vm4062, %v3987
      %4074 = vst.msk [vmem:[#allocation5 + $0x58] sm:$0xff] %vm4062, %v3989
      %4075 = vst.msk [vmem:[#allocation5 + $0x60] sm:$0xff] %vm4062, %v3991
      %4076 = vst.msk [vmem:[#allocation5 + $0x68] sm:$0xff] %vm4062, %v3993
      %4077 = vst.msk [vmem:[#allocation5 + $0x70] sm:$0xff] %vm4062, %v3995
      %4078 = vst.msk [vmem:[#allocation5 + $0x78] sm:$0xff] %vm4062, %v3997
      %4079 = vst.msk [vmem:[#allocation5 + $0x80] sm:$0xff] %vm4062, %v3999
      %4080 = vst.msk [vmem:[#allocation5 + $0x88] sm:$0xff] %vm4062, %v4001
      %4081 = vst.msk [vmem:[#allocation5 + $0x90] sm:$0xff] %vm4062, %v4003
      %4082 = vst.msk [vmem:[#allocation5 + $0x98] sm:$0xff] %vm4062, %v4005
      %4083 = vst.msk [vmem:[#allocation5 + $0xa0] sm:$0xff] %vm4062, %v4007
      %4084 = vst.msk [vmem:[#allocation5 + $0xa8] sm:$0xff] %vm4062, %v4009
      %4085 = vst.msk [vmem:[#allocation5 + $0xb0] sm:$0xff] %vm4062, %v4011
      %4086 = vst.msk [vmem:[#allocation5 + $0xb8] sm:$0xff] %vm4062, %v4013
      %4087 = vst.msk [vmem:[#allocation5 + $0xc0] sm:$0xff] %vm4062, %v4015
      %4088 = vst.msk [vmem:[#allocation5 + $0xc8] sm:$0xff] %vm4062, %v4017
      %4089 = vst.msk [vmem:[#allocation5 + $0xd0] sm:$0xff] %vm4062, %v4019
      %4090 = vst.msk [vmem:[#allocation5 + $0xd8] sm:$0xff] %vm4062, %v4021
      %4091 = vst.msk [vmem:[#allocation5 + $0xe0] sm:$0xff] %vm4062, %v4023
      %4092 = vst.msk [vmem:[#allocation5 + $0xe8] sm:$0xff] %vm4062, %v4025
      %4093 = vst.msk [vmem:[#allocation5 + $0xf0] sm:$0xff] %vm4062, %v4027
      %4094 = vst.msk [vmem:[#allocation5 + $0xf8] sm:$0xff] %vm4062, %v4029
      %v4095 = vld [vmem:[#allocation5] sm:$0xff]
      %v4096 = vld [vmem:[#allocation5 + $0x8] sm:$0xff]
      %v4097 = vld [vmem:[#allocation5 + $0x10] sm:$0xff]
      %v4098 = vld [vmem:[#allocation5 + $0x18] sm:$0xff]
      %v4099 = vld [vmem:[#allocation5 + $0x20] sm:$0xff]
      %v4100 = vld [vmem:[#allocation5 + $0x28] sm:$0xff]
      %v4101 = vld [vmem:[#allocation5 + $0x30] sm:$0xff]
      %v4102 = vld [vmem:[#allocation5 + $0x38] sm:$0xff]
      %v4103 = vld [vmem:[#allocation5 + $0x40] sm:$0xff]
      %v4104 = vld [vmem:[#allocation5 + $0x48] sm:$0xff]
      %v4105 = vld [vmem:[#allocation5 + $0x50] sm:$0xff]
      %v4106 = vld [vmem:[#allocation5 + $0x58] sm:$0xff]
      %v4107 = vld [vmem:[#allocation5 + $0x60] sm:$0xff]
      %v4108 = vld [vmem:[#allocation5 + $0x68] sm:$0xff]
      %v4109 = vld [vmem:[#allocation5 + $0x70] sm:$0xff]
      %v4110 = vld [vmem:[#allocation5 + $0x78] sm:$0xff]
      %v4111 = vld [vmem:[#allocation5 + $0x80] sm:$0xff]
      %v4112 = vld [vmem:[#allocation5 + $0x88] sm:$0xff]
      %v4113 = vld [vmem:[#allocation5 + $0x90] sm:$0xff]
      %v4114 = vld [vmem:[#allocation5 + $0x98] sm:$0xff]
      %v4115 = vld [vmem:[#allocation5 + $0xa0] sm:$0xff]
      %v4116 = vld [vmem:[#allocation5 + $0xa8] sm:$0xff]
      %v4117 = vld [vmem:[#allocation5 + $0xb0] sm:$0xff]
      %v4118 = vld [vmem:[#allocation5 + $0xb8] sm:$0xff]
      %v4119 = vld [vmem:[#allocation5 + $0xc0] sm:$0xff]
      %v4120 = vld [vmem:[#allocation5 + $0xc8] sm:$0xff]
      %v4121 = vld [vmem:[#allocation5 + $0xd0] sm:$0xff]
      %v4122 = vld [vmem:[#allocation5 + $0xd8] sm:$0xff]
      %v4123 = vld [vmem:[#allocation5 + $0xe0] sm:$0xff]
      %v4124 = vld [vmem:[#allocation5 + $0xe8] sm:$0xff]
      %v4125 = vld [vmem:[#allocation5 + $0xf0] sm:$0xff]
      %v4126 = vld [vmem:[#allocation5 + $0xf8] sm:$0xff]
      %v4127 = vld [vmem:[%s3] sm:$0xff]
      %v4128 = vld [vmem:[%s3 + $0x8] sm:$0xff]
      %v4129 = vld [vmem:[%s3 + $0x10] sm:$0xff]
      %v4130 = vld [vmem:[%s3 + $0x18] sm:$0xff]
      %v4131 = vld [vmem:[%s3 + $0x20] sm:$0xff]
      %v4132 = vld [vmem:[%s3 + $0x28] sm:$0xff]
      %v4133 = vld [vmem:[%s3 + $0x30] sm:$0xff]
      %v4134 = vld [vmem:[%s3 + $0x38] sm:$0xff]
      %v4135 = vld [vmem:[%s3 + $0x40] sm:$0xff]
      %v4136 = vld [vmem:[%s4] sm:$0x1]
      %v4138 = vlaneseq
      %v4139 = vshrl.u32 %v4138, 7
      %v4140 = vsub.s32 0, %v4139
      %v4141 = vrot.slane %v4136, %v4140
      %vm4143 = vcmask 588800
      %v4145 = vsel %vm4143, %v4095, 0
      %v4148 = vsel %vm4143, %v4096, 0
      %v4151 = vsel %vm4143, %v4097, 0
      %v4154 = vsel %vm4143, %v4098, 0
      %v4157 = vsel %vm4143, %v4099, 0
      %v4160 = vsel %vm4143, %v4100, 0
      %v4163 = vsel %vm4143, %v4101, 0
      %v4166 = vsel %vm4143, %v4102, 0
      %v4169 = vsel %vm4143, %v4103, 0
      %v4172 = vsel %vm4143, %v4104, 0
      %v4175 = vsel %vm4143, %v4105, 0
      %v4178 = vsel %vm4143, %v4106, 0
      %v4181 = vsel %vm4143, %v4107, 0
      %v4184 = vsel %vm4143, %v4108, 0
      %v4187 = vsel %vm4143, %v4109, 0
      %v4190 = vsel %vm4143, %v4110, 0
      %v4193 = vsel %vm4143, %v4111, 0
      %v4196 = vsel %vm4143, %v4112, 0
      %v4199 = vsel %vm4143, %v4113, 0
      %v4202 = vsel %vm4143, %v4114, 0
      %v4205 = vsel %vm4143, %v4115, 0
      %v4208 = vsel %vm4143, %v4116, 0
      %v4211 = vsel %vm4143, %v4117, 0
      %v4214 = vsel %vm4143, %v4118, 0
      %v4217 = vsel %vm4143, %v4119, 0
      %v4220 = vsel %vm4143, %v4120, 0
      %v4223 = vsel %vm4143, %v4121, 0
      %v4226 = vsel %vm4143, %v4122, 0
      %v4229 = vsel %vm4143, %v4123, 0
      %v4232 = vsel %vm4143, %v4124, 0
      %v4235 = vsel %vm4143, %v4125, 0
      %v4238 = vsel %vm4143, %v4126, 0
      %4240 = vmatprep.subr.mxu0 0.0
      %4241 = vmatpush1.msra.mxu0 0.0
      %4242 = vmatprep.subr.mxu0 0.0
      %4243 = vmatpush1.msra.mxu0 0.0
      %4244 = vmatprep.subr.mxu0 0.0
      %4245 = vmatpush1.msra.mxu0 0.0
      %4246 = vmatprep.subr.mxu0 0.0
      %4247 = vmatpush1.msra.mxu0 0.0
      %4248 = vmatprep.subr.mxu0 0.0
      %4249 = vmatpush1.msra.mxu0 0.0
      %4250 = vmatprep.subr.mxu0 0.0
      %4251 = vmatpush1.msra.mxu0 0.0
      %4252 = vmatprep.subr.mxu0 0.0
      %4253 = vmatpush1.msra.mxu0 0.0
      %4254 = vmatprep.subr.mxu0 0.0
      %4255 = vmatpush1.msra.mxu0 %v4135
      %4256 = vmatprep.subr.mxu0 0.0
      %4257 = vmatpush1.msra.mxu0 %v4134
      %4258 = vmatprep.subr.mxu0 0.0
      %4259 = vmatpush1.msra.mxu0 %v4133
      %4260 = vmatprep.subr.mxu0 0.0
      %4261 = vmatpush1.msra.mxu0 %v4132
      %4262 = vmatprep.subr.mxu0 0.0
      %4263 = vmatpush1.msra.mxu0 %v4131
      %4264 = vmatprep.subr.mxu0 0.0
      %4265 = vmatpush1.msra.mxu0 %v4130
      %4266 = vmatprep.subr.mxu0 0.0
      %4267 = vmatpush1.msra.mxu0 %v4129
      %4268 = vmatprep.subr.mxu0 0.0
      %4269 = vmatpush1.msra.mxu0 %v4128
      %4270 = vmatprep.subr.mxu0 0.0
      %4271 = vmatpush1.msra.mxu0 %v4127
      %4272 = vmatprep.subr.mxu0 0.0
      %4273 = vmatpush2.msra.mxu0 0.0
      %4274 = vmatprep.subr.mxu0 0.0
      %4275 = vmatpush2.msra.mxu0 0.0
      %4276 = vmatprep.subr.mxu0 0.0
      %4277 = vmatpush2.msra.mxu0 0.0
      %4278 = vmatprep.subr.mxu0 0.0
      %4279 = vmatpush2.msra.mxu0 0.0
      %4280 = vmatprep.subr.mxu0 0.0
      %4281 = vmatpush2.msra.mxu0 0.0
      %4282 = vmatprep.subr.mxu0 0.0
      %4283 = vmatpush2.msra.mxu0 0.0
      %4284 = vmatprep.subr.mxu0 0.0
      %4285 = vmatpush2.msra.mxu0 0.0
      %4286 = vmatprep.subr.mxu0 0.0
      %4287 = vmatpush2.msra.mxu0 0.0
      %4288 = vmatprep.subr.mxu0 0.0
      %4289 = vmatpush2.msra.mxu0 0.0
      %4290 = vmatprep.subr.mxu0 0.0
      %4291 = vmatpush2.msra.mxu0 0.0
      %4292 = vmatprep.subr.mxu0 0.0
      %4293 = vmatpush2.msra.mxu0 0.0
      %4294 = vmatprep.subr.mxu0 0.0
      %4295 = vmatpush2.msra.mxu0 0.0
      %4296 = vmatprep.subr.mxu0 0.0
      %4297 = vmatpush2.msra.mxu0 0.0
      %4298 = vmatprep.subr.mxu0 0.0
      %4299 = vmatpush2.msra.mxu0 0.0
      %4300 = vmatprep.subr.mxu0 0.0
      %4301 = vmatpush2.msra.mxu0 0.0
      %4302 = vmatprep.subr.mxu0 0.0
      %4303 = vmatpush2.msra.mxu0 0.0
      %4304 = vmatprep.mubr.f32.mxu0 0.0
      %4305 = vmatmul.mubr.f32.gmra.mxu0 %v4145
      %v4306 = vpop.f32.mrf.mxu0
      %v4307 = vadd.f32 %v4141, %v4306
      %v4308 = vpop.f32.mrf.mxu0
      %4309 = vmatprep.mubr.f32.mxu0 0.0
      %4310 = vmatmul.mubr.f32.gmra.mxu0 %v4148
      %v4311 = vpop.f32.mrf.mxu0
      %v4312 = vadd.f32 %v4141, %v4311
      %v4313 = vpop.f32.mrf.mxu0
      %4314 = vmatprep.mubr.f32.mxu0 0.0
      %4315 = vmatmul.mubr.f32.gmra.mxu0 %v4151
      %v4316 = vpop.f32.mrf.mxu0
      %v4317 = vadd.f32 %v4141, %v4316
      %v4318 = vpop.f32.mrf.mxu0
      %4319 = vmatprep.mubr.f32.mxu0 0.0
      %4320 = vmatmul.mubr.f32.gmra.mxu0 %v4154
      %v4321 = vpop.f32.mrf.mxu0
      %v4322 = vadd.f32 %v4141, %v4321
      %v4323 = vpop.f32.mrf.mxu0
      %4324 = vmatprep.mubr.f32.mxu0 0.0
      %4325 = vmatmul.mubr.f32.gmra.mxu0 %v4157
      %v4326 = vpop.f32.mrf.mxu0
      %v4327 = vadd.f32 %v4141, %v4326
      %v4328 = vpop.f32.mrf.mxu0
      %4329 = vmatprep.mubr.f32.mxu0 0.0
      %4330 = vmatmul.mubr.f32.gmra.mxu0 %v4160
      %v4331 = vpop.f32.mrf.mxu0
      %v4332 = vadd.f32 %v4141, %v4331
      %v4333 = vpop.f32.mrf.mxu0
      %4334 = vmatprep.mubr.f32.mxu0 0.0
      %4335 = vmatmul.mubr.f32.gmra.mxu0 %v4163
      %v4336 = vpop.f32.mrf.mxu0
      %v4337 = vadd.f32 %v4141, %v4336
      %v4338 = vpop.f32.mrf.mxu0
      %4339 = vmatprep.mubr.f32.mxu0 0.0
      %4340 = vmatmul.mubr.f32.gmra.mxu0 %v4166
      %v4341 = vpop.f32.mrf.mxu0
      %v4342 = vadd.f32 %v4141, %v4341
      %v4343 = vpop.f32.mrf.mxu0
      %4344 = vmatprep.mubr.f32.mxu0 0.0
      %4345 = vmatmul.mubr.f32.gmra.mxu0 %v4169
      %v4346 = vpop.f32.mrf.mxu0
      %v4347 = vadd.f32 %v4141, %v4346
      %v4348 = vpop.f32.mrf.mxu0
      %4349 = vmatprep.mubr.f32.mxu0 0.0
      %4350 = vmatmul.mubr.f32.gmra.mxu0 %v4172
      %v4351 = vpop.f32.mrf.mxu0
      %v4352 = vadd.f32 %v4141, %v4351
      %v4353 = vpop.f32.mrf.mxu0
      %4354 = vmatprep.mubr.f32.mxu0 0.0
      %4355 = vmatmul.mubr.f32.gmra.mxu0 %v4175
      %v4356 = vpop.f32.mrf.mxu0
      %v4357 = vadd.f32 %v4141, %v4356
      %v4358 = vpop.f32.mrf.mxu0
      %4359 = vmatprep.mubr.f32.mxu0 0.0
      %4360 = vmatmul.mubr.f32.gmra.mxu0 %v4178
      %v4361 = vpop.f32.mrf.mxu0
      %v4362 = vadd.f32 %v4141, %v4361
      %v4363 = vpop.f32.mrf.mxu0
      %4364 = vmatprep.mubr.f32.mxu0 0.0
      %4365 = vmatmul.mubr.f32.gmra.mxu0 %v4181
      %v4366 = vpop.f32.mrf.mxu0
      %v4367 = vadd.f32 %v4141, %v4366
      %v4368 = vpop.f32.mrf.mxu0
      %4369 = vmatprep.mubr.f32.mxu0 0.0
      %4370 = vmatmul.mubr.f32.gmra.mxu0 %v4184
      %v4371 = vpop.f32.mrf.mxu0
      %v4372 = vadd.f32 %v4141, %v4371
      %v4373 = vpop.f32.mrf.mxu0
      %4374 = vmatprep.mubr.f32.mxu0 0.0
      %4375 = vmatmul.mubr.f32.gmra.mxu0 %v4187
      %v4376 = vpop.f32.mrf.mxu0
      %v4377 = vadd.f32 %v4141, %v4376
      %v4378 = vpop.f32.mrf.mxu0
      %4379 = vmatprep.mubr.f32.mxu0 0.0
      %4380 = vmatmul.mubr.f32.gmra.mxu0 %v4190
      %v4381 = vpop.f32.mrf.mxu0
      %v4382 = vadd.f32 %v4141, %v4381
      %v4383 = vpop.f32.mrf.mxu0
      %4384 = vmatprep.mubr.f32.mxu0 0.0
      %4385 = vmatmul.mubr.f32.gmra.mxu0 %v4193
      %v4386 = vpop.f32.mrf.mxu0
      %v4387 = vadd.f32 %v4141, %v4386
      %v4388 = vpop.f32.mrf.mxu0
      %4389 = vmatprep.mubr.f32.mxu0 0.0
      %4390 = vmatmul.mubr.f32.gmra.mxu0 %v4196
      %v4391 = vpop.f32.mrf.mxu0
      %v4392 = vadd.f32 %v4141, %v4391
      %v4393 = vpop.f32.mrf.mxu0
      %4394 = vmatprep.mubr.f32.mxu0 0.0
      %4395 = vmatmul.mubr.f32.gmra.mxu0 %v4199
      %v4396 = vpop.f32.mrf.mxu0
      %v4397 = vadd.f32 %v4141, %v4396
      %v4398 = vpop.f32.mrf.mxu0
      %4399 = vmatprep.mubr.f32.mxu0 0.0
      %4400 = vmatmul.mubr.f32.gmra.mxu0 %v4202
      %v4401 = vpop.f32.mrf.mxu0
      %v4402 = vadd.f32 %v4141, %v4401
      %v4403 = vpop.f32.mrf.mxu0
      %4404 = vmatprep.mubr.f32.mxu0 0.0
      %4405 = vmatmul.mubr.f32.gmra.mxu0 %v4205
      %v4406 = vpop.f32.mrf.mxu0
      %v4407 = vadd.f32 %v4141, %v4406
      %v4408 = vpop.f32.mrf.mxu0
      %4409 = vmatprep.mubr.f32.mxu0 0.0
      %4410 = vmatmul.mubr.f32.gmra.mxu0 %v4208
      %v4411 = vpop.f32.mrf.mxu0
      %v4412 = vadd.f32 %v4141, %v4411
      %v4413 = vpop.f32.mrf.mxu0
      %4414 = vmatprep.mubr.f32.mxu0 0.0
      %4415 = vmatmul.mubr.f32.gmra.mxu0 %v4211
      %v4416 = vpop.f32.mrf.mxu0
      %v4417 = vadd.f32 %v4141, %v4416
      %v4418 = vpop.f32.mrf.mxu0
      %4419 = vmatprep.mubr.f32.mxu0 0.0
      %4420 = vmatmul.mubr.f32.gmra.mxu0 %v4214
      %v4421 = vpop.f32.mrf.mxu0
      %v4422 = vadd.f32 %v4141, %v4421
      %v4423 = vpop.f32.mrf.mxu0
      %4424 = vmatprep.mubr.f32.mxu0 0.0
      %4425 = vmatmul.mubr.f32.gmra.mxu0 %v4217
      %v4426 = vpop.f32.mrf.mxu0
      %v4427 = vadd.f32 %v4141, %v4426
      %v4428 = vpop.f32.mrf.mxu0
      %4429 = vmatprep.mubr.f32.mxu0 0.0
      %4430 = vmatmul.mubr.f32.gmra.mxu0 %v4220
      %v4431 = vpop.f32.mrf.mxu0
      %v4432 = vadd.f32 %v4141, %v4431
      %v4433 = vpop.f32.mrf.mxu0
      %4434 = vmatprep.mubr.f32.mxu0 0.0
      %4435 = vmatmul.mubr.f32.gmra.mxu0 %v4223
      %v4436 = vpop.f32.mrf.mxu0
      %v4437 = vadd.f32 %v4141, %v4436
      %v4438 = vpop.f32.mrf.mxu0
      %4439 = vmatprep.mubr.f32.mxu0 0.0
      %4440 = vmatmul.mubr.f32.gmra.mxu0 %v4226
      %v4441 = vpop.f32.mrf.mxu0
      %v4442 = vadd.f32 %v4141, %v4441
      %v4443 = vpop.f32.mrf.mxu0
      %4444 = vmatprep.mubr.f32.mxu0 0.0
      %4445 = vmatmul.mubr.f32.gmra.mxu0 %v4229
      %v4446 = vpop.f32.mrf.mxu0
      %v4447 = vadd.f32 %v4141, %v4446
      %v4448 = vpop.f32.mrf.mxu0
      %4449 = vmatprep.mubr.f32.mxu0 0.0
      %4450 = vmatmul.mubr.f32.gmra.mxu0 %v4232
      %v4451 = vpop.f32.mrf.mxu0
      %v4452 = vadd.f32 %v4141, %v4451
      %v4453 = vpop.f32.mrf.mxu0
      %4454 = vmatprep.mubr.f32.mxu0 0.0
      %4455 = vmatmul.mubr.f32.gmra.mxu0 %v4235
      %v4456 = vpop.f32.mrf.mxu0
      %v4457 = vadd.f32 %v4141, %v4456
      %v4458 = vpop.f32.mrf.mxu0
      %4459 = vmatprep.mubr.f32.mxu0 0.0
      %4460 = vmatmul.mubr.f32.gmra.mxu0 %v4238
      %v4461 = vpop.f32.mrf.mxu0
      %v4462 = vadd.f32 %v4141, %v4461
      %v4463 = vpop.f32.mrf.mxu0
      %4464 = vdwg.mxu0
      %v4465 = vmax.f32 %v4307, 0.0
      %v4466 = vmax.f32 %v4312, 0.0
      %v4467 = vmax.f32 %v4317, 0.0
      %v4468 = vmax.f32 %v4322, 0.0
      %v4469 = vmax.f32 %v4327, 0.0
      %v4470 = vmax.f32 %v4332, 0.0
      %v4471 = vmax.f32 %v4337, 0.0
      %v4472 = vmax.f32 %v4342, 0.0
      %v4473 = vmax.f32 %v4347, 0.0
      %v4474 = vmax.f32 %v4352, 0.0
      %v4475 = vmax.f32 %v4357, 0.0
      %v4476 = vmax.f32 %v4362, 0.0
      %v4477 = vmax.f32 %v4367, 0.0
      %v4478 = vmax.f32 %v4372, 0.0
      %v4479 = vmax.f32 %v4377, 0.0
      %v4480 = vmax.f32 %v4382, 0.0
      %v4481 = vmax.f32 %v4387, 0.0
      %v4482 = vmax.f32 %v4392, 0.0
      %v4483 = vmax.f32 %v4397, 0.0
      %v4484 = vmax.f32 %v4402, 0.0
      %v4485 = vmax.f32 %v4407, 0.0
      %v4486 = vmax.f32 %v4412, 0.0
      %v4487 = vmax.f32 %v4417, 0.0
      %v4488 = vmax.f32 %v4422, 0.0
      %v4489 = vmax.f32 %v4427, 0.0
      %v4490 = vmax.f32 %v4432, 0.0
      %v4491 = vmax.f32 %v4437, 0.0
      %v4492 = vmax.f32 %v4442, 0.0
      %v4493 = vmax.f32 %v4447, 0.0
      %v4494 = vmax.f32 %v4452, 0.0
      %v4495 = vmax.f32 %v4457, 0.0
      %v4496 = vmax.f32 %v4462, 0.0
      %4497 = vst.msk [vmem:[%s264] sm:$0xff] %vm2397, %v4465
      %4498 = vst.msk [vmem:[%s264 + $0x8] sm:$0xff] %vm2397, %v4466
      %4499 = vst.msk [vmem:[%s264 + $0x10] sm:$0xff] %vm2397, %v4467
      %4500 = vst.msk [vmem:[%s264 + $0x18] sm:$0xff] %vm2397, %v4468
      %4501 = vst.msk [vmem:[%s264 + $0x20] sm:$0xff] %vm2397, %v4469
      %4502 = vst.msk [vmem:[%s264 + $0x28] sm:$0xff] %vm2397, %v4470
      %4503 = vst.msk [vmem:[%s264 + $0x30] sm:$0xff] %vm2397, %v4471
      %4504 = vst.msk [vmem:[%s264 + $0x38] sm:$0xff] %vm2397, %v4472
      %4505 = vst.msk [vmem:[%s264 + $0x40] sm:$0xff] %vm2397, %v4473
      %4506 = vst.msk [vmem:[%s264 + $0x48] sm:$0xff] %vm2397, %v4474
      %4507 = vst.msk [vmem:[%s264 + $0x50] sm:$0xff] %vm2397, %v4475
      %4508 = vst.msk [vmem:[%s264 + $0x58] sm:$0xff] %vm2397, %v4476
      %4509 = vst.msk [vmem:[%s264 + $0x60] sm:$0xff] %vm2397, %v4477
      %4510 = vst.msk [vmem:[%s264 + $0x68] sm:$0xff] %vm2397, %v4478
      %4511 = vst.msk [vmem:[%s264 + $0x70] sm:$0xff] %vm2397, %v4479
      %4512 = vst.msk [vmem:[%s264 + $0x78] sm:$0xff] %vm2397, %v4480
      %4513 = vst.msk [vmem:[%s264 + $0x80] sm:$0xff] %vm2397, %v4481
      %4514 = vst.msk [vmem:[%s264 + $0x88] sm:$0xff] %vm2397, %v4482
      %4515 = vst.msk [vmem:[%s264 + $0x90] sm:$0xff] %vm2397, %v4483
      %4516 = vst.msk [vmem:[%s264 + $0x98] sm:$0xff] %vm2397, %v4484
      %4517 = vst.msk [vmem:[%s264 + $0xa0] sm:$0xff] %vm2397, %v4485
      %4518 = vst.msk [vmem:[%s264 + $0xa8] sm:$0xff] %vm2397, %v4486
      %4519 = vst.msk [vmem:[%s264 + $0xb0] sm:$0xff] %vm2397, %v4487
      %4520 = vst.msk [vmem:[%s264 + $0xb8] sm:$0xff] %vm2397, %v4488
      %4521 = vst.msk [vmem:[%s264 + $0xc0] sm:$0xff] %vm2397, %v4489
      %4522 = vst.msk [vmem:[%s264 + $0xc8] sm:$0xff] %vm2397, %v4490
      %4523 = vst.msk [vmem:[%s264 + $0xd0] sm:$0xff] %vm2397, %v4491
      %4524 = vst.msk [vmem:[%s264 + $0xd8] sm:$0xff] %vm2397, %v4492
      %4525 = vst.msk [vmem:[%s264 + $0xe0] sm:$0xff] %vm2397, %v4493
      %4526 = vst.msk [vmem:[%s264 + $0xe8] sm:$0xff] %vm2397, %v4494
      %4527 = vst.msk [vmem:[%s264 + $0xf0] sm:$0xff] %vm2397, %v4495
      %4528 = vst.msk [vmem:[%s264 + $0xf8] sm:$0xff] %vm2397, %v4496
      %v4529 = vld [vmem:[%s264] ss:$2 sm:$0xff]
      %s4530 = scalar_lea.vmem %s264, 32
      %v4531 = vld [vmem:[%s4530] ss:$2 sm:$0xff]
      %s4532 = scalar_lea.vmem %s264, 64
      %v4533 = vld [vmem:[%s4532] ss:$2 sm:$0xff]
      %s4534 = scalar_lea.vmem %s264, 96
      %v4535 = vld [vmem:[%s4534] ss:$2 sm:$0xff]
      %s4536 = scalar_lea.vmem %s264, 128
      %v4537 = vld [vmem:[%s4536] ss:$2 sm:$0xff]
      %s4538 = scalar_lea.vmem %s264, 160
      %v4539 = vld [vmem:[%s4538] ss:$2 sm:$0xff]
      %s4540 = scalar_lea.vmem %s264, 192
      %v4541 = vld [vmem:[%s4540] ss:$2 sm:$0xff]
      %s4542 = scalar_lea.vmem %s264, 224
      %v4543 = vld [vmem:[%s4542] ss:$2 sm:$0xff]
      %s4544 = scalar_lea.vmem %s264, 1
      %v4545 = vld [vmem:[%s4544] ss:$2 sm:$0xff]
      %s4546 = scalar_lea.vmem %s264, 33
      %v4547 = vld [vmem:[%s4546] ss:$2 sm:$0xff]
      %s4548 = scalar_lea.vmem %s264, 65
      %v4549 = vld [vmem:[%s4548] ss:$2 sm:$0xff]
      %s4550 = scalar_lea.vmem %s264, 97
      %v4551 = vld [vmem:[%s4550] ss:$2 sm:$0xff]
      %s4552 = scalar_lea.vmem %s264, 129
      %v4553 = vld [vmem:[%s4552] ss:$2 sm:$0xff]
      %s4554 = scalar_lea.vmem %s264, 161
      %v4555 = vld [vmem:[%s4554] ss:$2 sm:$0xff]
      %s4556 = scalar_lea.vmem %s264, 193
      %v4557 = vld [vmem:[%s4556] ss:$2 sm:$0xff]
      %s4558 = scalar_lea.vmem %s264, 225
      %v4559 = vld [vmem:[%s4558] ss:$2 sm:$0xff]
      %s4560 = scalar_lea.vmem %s264, 16
      %v4561 = vld [vmem:[%s4560] ss:$2 sm:$0xff]
      %s4562 = scalar_lea.vmem %s4560, 32
      %v4563 = vld [vmem:[%s4562] ss:$2 sm:$0xff]
      %s4564 = scalar_lea.vmem %s4560, 64
      %v4565 = vld [vmem:[%s4564] ss:$2 sm:$0xff]
      %s4566 = scalar_lea.vmem %s4560, 96
      %v4567 = vld [vmem:[%s4566] ss:$2 sm:$0xff]
      %s4568 = scalar_lea.vmem %s4560, 128
      %v4569 = vld [vmem:[%s4568] ss:$2 sm:$0xff]
      %s4570 = scalar_lea.vmem %s4560, 160
      %v4571 = vld [vmem:[%s4570] ss:$2 sm:$0xff]
      %s4572 = scalar_lea.vmem %s4560, 192
      %v4573 = vld [vmem:[%s4572] ss:$2 sm:$0xff]
      %s4574 = scalar_lea.vmem %s4560, 224
      %v4575 = vld [vmem:[%s4574] ss:$2 sm:$0xff]
      %s4576 = scalar_lea.vmem %s4560, 1
      %v4577 = vld [vmem:[%s4576] ss:$2 sm:$0xff]
      %s4578 = scalar_lea.vmem %s4560, 33
      %v4579 = vld [vmem:[%s4578] ss:$2 sm:$0xff]
      %s4580 = scalar_lea.vmem %s4560, 65
      %v4581 = vld [vmem:[%s4580] ss:$2 sm:$0xff]
      %s4582 = scalar_lea.vmem %s4560, 97
      %v4583 = vld [vmem:[%s4582] ss:$2 sm:$0xff]
      %s4584 = scalar_lea.vmem %s4560, 129
      %v4585 = vld [vmem:[%s4584] ss:$2 sm:$0xff]
      %s4586 = scalar_lea.vmem %s4560, 161
      %v4587 = vld [vmem:[%s4586] ss:$2 sm:$0xff]
      %s4588 = scalar_lea.vmem %s4560, 193
      %v4589 = vld [vmem:[%s4588] ss:$2 sm:$0xff]
      %s4590 = scalar_lea.vmem %s4560, 225
      %v4591 = vld [vmem:[%s4590] ss:$2 sm:$0xff]
      %v4592 = vmax.f32 %v4529, %v4545
      %v4593 = vmax.f32 %v4531, %v4547
      %v4594 = vmax.f32 %v4533, %v4549
      %v4595 = vmax.f32 %v4535, %v4551
      %v4596 = vmax.f32 %v4537, %v4553
      %v4597 = vmax.f32 %v4539, %v4555
      %v4598 = vmax.f32 %v4541, %v4557
      %v4599 = vmax.f32 %v4543, %v4559
      %v4600 = vmax.f32 %v4561, %v4577
      %v4601 = vmax.f32 %v4563, %v4579
      %v4602 = vmax.f32 %v4565, %v4581
      %v4603 = vmax.f32 %v4567, %v4583
      %v4604 = vmax.f32 %v4569, %v4585
      %v4605 = vmax.f32 %v4571, %v4587
      %v4606 = vmax.f32 %v4573, %v4589
      %v4607 = vmax.f32 %v4575, %v4591
      %v4608 = vmax.f32 %v4592, %v4600
      %v4609 = vmax.f32 %v4593, %v4601
      %v4610 = vmax.f32 %v4594, %v4602
      %v4611 = vmax.f32 %v4595, %v4603
      %v4612 = vmax.f32 %v4596, %v4604
      %v4613 = vmax.f32 %v4597, %v4605
      %v4614 = vmax.f32 %v4598, %v4606
      %v4615 = vmax.f32 %v4599, %v4607
      %4616 = vst.msk [vmem:[%s259] sm:$0xff] %vm2397, %v4608
      %4617 = vst.msk [vmem:[%s259 + $0x8] sm:$0xff] %vm2397, %v4609
      %4618 = vst.msk [vmem:[%s259 + $0x10] sm:$0xff] %vm2397, %v4610
      %4619 = vst.msk [vmem:[%s259 + $0x18] sm:$0xff] %vm2397, %v4611
      %4620 = vst.msk [vmem:[%s259 + $0x20] sm:$0xff] %vm2397, %v4612
      %4621 = vst.msk [vmem:[%s259 + $0x28] sm:$0xff] %vm2397, %v4613
      %4622 = vst.msk [vmem:[%s259 + $0x30] sm:$0xff] %vm2397, %v4614
      %4623 = vst.msk [vmem:[%s259 + $0x38] sm:$0xff] %vm2397, %v4615
      %p4624 = scmp.lt.s32.totalorder %s18, 1
      %s4625 = scalar_select %p4624, %s18, 1
      %s4626 = smul.addr %s4625, 8
      %s4627 = smul.addr %s4626, 8
      %s4628 = scalar_lea.vmem %s5, %s4627
      %p4629 = scmp.lt.s32.totalorder %s18, 1
      %s4630 = scalar_select %p4629, %s18, 1
      %s4631 = smul.addr %s4630, 32
      %s4632 = smul.addr %s4631, 8
      %s4633 = scalar_lea.vmem %s6, %s4632
      // Predicated region
      $region41: #{down_conv_forward.1} parent=39 // pred_check
        %p4634 = pneg %p146
      $region42: #{down_conv_forward.1} parent=39 // pred_check_branch
        %4636 = sbr.rel (%p4634) target = $region44
      $region43: #{down_conv_forward.1} parent=39 // pred_region
        _
      $region44: #{down_conv_forward.1} parent=39 // pred_fallthru
        _
      // Predicated region
      $region45: #{down_conv_forward.1} parent=39 // pred_check
        %p4637 = pneg %p172
      $region46: #{down_conv_forward.1} parent=39 // pred_check_branch
        %4639 = sbr.rel (%p4637) target = $region48
      $region47: #{down_conv_forward.1} parent=39 // pred_region
        _
      $region48: #{down_conv_forward.1} parent=39 // pred_fallthru
        _
    $region40: #{down_conv_forward.1} parent=5 // pred_fallthru
      _
    %p4640 = scmp.le.s32.totalorder 2, %s13
    // Predicated region
    $region49: #{down_conv_forward.1} parent=5 // pred_check
      %p4641 = pneg %p4640
    $region50: #{down_conv_forward.1} parent=5 // pred_check_branch
      %4643 = sbr.rel (%p4641) target = $region52
    $region51: #{down_conv_forward.1} parent=5 // pred_region
      %s4644 = ssub.s32 %s13, 2
      // Predicated region
      $region53: #{down_conv_forward.1} parent=51 // pred_check
        %p4645 = pneg %p152
      $region54: #{down_conv_forward.1} parent=51 // pred_check_branch
        %4647 = sbr.rel (%p4645) target = $region56
      $region55: #{down_conv_forward.1} parent=51 // pred_region
        %p4648 = scmp.lt.s32.totalorder %s19, 1
        %s4649 = scalar_select %p4648, %s19, 1
        %s4650 = smul.addr %s4649, 8
        %s4651 = smul.addr %s4650, 8
        %s4652 = scalar_lea.vmem %s5, %s4651
      $region56: #{down_conv_forward.1} parent=51 // pred_fallthru
        _
      // Predicated region
      $region57: #{down_conv_forward.1} parent=51 // pred_check
        %p4653 = pneg %p178
      $region58: #{down_conv_forward.1} parent=51 // pred_check_branch
        %4655 = sbr.rel (%p4653) target = $region60
      $region59: #{down_conv_forward.1} parent=51 // pred_region
        %p4656 = scmp.lt.s32.totalorder %s19, 1
        %s4657 = scalar_select %p4656, %s19, 1
        %s4658 = smul.addr %s4657, 32
        %s4659 = smul.addr %s4658, 8
        %s4660 = scalar_lea.vmem %s6, %s4659
      $region60: #{down_conv_forward.1} parent=51 // pred_fallthru
        _
    $region52: #{down_conv_forward.1} parent=5 // pred_fallthru
      _
  $region6: #{down_conv_forward.1} parent=0 // loop_footer
    %s17 = sadd.s32 1, %s13
  $region7: #{down_conv_forward.1} parent=0 // loop_footer_branch
    %12 = sbr.rel target = $region3
  $region8: #{down_conv_forward.1} parent=0 // loop_exit
    _

</llo_original>
